<compile_context>
chip_gen: v5e
topology: v5e:2x2
jax: 0.10.0
libtpu: 0.0.40
codegen_flags: <defaults>
</compile_context>

<pallas_src>
import jax
import jax.numpy as jnp
from jax import lax
from jax.experimental import pallas as pl
from jax.experimental.pallas import tpu as pltpu

# ---------------- configuration (small, forward-implied shapes) ----------------
B = 8    # demo batch (wrapper supports any batch; big batches stack into one call)
F = 16   # sender_input feature dim
H = 32   # hidden size (speaker & listener RNNs)
V = 16   # vocabulary size
T = 8    # max message length
C = 16   # number of listener output classes

EOS_ID = 0
SOS_ID = 1
PAD_ID = 2

LANES = 128       # lane-dense packed output slab width
MXU_BATCH = 128   # batch-block height (MXU rows); review item 1
SPK_EMB_VIA_VPU = True  # v5e/v6e: per-step emb lookup as VPU selects, not MXU

# packed-output column layout
_COL_SPK_LOGP = 0            # [0, T)       speaker selected log-probs
_COL_PADMSG = T              # [T, 2T)      padded message tokens (as f32)
_COL_LEN = 2 * T             # message length
_COL_ENT_SPK = 2 * T + 1     # speaker entropy
_COL_PRED = 2 * T + 2        # listener prediction
_COL_ENT_LST = 2 * T + 3     # listener entropy
_COL_LOGP_LST = 32           # [32, 32+C)   listener log-probs
_COL_LOGITS_LST = 48         # [48, 48+C)   listener logits

# packed-parameter slab row layout (all lane offset 0, all row offsets % 8 == 0)
_R_WENC = 0          # (F, H)
_R_WCMB = 16         # (H, V+H) = [Wout | Whh]
_R_SEMB = 48         # (V, H)   speaker embedding
_R_LEMB = 64         # (V, H)   listener embedding
_R_LWHH = 80         # (H, H)
_R_LWOUT = 112       # (H, C)
_R_BIAS = 144        # rows 144..148: spk_benc, spk_bh, spk_bout, lst_bh, lst_bout
PROWS = 152          # total slab rows (multiple of 8)


def _round_up(n, m):
    return ((n + m - 1) // m) * m


# ---------------- fused speaker + padding + listener kernel --------------------
def _make_fused_kernel(do_padding: bool):
    def kernel(x_ref, p_ref, out_ref):
        x = x_ref[...]                                              # (Bn, F)
        Bn = x.shape[0]

        # ---- static views into the single packed parameter slab ----
        wenc = p_ref[_R_WENC:_R_WENC + F, :][:, :H]                 # (F, H)
        wcmb = p_ref[_R_WCMB:_R_WCMB + H, :][:, :V + H]             # (H, V+H)
        semb = p_ref[_R_SEMB:_R_SEMB + V, :][:, :H]                 # (V, H)
        lemb = p_ref[_R_LEMB:_R_LEMB + V, :][:, :H]                 # (V, H)
        lwhh = p_ref[_R_LWHH:_R_LWHH + H, :][:, :H]                 # (H, H)
        lwout = p_ref[_R_LWOUT:_R_LWOUT + H, :][:, :C]              # (H, C)
        bias = p_ref[_R_BIAS:_R_BIAS + 8, :]                        # (8, 128)
        benc = bias[0:1, :H]
        sbh = bias[1:2, :H]
        sbout = bias[2:3, :V]
        lbh = bias[3:4, :H]
        lbout = bias[4:5, :C]

        # ---- speaker encoder ----
        h = jnp.tanh(jnp.dot(x, wenc, preferred_element_type=jnp.float32) + benc)

        col_t = lax.broadcasted_iota(jnp.int32, (Bn, T), 1)         # (Bn, T)
        iota_v = lax.broadcasted_iota(jnp.int32, (Bn, V), 1)        # (Bn, V)

        padded = jnp.zeros((Bn, T), jnp.int32)
        sel_logp = jnp.zeros((Bn, T), jnp.float32)
        ent_acc = jnp.zeros((Bn, 1), jnp.float32)
        seen_eos = jnp.zeros((Bn, 1), jnp.bool_)       # eos seen at a step < t
        seen_cnt = jnp.zeros((Bn, 1), jnp.float32)     # sum_t [eos at step <= t]

        # ---- unrolled greedy decode; my_padding folded in ----
        for t in range(T):
            comb = jnp.dot(h, wcmb, preferred_element_type=jnp.float32)  # (Bn, V+H)
            logits = comb[:, :V] + sbout
            h_rec = comb[:, V:]                                          # h @ Whh

            m = jnp.max(logits, axis=-1, keepdims=True)    # only max on the chain
            z = logits - m
            ez = jnp.exp(z)
            se = jnp.sum(ez, axis=-1, keepdims=True)
            lse = jnp.log(se)
            # first-index argmax, reusing m (no second max reduction)
            tok = jnp.min(jnp.where(logits == m, iota_v, jnp.int32(V)),
                          axis=-1, keepdims=True)                        # (Bn, 1)
            sel = -lse                                     # logp at argmax (max z == 0)
            ent_acc = ent_acc + (lse - jnp.sum(z * ez, axis=-1, keepdims=True) / se)

            if do_padding:
                store_tok = jnp.where(seen_eos, jnp.int32(PAD_ID), tok)
                seen_eos = jnp.logical_or(seen_eos, tok == jnp.int32(EOS_ID))
                seen_cnt = seen_cnt + seen_eos.astype(jnp.float32)
            else:
                store_tok = tok

            is_t = col_t == t
            padded = jnp.where(is_t, store_tok, padded)
            sel_logp = jnp.where(is_t, sel, sel_logp)

            if t + 1 < T:  # post-last-token recurrence never feeds any output
                if SPK_EMB_VIA_VPU:
                    # keep the tiny lookup off the MXU result FIFO (v5e/v6e)
                    emb = jnp.zeros((Bn, H), jnp.float32)
                    for v in range(V):
                        emb = emb + jnp.where(tok == v, semb[v:v + 1, :], 0.0)
                else:
                    onehot = (iota_v == tok).astype(jnp.float32)
                    emb = jnp.dot(onehot, semb, preferred_element_type=jnp.float32)
                h = jnp.tanh(h_rec + emb + sbh)

        ent_spk = ent_acc * (1.0 / T)
        if do_padding:
            # my_padding lengths: clamp(T - sum(cumsum(eos) > 0) + 1, max=T)
            lengths_f = jnp.minimum(jnp.float32(T) - seen_cnt + 1.0, jnp.float32(T))
        else:
            lengths_f = jnp.full((Bn, 1), jnp.float32(T))

        # ---- listener: all T embeddings in ONE stacked MXU matmul ----
        onehot_all = jnp.concatenate(
            [(iota_v == padded[:, t:t + 1]).astype(jnp.float32) for t in range(T)],
            axis=0)                                                  # (T*Bn, V), t-major
        emb_all = jnp.dot(onehot_all, lemb, preferred_element_type=jnp.float32)

        h2 = jnp.tanh(emb_all[0:Bn] + lbh)             # h0 == 0 -> 0 @ Whh dropped
        for t in range(1, T):
            h2 = jnp.tanh(jnp.dot(h2, lwhh, preferred_element_type=jnp.float32)
                          + emb_all[t * Bn:(t + 1) * Bn] + lbh)

        logits_l = jnp.dot(h2, lwout, preferred_element_type=jnp.float32) + lbout
        m_l = jnp.max(logits_l, axis=-1, keepdims=True)
        z_l = logits_l - m_l
        ez_l = jnp.exp(z_l)
        se_l = jnp.sum(ez_l, axis=-1, keepdims=True)
        lse_l = jnp.log(se_l)
        logp_l = z_l - lse_l
        iota_c = lax.broadcasted_iota(jnp.int32, (Bn, C), 1)
        pred = jnp.min(jnp.where(logits_l == m_l, iota_c, jnp.int32(C)),
                       axis=-1, keepdims=True)
        ent_l = lse_l - jnp.sum(z_l * ez_l, axis=-1, keepdims=True) / se_l

        # ---- lane-dense packed output block: static column-slice stores ----
        out_ref[...] = jnp.zeros((Bn, LANES), jnp.float32)
        out_ref[:, _COL_SPK_LOGP:_COL_SPK_LOGP + T] = sel_logp
        out_ref[:, _COL_PADMSG:_COL_PADMSG + T] = padded.astype(jnp.float32)
        out_ref[:, _COL_LEN:_COL_LEN + 1] = lengths_f
        out_ref[:, _COL_ENT_SPK:_COL_ENT_SPK + 1] = ent_spk
        out_ref[:, _COL_PRED:_COL_PRED + 1] = pred.astype(jnp.float32)
        out_ref[:, _COL_ENT_LST:_COL_ENT_LST + 1] = ent_l
        out_ref[:, _COL_LOGP_LST:_COL_LOGP_LST + C] = logp_l
        out_ref[:, _COL_LOGITS_LST:_COL_LOGITS_LST + C] = logits_l

    return kernel


def fused_call(x, param_slab, do_padding=True):
    Btot = x.shape[0]
    # batch block: pad to a sublane multiple, cap at MXU height; leading grid axis
    # is "parallel" so batch blocks split across both TCs on v7x.
    bb = MXU_BATCH if Btot >= MXU_BATCH else _round_up(max(Btot, 1), 8)
    B_pad = _round_up(Btot, bb)
    nblk = B_pad // bb
    if B_pad != Btot:
        x = jnp.zeros((B_pad, F), x.dtype).at[:Btot, :].set(x)

    # advisory cost hint so XLA schedules this tiny call sensibly
    flops = B_pad * (2 * F * H + T * 2 * H * (V + H) + (T - 1) * 2 * V * H
                     + T * 2 * V * H + (T - 1) * 2 * H * H + 2 * H * C)
    transcendentals = B_pad * (T * V + C + (2 * T + 1) * H)
    bytes_accessed = 4 * (B_pad * F + PROWS * LANES + B_pad * LANES)

    out = pl.pallas_call(
        _make_fused_kernel(do_padding),
        out_shape=jax.ShapeDtypeStruct((B_pad, LANES), jnp.float32),
        grid=(nblk,),
        in_specs=[pl.BlockSpec((bb, F), lambda i: (i, 0)),
                  pl.BlockSpec((PROWS, LANES), lambda i: (0, 0))],
        out_specs=pl.BlockSpec((bb, LANES), lambda i: (i, 0)),
        compiler_params=pltpu.CompilerParams(dimension_semantics=("parallel",)),
        cost_estimate=pl.CostEstimate(flops=flops,
                                      transcendentals=transcendentals,
                                      bytes_accessed=bytes_accessed),
    )(x, param_slab)
    return out[:Btot]


# ---------------- SpeakerListener.forward ---------------------------------------
def speaker_listener_forward(sender_input, labels, param_slab, do_padding=True):
    del labels  # synthetic speaker does not condition on labels
    slab = fused_call(sender_input, param_slab, do_padding)
    speaker_output = slab[:, _COL_SPK_LOGP:_COL_SPK_LOGP + T]            # (B, T)
    padded_message = slab[:, _COL_PADMSG:_COL_PADMSG + T].astype(jnp.int32)
    message_length = slab[:, _COL_LEN].astype(jnp.int32)                 # (B,)
    entropy_spk = slab[:, _COL_ENT_SPK]                                  # (B,)
    listener_prediction = slab[:, _COL_PRED].astype(jnp.int32)           # (B,)
    entropy_lst = slab[:, _COL_ENT_LST]                                  # (B,)
    listener_output = slab[:, _COL_LOGP_LST:_COL_LOGP_LST + C]           # (B, C)
    logits_lst = slab[:, _COL_LOGITS_LST:_COL_LOGITS_LST + C]            # (B, C)
    return (speaker_output, padded_message, message_length, entropy_spk,
            listener_output, listener_prediction, logits_lst, entropy_lst)


speaker_listener_forward_jit = jax.jit(speaker_listener_forward,
                                       static_argnames=("do_padding",))


# ---------------- parameters & host-side packing ---------------------------------
def make_params():
    key = jax.random.PRNGKey(0)
    ks = jax.random.split(key, 12)
    s = 0.3
    spk_Wout = s * jax.random.normal(ks[5], (H, V), jnp.float32)
    spk_Whh = s * jax.random.normal(ks[2], (H, H), jnp.float32)
    return {
        "spk_Wenc": s * jax.random.normal(ks[0], (F, H), jnp.float32),
        "spk_benc": s * jax.random.normal(ks[1], (1, H), jnp.float32),
        "spk_Whh": spk_Whh,
        "spk_Emb": s * jax.random.normal(ks[3], (V, H), jnp.float32),
        "spk_bh": s * jax.random.normal(ks[4], (1, H), jnp.float32),
        "spk_Wout": spk_Wout,
        "spk_bout": s * jax.random.normal(ks[6], (1, V), jnp.float32),
        # merged speaker weight: one (B,H)x(H,V+H) MXU call -> logits + h@Whh
        "spk_Wcmb": jnp.concatenate([spk_Wout, spk_Whh], axis=1),
        "lst_Emb": s * jax.random.normal(ks[7], (V, H), jnp.float32),
        "lst_Whh": s * jax.random.normal(ks[8], (H, H), jnp.float32),
        "lst_bh": s * jax.random.normal(ks[9], (1, H), jnp.float32),
        "lst_Wout": s * jax.random.normal(ks[10], (H, C), jnp.float32),
        "lst_bout": s * jax.random.normal(ks[11], (1, C), jnp.float32),
    }


def pack_params(p):
    """Pack all weights + biases into one lane-dense (PROWS, 128) f32 slab."""
    slab = jnp.zeros((PROWS, LANES), jnp.float32)
    slab = slab.at[_R_WENC:_R_WENC + F, :H].set(p["spk_Wenc"])
    slab = slab.at[_R_WCMB:_R_WCMB + H, :V + H].set(p["spk_Wcmb"])
    slab = slab.at[_R_SEMB:_R_SEMB + V, :H].set(p["spk_Emb"])
    slab = slab.at[_R_LEMB:_R_LEMB + V, :H].set(p["lst_Emb"])
    slab = slab.at[_R_LWHH:_R_LWHH + H, :H].set(p["lst_Whh"])
    slab = slab.at[_R_LWOUT:_R_LWOUT + H, :C].set(p["lst_Wout"])
    slab = slab.at[_R_BIAS + 0, :H].set(p["spk_benc"][0])
    slab = slab.at[_R_BIAS + 1, :H].set(p["spk_bh"][0])
    slab = slab.at[_R_BIAS + 2, :V].set(p["spk_bout"][0])
    slab = slab.at[_R_BIAS + 3, :H].set(p["lst_bh"][0])
    slab = slab.at[_R_BIAS + 4, :C].set(p["lst_bout"][0])
    return slab


# ---------------- pure-JAX reference (correctness oracle) -------------------------
def reference_forward(x, p, do_padding=True):
    hp = lax.Precision.HIGHEST
    h = jnp.tanh(jnp.dot(x, p["spk_Wenc"], precision=hp) + p["spk_benc"])
    toks, sels, ents = [], [], []
    for t in range(T):
        logits = jnp.dot(h, p["spk_Wout"], precision=hp) + p["spk_bout"]
        logp = jax.nn.log_softmax(logits, axis=-1)
        tok = jnp.argmax(logits, axis=-1)
        sels.append(jnp.take_along_axis(logp, tok[:, None], axis=-1)[:, 0])
        ents.append(-jnp.sum(jnp.exp(logp) * logp, axis=-1))
        toks.append(tok)
        if t + 1 < T:
            emb = p["spk_Emb"][tok]
            h = jnp.tanh(jnp.dot(h, p["spk_Whh"], precision=hp) + emb + p["spk_bh"])
    msg = jnp.stack(toks, axis=1)
    spk_out = jnp.stack(sels, axis=1)
    ent_spk = jnp.stack(ents, axis=1).mean(axis=1)
    if do_padding:
        eos = msg == EOS_ID
        csum = jnp.cumsum(eos.astype(jnp.int32), axis=1)
        lengths = jnp.minimum(T - jnp.sum(csum > 0, axis=1) + 1, T)
        seen_before = (csum - eos.astype(jnp.int32)) > 0
        padded = jnp.where(seen_before, PAD_ID, msg)
    else:
        padded = msg
        lengths = jnp.full((msg.shape[0],), T, jnp.int32)
    h2 = jnp.zeros((x.shape[0], H), jnp.float32)
    for t in range(T):
        emb = p["lst_Emb"][padded[:, t]]
        h2 = jnp.tanh(jnp.dot(h2, p["lst_Whh"], precision=hp) + emb + p["lst_bh"])
    logits_l = jnp.dot(h2, p["lst_Wout"], precision=hp) + p["lst_bout"]
    logp_l = jax.nn.log_softmax(logits_l, axis=-1)
    pred = jnp.argmax(logits_l, axis=-1)
    ent_l = -jnp.sum(jnp.exp(logp_l) * logp_l, axis=-1)
    return spk_out, padded, lengths, ent_spk, logp_l, pred, logits_l, ent_l


# ---------------- main -------------------------------------------------------------
if __name__ == "__main__":
    key = jax.random.PRNGKey(0)
    k_x, k_lbl = jax.random.split(key)
    sender_input = jax.random.normal(k_x, (B, F), jnp.float32)
    labels = jax.random.randint(k_lbl, (B,), 0, C, jnp.int32)

    params = make_params()
    param_slab = pack_params(params)     # packed once, one DMA per kernel call

    outs = speaker_listener_forward_jit(sender_input, labels, param_slab,
                                        do_padding=True)
    outs = jax.block_until_ready(outs)

    (speaker_output, padded_message, message_length, entropy_spk,
     listener_output, listener_prediction, logits_lst, entropy_lst) = outs

    # shapes/dtypes of the 8-tuple (mirrors the torch forward)
    assert speaker_output.shape == (B, T)
    assert padded_message.shape == (B, T) and padded_message.dtype == jnp.int32
    assert message_length.shape == (B,) and message_length.dtype == jnp.int32
    assert entropy_spk.shape == (B,)
    assert listener_output.shape == (B, C)
    assert listener_prediction.shape == (B,) and listener_prediction.dtype == jnp.int32
    assert logits_lst.shape == (B, C)
    assert entropy_lst.shape == (B,)
    assert bool(jnp.all(message_length >= 1)) and bool(jnp.all(message_length <= T))

    # correctness vs. pure-JAX reference
    ref = reference_forward(sender_input, params, do_padding=True)
    assert bool(jnp.array_equal(padded_message, ref[1]))
    assert bool(jnp.array_equal(message_length, ref[2].astype(jnp.int32)))
    assert bool(jnp.array_equal(listener_prediction, ref[5].astype(jnp.int32)))
    for got, want in ((speaker_output, ref[0]), (entropy_spk, ref[3]),
                      (listener_output, ref[4]), (logits_lst, ref[6]),
                      (entropy_lst, ref[7])):
        assert bool(jnp.allclose(got, want, atol=5e-3, rtol=5e-3))

    print("KERNEL_OK")
</pallas_src>

<mosaic_0001>
module attributes {stable_mosaic.version = 11 : i64} {
  func.func @kernel(%arg0: i32, %arg1: memref<8x16xf32, #tpu.memory_space<vmem>>, %arg2: memref<152x128xf32, #tpu.memory_space<vmem>>, %arg3: memref<8x128xf32, #tpu.memory_space<vmem>>) attributes {dimension_semantics = [#tpu.dimension_semantics<parallel>], iteration_bounds = array<i64: 1>, scalar_prefetch = 0 : i64, scratch_operands = 0 : i64, tpu.core_type = #tpu.core_type<tc>, window_params = [{transform_indices = @transform_0, window_bounds = array<i64: 8, 16>}, {pipeline_mode = #tpu.pipeline_mode<synchronous>, transform_indices = @transform_1, window_bounds = array<i64: 152, 128>}, {transform_indices = @transform_2, window_bounds = array<i64: 8, 128>}]} {
    %c0 = arith.constant 0 : index
    %c0_0 = arith.constant 0 : index
    %0 = vector.load %arg1[%c0, %c0_0] : memref<8x16xf32, #tpu.memory_space<vmem>>, vector<8x16xf32>
    %c0_1 = arith.constant 0 : index
    %c0_2 = arith.constant 0 : index
    %1 = vector.load %arg2[%c0_1, %c0_2] : memref<152x128xf32, #tpu.memory_space<vmem>>, vector<16x128xf32>
    %2 = vector.extract_strided_slice %1 {offsets = [0, 0], sizes = [16, 32], strides = [1, 1]} : vector<16x128xf32> to vector<16x32xf32>
    %c16 = arith.constant 16 : index
    %c0_3 = arith.constant 0 : index
    %3 = vector.load %arg2[%c16, %c0_3] : memref<152x128xf32, #tpu.memory_space<vmem>>, vector<32x128xf32>
    %4 = vector.extract_strided_slice %3 {offsets = [0, 0], sizes = [32, 48], strides = [1, 1]} : vector<32x128xf32> to vector<32x48xf32>
    %c48 = arith.constant 48 : index
    %c0_4 = arith.constant 0 : index
    %5 = vector.load %arg2[%c48, %c0_4] : memref<152x128xf32, #tpu.memory_space<vmem>>, vector<16x128xf32>
    %6 = vector.extract_strided_slice %5 {offsets = [0, 0], sizes = [16, 32], strides = [1, 1]} : vector<16x128xf32> to vector<16x32xf32>
    %c64 = arith.constant 64 : index
    %c0_5 = arith.constant 0 : index
    %7 = vector.load %arg2[%c64, %c0_5] : memref<152x128xf32, #tpu.memory_space<vmem>>, vector<16x128xf32>
    %8 = vector.extract_strided_slice %7 {offsets = [0, 0], sizes = [16, 32], strides = [1, 1]} : vector<16x128xf32> to vector<16x32xf32>
    %c80 = arith.constant 80 : index
    %c0_6 = arith.constant 0 : index
    %9 = vector.load %arg2[%c80, %c0_6] : memref<152x128xf32, #tpu.memory_space<vmem>>, vector<32x128xf32>
    %10 = vector.extract_strided_slice %9 {offsets = [0, 0], sizes = [32, 32], strides = [1, 1]} : vector<32x128xf32> to vector<32x32xf32>
    %c112 = arith.constant 112 : index
    %c0_7 = arith.constant 0 : index
    %11 = vector.load %arg2[%c112, %c0_7] : memref<152x128xf32, #tpu.memory_space<vmem>>, vector<32x128xf32>
    %12 = vector.extract_strided_slice %11 {offsets = [0, 0], sizes = [32, 16], strides = [1, 1]} : vector<32x128xf32> to vector<32x16xf32>
    %c144 = arith.constant 144 : index
    %c0_8 = arith.constant 0 : index
    %13 = vector.load %arg2[%c144, %c0_8] : memref<152x128xf32, #tpu.memory_space<vmem>>, vector<8x128xf32>
    %14 = vector.extract_strided_slice %13 {offsets = [0, 0], sizes = [1, 32], strides = [1, 1]} : vector<8x128xf32> to vector<1x32xf32>
    %15 = vector.extract_strided_slice %13 {offsets = [1, 0], sizes = [1, 32], strides = [1, 1]} : vector<8x128xf32> to vector<1x32xf32>
    %16 = vector.extract_strided_slice %13 {offsets = [2, 0], sizes = [1, 16], strides = [1, 1]} : vector<8x128xf32> to vector<1x16xf32>
    %17 = vector.extract_strided_slice %13 {offsets = [3, 0], sizes = [1, 32], strides = [1, 1]} : vector<8x128xf32> to vector<1x32xf32>
    %18 = vector.extract_strided_slice %13 {offsets = [4, 0], sizes = [1, 16], strides = [1, 1]} : vector<8x128xf32> to vector<1x16xf32>
    %cst = arith.constant dense<0.000000e+00> : vector<8x32xf32>
    %19 = tpu.matmul %0, %2, %cst {dimension_numbers = #tpu.dot_dimension_numbers<[1], [0], [0], [1], [0, 0, 1, 1], [], []>} : vector<8x16xf32>, vector<16x32xf32>, vector<8x32xf32> -> vector<8x32xf32>
    %20 = vector.broadcast %14 : vector<1x32xf32> to vector<8x32xf32>
    %21 = arith.addf %19, %20 : vector<8x32xf32>
    %22 = math.tanh %21 : vector<8x32xf32>
    %23 = tpu.iota {dimensions = array<i32: 1>} : vector<8x8xi32>
    %24 = tpu.iota {dimensions = array<i32: 1>} : vector<8x16xi32>
    %c0_i32 = arith.constant 0 : i32
    %25 = vector.broadcast %c0_i32 : i32 to vector<8x8xi32>
    %cst_9 = arith.constant 0.000000e+00 : f32
    %26 = vector.broadcast %cst_9 : f32 to vector<8x8xf32>
    %cst_10 = arith.constant 0.000000e+00 : f32
    %27 = vector.broadcast %cst_10 : f32 to vector<8x1xf32>
    %false = arith.constant false
    %28 = vector.broadcast %false : i1 to vector<8x1xi1>
    %cst_11 = arith.constant 0.000000e+00 : f32
    %29 = vector.broadcast %cst_11 : f32 to vector<8x1xf32>
    %cst_12 = arith.constant dense<0.000000e+00> : vector<8x48xf32>
    %30 = tpu.matmul %22, %4, %cst_12 {dimension_numbers = #tpu.dot_dimension_numbers<[1], [0], [0], [1], [0, 0, 1, 1], [], []>} : vector<8x32xf32>, vector<32x48xf32>, vector<8x48xf32> -> vector<8x48xf32>
    %31 = vector.extract_strided_slice %30 {offsets = [0, 0], sizes = [8, 16], strides = [1, 1]} : vector<8x48xf32> to vector<8x16xf32>
    %32 = vector.broadcast %16 : vector<1x16xf32> to vector<8x16xf32>
    %33 = arith.addf %31, %32 : vector<8x16xf32>
    %34 = vector.extract_strided_slice %30 {offsets = [0, 16], sizes = [8, 32], strides = [1, 1]} : vector<8x48xf32> to vector<8x32xf32>
    %cst_13 = arith.constant dense<0xFF800000> : vector<8xf32>
    %35 = vector.multi_reduction <maximumf>, %33, %cst_13 [1] : vector<8x16xf32> to vector<8xf32>
    %36 = vector.shape_cast %35 : vector<8xf32> to vector<8x1xf32>
    %37 = vector.broadcast %36 : vector<8x1xf32> to vector<8x16xf32>
    %38 = arith.subf %33, %37 : vector<8x16xf32>
    %39 = math.exp %38 : vector<8x16xf32>
    %cst_14 = arith.constant dense<0.000000e+00> : vector<8xf32>
    %40 = vector.multi_reduction <add>, %39, %cst_14 [1] : vector<8x16xf32> to vector<8xf32>
    %41 = vector.shape_cast %40 : vector<8xf32> to vector<8x1xf32>
    %42 = math.log %41 : vector<8x1xf32>
    %43 = vector.broadcast %36 : vector<8x1xf32> to vector<8x16xf32>
    %44 = arith.cmpf oeq, %33, %43 : vector<8x16xf32>
    %c16_i32 = arith.constant 16 : i32
    %45 = vector.broadcast %c16_i32 : i32 to vector<8x16xi32>
    %46 = arith.select %44, %24, %45 : vector<8x16xi1>, vector<8x16xi32>
    %cst_15 = arith.constant dense<2147483647> : vector<8xi32>
    %47 = vector.multi_reduction <minsi>, %46, %cst_15 [1] : vector<8x16xi32> to vector<8xi32>
    %48 = vector.shape_cast %47 : vector<8xi32> to vector<8x1xi32>
    %cst_16 = arith.constant 0.000000e+00 : f32
    %49 = vector.broadcast %cst_16 : f32 to vector<8x1xf32>
    %50 = arith.subf %49, %42 : vector<8x1xf32>
    %51 = arith.mulf %38, %39 : vector<8x16xf32>
    %cst_17 = arith.constant dense<0.000000e+00> : vector<8xf32>
    %52 = vector.multi_reduction <add>, %51, %cst_17 [1] : vector<8x16xf32> to vector<8xf32>
    %53 = vector.shape_cast %52 : vector<8xf32> to vector<8x1xf32>
    %54 = arith.divf %53, %41 : vector<8x1xf32>
    %55 = arith.subf %42, %54 : vector<8x1xf32>
    %56 = arith.addf %27, %55 : vector<8x1xf32>
    %c2_i32 = arith.constant 2 : i32
    %57 = vector.broadcast %c2_i32 : i32 to vector<8x1xi32>
    %58 = arith.select %28, %57, %48 : vector<8x1xi1>, vector<8x1xi32>
    %c0_i32_18 = arith.constant 0 : i32
    %59 = vector.broadcast %c0_i32_18 : i32 to vector<8x1xi32>
    %60 = arith.cmpi eq, %48, %59 : vector<8x1xi32>
    %61 = arith.ori %28, %60 : vector<8x1xi1>
    %62 = arith.extui %61 : vector<8x1xi1> to vector<8x1xi32>
    %63 = arith.sitofp %62 : vector<8x1xi32> to vector<8x1xf32>
    %64 = arith.addf %29, %63 : vector<8x1xf32>
    %c0_i32_19 = arith.constant 0 : i32
    %65 = vector.broadcast %c0_i32_19 : i32 to vector<8x8xi32>
    %66 = arith.cmpi eq, %23, %65 : vector<8x8xi32>
    %67 = vector.shape_cast %58 : vector<8x1xi32> to vector<8x1xi32>
    %68 = vector.broadcast %67 : vector<8x1xi32> to vector<8x8xi32>
    %69 = arith.select %66, %68, %25 : vector<8x8xi1>, vector<8x8xi32>
    %70 = vector.shape_cast %50 : vector<8x1xf32> to vector<8x1xf32>
    %71 = vector.broadcast %70 : vector<8x1xf32> to vector<8x8xf32>
    %72 = arith.select %66, %71, %26 : vector<8x8xi1>, vector<8x8xf32>
    %cst_20 = arith.constant 0.000000e+00 : f32
    %73 = vector.broadcast %cst_20 : f32 to vector<8x32xf32>
    %c0_i32_21 = arith.constant 0 : i32
    %74 = vector.broadcast %c0_i32_21 : i32 to vector<8x1xi32>
    %75 = arith.cmpi eq, %48, %74 : vector<8x1xi32>
    %76 = vector.extract_strided_slice %6 {offsets = [0, 0], sizes = [1, 32], strides = [1, 1]} : vector<16x32xf32> to vector<1x32xf32>
    %cst_22 = arith.constant 0.000000e+00 : f32
    %77 = vector.shape_cast %75 : vector<8x1xi1> to vector<8x1xi1>
    %78 = vector.broadcast %77 : vector<8x1xi1> to vector<8x32xi1>
    %79 = vector.shape_cast %76 : vector<1x32xf32> to vector<1x32xf32>
    %80 = vector.broadcast %79 : vector<1x32xf32> to vector<8x32xf32>
    %81 = vector.broadcast %cst_22 : f32 to vector<8x32xf32>
    %82 = arith.select %78, %80, %81 : vector<8x32xi1>, vector<8x32xf32>
    %83 = arith.addf %73, %82 : vector<8x32xf32>
    %c1_i32 = arith.constant 1 : i32
    %84 = vector.broadcast %c1_i32 : i32 to vector<8x1xi32>
    %85 = arith.cmpi eq, %48, %84 : vector<8x1xi32>
    %86 = vector.extract_strided_slice %6 {offsets = [1, 0], sizes = [1, 32], strides = [1, 1]} : vector<16x32xf32> to vector<1x32xf32>
    %cst_23 = arith.constant 0.000000e+00 : f32
    %87 = vector.shape_cast %85 : vector<8x1xi1> to vector<8x1xi1>
    %88 = vector.broadcast %87 : vector<8x1xi1> to vector<8x32xi1>
    %89 = vector.shape_cast %86 : vector<1x32xf32> to vector<1x32xf32>
    %90 = vector.broadcast %89 : vector<1x32xf32> to vector<8x32xf32>
    %91 = vector.broadcast %cst_23 : f32 to vector<8x32xf32>
    %92 = arith.select %88, %90, %91 : vector<8x32xi1>, vector<8x32xf32>
    %93 = arith.addf %83, %92 : vector<8x32xf32>
    %c2_i32_24 = arith.constant 2 : i32
    %94 = vector.broadcast %c2_i32_24 : i32 to vector<8x1xi32>
    %95 = arith.cmpi eq, %48, %94 : vector<8x1xi32>
    %96 = vector.extract_strided_slice %6 {offsets = [2, 0], sizes = [1, 32], strides = [1, 1]} : vector<16x32xf32> to vector<1x32xf32>
    %cst_25 = arith.constant 0.000000e+00 : f32
    %97 = vector.shape_cast %95 : vector<8x1xi1> to vector<8x1xi1>
    %98 = vector.broadcast %97 : vector<8x1xi1> to vector<8x32xi1>
    %99 = vector.shape_cast %96 : vector<1x32xf32> to vector<1x32xf32>
    %100 = vector.broadcast %99 : vector<1x32xf32> to vector<8x32xf32>
    %101 = vector.broadcast %cst_25 : f32 to vector<8x32xf32>
    %102 = arith.select %98, %100, %101 : vector<8x32xi1>, vector<8x32xf32>
    %103 = arith.addf %93, %102 : vector<8x32xf32>
    %c3_i32 = arith.constant 3 : i32
    %104 = vector.broadcast %c3_i32 : i32 to vector<8x1xi32>
    %105 = arith.cmpi eq, %48, %104 : vector<8x1xi32>
    %106 = vector.extract_strided_slice %6 {offsets = [3, 0], sizes = [1, 32], strides = [1, 1]} : vector<16x32xf32> to vector<1x32xf32>
    %cst_26 = arith.constant 0.000000e+00 : f32
    %107 = vector.shape_cast %105 : vector<8x1xi1> to vector<8x1xi1>
    %108 = vector.broadcast %107 : vector<8x1xi1> to vector<8x32xi1>
    %109 = vector.shape_cast %106 : vector<1x32xf32> to vector<1x32xf32>
    %110 = vector.broadcast %109 : vector<1x32xf32> to vector<8x32xf32>
    %111 = vector.broadcast %cst_26 : f32 to vector<8x32xf32>
    %112 = arith.select %108, %110, %111 : vector<8x32xi1>, vector<8x32xf32>
    %113 = arith.addf %103, %112 : vector<8x32xf32>
    %c4_i32 = arith.constant 4 : i32
    %114 = vector.broadcast %c4_i32 : i32 to vector<8x1xi32>
    %115 = arith.cmpi eq, %48, %114 : vector<8x1xi32>
    %116 = vector.extract_strided_slice %6 {offsets = [4, 0], sizes = [1, 32], strides = [1, 1]} : vector<16x32xf32> to vector<1x32xf32>
    %cst_27 = arith.constant 0.000000e+00 : f32
    %117 = vector.shape_cast %115 : vector<8x1xi1> to vector<8x1xi1>
    %118 = vector.broadcast %117 : vector<8x1xi1> to vector<8x32xi1>
    %119 = vector.shape_cast %116 : vector<1x32xf32> to vector<1x32xf32>
    %120 = vector.broadcast %119 : vector<1x32xf32> to vector<8x32xf32>
    %121 = vector.broadcast %cst_27 : f32 to vector<8x32xf32>
    %122 = arith.select %118, %120, %121 : vector<8x32xi1>, vector<8x32xf32>
    %123 = arith.addf %113, %122 : vector<8x32xf32>
    %c5_i32 = arith.constant 5 : i32
    %124 = vector.broadcast %c5_i32 : i32 to vector<8x1xi32>
    %125 = arith.cmpi eq, %48, %124 : vector<8x1xi32>
    %126 = vector.extract_strided_slice %6 {offsets = [5, 0], sizes = [1, 32], strides = [1, 1]} : vector<16x32xf32> to vector<1x32xf32>
    %cst_28 = arith.constant 0.000000e+00 : f32
    %127 = vector.shape_cast %125 : vector<8x1xi1> to vector<8x1xi1>
    %128 = vector.broadcast %127 : vector<8x1xi1> to vector<8x32xi1>
    %129 = vector.shape_cast %126 : vector<1x32xf32> to vector<1x32xf32>
    %130 = vector.broadcast %129 : vector<1x32xf32> to vector<8x32xf32>
    %131 = vector.broadcast %cst_28 : f32 to vector<8x32xf32>
    %132 = arith.select %128, %130, %131 : vector<8x32xi1>, vector<8x32xf32>
    %133 = arith.addf %123, %132 : vector<8x32xf32>
    %c6_i32 = arith.constant 6 : i32
    %134 = vector.broadcast %c6_i32 : i32 to vector<8x1xi32>
    %135 = arith.cmpi eq, %48, %134 : vector<8x1xi32>
    %136 = vector.extract_strided_slice %6 {offsets = [6, 0], sizes = [1, 32], strides = [1, 1]} : vector<16x32xf32> to vector<1x32xf32>
    %cst_29 = arith.constant 0.000000e+00 : f32
    %137 = vector.shape_cast %135 : vector<8x1xi1> to vector<8x1xi1>
    %138 = vector.broadcast %137 : vector<8x1xi1> to vector<8x32xi1>
    %139 = vector.shape_cast %136 : vector<1x32xf32> to vector<1x32xf32>
    %140 = vector.broadcast %139 : vector<1x32xf32> to vector<8x32xf32>
    %141 = vector.broadcast %cst_29 : f32 to vector<8x32xf32>
    %142 = arith.select %138, %140, %141 : vector<8x32xi1>, vector<8x32xf32>
    %143 = arith.addf %133, %142 : vector<8x32xf32>
    %c7_i32 = arith.constant 7 : i32
    %144 = vector.broadcast %c7_i32 : i32 to vector<8x1xi32>
    %145 = arith.cmpi eq, %48, %144 : vector<8x1xi32>
    %146 = vector.extract_strided_slice %6 {offsets = [7, 0], sizes = [1, 32], strides = [1, 1]} : vector<16x32xf32> to vector<1x32xf32>
    %cst_30 = arith.constant 0.000000e+00 : f32
    %147 = vector.shape_cast %145 : vector<8x1xi1> to vector<8x1xi1>
    %148 = vector.broadcast %147 : vector<8x1xi1> to vector<8x32xi1>
    %149 = vector.shape_cast %146 : vector<1x32xf32> to vector<1x32xf32>
    %150 = vector.broadcast %149 : vector<1x32xf32> to vector<8x32xf32>
    %151 = vector.broadcast %cst_30 : f32 to vector<8x32xf32>
    %152 = arith.select %148, %150, %151 : vector<8x32xi1>, vector<8x32xf32>
    %153 = arith.addf %143, %152 : vector<8x32xf32>
    %c8_i32 = arith.constant 8 : i32
    %154 = vector.broadcast %c8_i32 : i32 to vector<8x1xi32>
    %155 = arith.cmpi eq, %48, %154 : vector<8x1xi32>
    %156 = vector.extract_strided_slice %6 {offsets = [8, 0], sizes = [1, 32], strides = [1, 1]} : vector<16x32xf32> to vector<1x32xf32>
    %cst_31 = arith.constant 0.000000e+00 : f32
    %157 = vector.shape_cast %155 : vector<8x1xi1> to vector<8x1xi1>
    %158 = vector.broadcast %157 : vector<8x1xi1> to vector<8x32xi1>
    %159 = vector.shape_cast %156 : vector<1x32xf32> to vector<1x32xf32>
    %160 = vector.broadcast %159 : vector<1x32xf32> to vector<8x32xf32>
    %161 = vector.broadcast %cst_31 : f32 to vector<8x32xf32>
    %162 = arith.select %158, %160, %161 : vector<8x32xi1>, vector<8x32xf32>
    %163 = arith.addf %153, %162 : vector<8x32xf32>
    %c9_i32 = arith.constant 9 : i32
    %164 = vector.broadcast %c9_i32 : i32 to vector<8x1xi32>
    %165 = arith.cmpi eq, %48, %164 : vector<8x1xi32>
    %166 = vector.extract_strided_slice %6 {offsets = [9, 0], sizes = [1, 32], strides = [1, 1]} : vector<16x32xf32> to vector<1x32xf32>
    %cst_32 = arith.constant 0.000000e+00 : f32
    %167 = vector.shape_cast %165 : vector<8x1xi1> to vector<8x1xi1>
    %168 = vector.broadcast %167 : vector<8x1xi1> to vector<8x32xi1>
    %169 = vector.shape_cast %166 : vector<1x32xf32> to vector<1x32xf32>
    %170 = vector.broadcast %169 : vector<1x32xf32> to vector<8x32xf32>
    %171 = vector.broadcast %cst_32 : f32 to vector<8x32xf32>
    %172 = arith.select %168, %170, %171 : vector<8x32xi1>, vector<8x32xf32>
    %173 = arith.addf %163, %172 : vector<8x32xf32>
    %c10_i32 = arith.constant 10 : i32
    %174 = vector.broadcast %c10_i32 : i32 to vector<8x1xi32>
    %175 = arith.cmpi eq, %48, %174 : vector<8x1xi32>
    %176 = vector.extract_strided_slice %6 {offsets = [10, 0], sizes = [1, 32], strides = [1, 1]} : vector<16x32xf32> to vector<1x32xf32>
    %cst_33 = arith.constant 0.000000e+00 : f32
    %177 = vector.shape_cast %175 : vector<8x1xi1> to vector<8x1xi1>
    %178 = vector.broadcast %177 : vector<8x1xi1> to vector<8x32xi1>
    %179 = vector.shape_cast %176 : vector<1x32xf32> to vector<1x32xf32>
    %180 = vector.broadcast %179 : vector<1x32xf32> to vector<8x32xf32>
    %181 = vector.broadcast %cst_33 : f32 to vector<8x32xf32>
    %182 = arith.select %178, %180, %181 : vector<8x32xi1>, vector<8x32xf32>
    %183 = arith.addf %173, %182 : vector<8x32xf32>
    %c11_i32 = arith.constant 11 : i32
    %184 = vector.broadcast %c11_i32 : i32 to vector<8x1xi32>
    %185 = arith.cmpi eq, %48, %184 : vector<8x1xi32>
    %186 = vector.extract_strided_slice %6 {offsets = [11, 0], sizes = [1, 32], strides = [1, 1]} : vector<16x32xf32> to vector<1x32xf32>
    %cst_34 = arith.constant 0.000000e+00 : f32
    %187 = vector.shape_cast %185 : vector<8x1xi1> to vector<8x1xi1>
    %188 = vector.broadcast %187 : vector<8x1xi1> to vector<8x32xi1>
    %189 = vector.shape_cast %186 : vector<1x32xf32> to vector<1x32xf32>
    %190 = vector.broadcast %189 : vector<1x32xf32> to vector<8x32xf32>
    %191 = vector.broadcast %cst_34 : f32 to vector<8x32xf32>
    %192 = arith.select %188, %190, %191 : vector<8x32xi1>, vector<8x32xf32>
    %193 = arith.addf %183, %192 : vector<8x32xf32>
    %c12_i32 = arith.constant 12 : i32
    %194 = vector.broadcast %c12_i32 : i32 to vector<8x1xi32>
    %195 = arith.cmpi eq, %48, %194 : vector<8x1xi32>
    %196 = vector.extract_strided_slice %6 {offsets = [12, 0], sizes = [1, 32], strides = [1, 1]} : vector<16x32xf32> to vector<1x32xf32>
    %cst_35 = arith.constant 0.000000e+00 : f32
    %197 = vector.shape_cast %195 : vector<8x1xi1> to vector<8x1xi1>
    %198 = vector.broadcast %197 : vector<8x1xi1> to vector<8x32xi1>
    %199 = vector.shape_cast %196 : vector<1x32xf32> to vector<1x32xf32>
    %200 = vector.broadcast %199 : vector<1x32xf32> to vector<8x32xf32>
    %201 = vector.broadcast %cst_35 : f32 to vector<8x32xf32>
    %202 = arith.select %198, %200, %201 : vector<8x32xi1>, vector<8x32xf32>
    %203 = arith.addf %193, %202 : vector<8x32xf32>
    %c13_i32 = arith.constant 13 : i32
    %204 = vector.broadcast %c13_i32 : i32 to vector<8x1xi32>
    %205 = arith.cmpi eq, %48, %204 : vector<8x1xi32>
    %206 = vector.extract_strided_slice %6 {offsets = [13, 0], sizes = [1, 32], strides = [1, 1]} : vector<16x32xf32> to vector<1x32xf32>
    %cst_36 = arith.constant 0.000000e+00 : f32
    %207 = vector.shape_cast %205 : vector<8x1xi1> to vector<8x1xi1>
    %208 = vector.broadcast %207 : vector<8x1xi1> to vector<8x32xi1>
    %209 = vector.shape_cast %206 : vector<1x32xf32> to vector<1x32xf32>
    %210 = vector.broadcast %209 : vector<1x32xf32> to vector<8x32xf32>
    %211 = vector.broadcast %cst_36 : f32 to vector<8x32xf32>
    %212 = arith.select %208, %210, %211 : vector<8x32xi1>, vector<8x32xf32>
    %213 = arith.addf %203, %212 : vector<8x32xf32>
    %c14_i32 = arith.constant 14 : i32
    %214 = vector.broadcast %c14_i32 : i32 to vector<8x1xi32>
    %215 = arith.cmpi eq, %48, %214 : vector<8x1xi32>
    %216 = vector.extract_strided_slice %6 {offsets = [14, 0], sizes = [1, 32], strides = [1, 1]} : vector<16x32xf32> to vector<1x32xf32>
    %cst_37 = arith.constant 0.000000e+00 : f32
    %217 = vector.shape_cast %215 : vector<8x1xi1> to vector<8x1xi1>
    %218 = vector.broadcast %217 : vector<8x1xi1> to vector<8x32xi1>
    %219 = vector.shape_cast %216 : vector<1x32xf32> to vector<1x32xf32>
    %220 = vector.broadcast %219 : vector<1x32xf32> to vector<8x32xf32>
    %221 = vector.broadcast %cst_37 : f32 to vector<8x32xf32>
    %222 = arith.select %218, %220, %221 : vector<8x32xi1>, vector<8x32xf32>
    %223 = arith.addf %213, %222 : vector<8x32xf32>
    %c15_i32 = arith.constant 15 : i32
    %224 = vector.broadcast %c15_i32 : i32 to vector<8x1xi32>
    %225 = arith.cmpi eq, %48, %224 : vector<8x1xi32>
    %226 = vector.extract_strided_slice %6 {offsets = [15, 0], sizes = [1, 32], strides = [1, 1]} : vector<16x32xf32> to vector<1x32xf32>
    %cst_38 = arith.constant 0.000000e+00 : f32
    %227 = vector.shape_cast %225 : vector<8x1xi1> to vector<8x1xi1>
    %228 = vector.broadcast %227 : vector<8x1xi1> to vector<8x32xi1>
    %229 = vector.shape_cast %226 : vector<1x32xf32> to vector<1x32xf32>
    %230 = vector.broadcast %229 : vector<1x32xf32> to vector<8x32xf32>
    %231 = vector.broadcast %cst_38 : f32 to vector<8x32xf32>
    %232 = arith.select %228, %230, %231 : vector<8x32xi1>, vector<8x32xf32>
    %233 = arith.addf %223, %232 : vector<8x32xf32>
    %234 = arith.addf %34, %233 : vector<8x32xf32>
    %235 = vector.broadcast %15 : vector<1x32xf32> to vector<8x32xf32>
    %236 = arith.addf %234, %235 : vector<8x32xf32>
    %237 = math.tanh %236 : vector<8x32xf32>
    %cst_39 = arith.constant dense<0.000000e+00> : vector<8x48xf32>
    %238 = tpu.matmul %237, %4, %cst_39 {dimension_numbers = #tpu.dot_dimension_numbers<[1], [0], [0], [1], [0, 0, 1, 1], [], []>} : vector<8x32xf32>, vector<32x48xf32>, vector<8x48xf32> -> vector<8x48xf32>
    %239 = vector.extract_strided_slice %238 {offsets = [0, 0], sizes = [8, 16], strides = [1, 1]} : vector<8x48xf32> to vector<8x16xf32>
    %240 = vector.broadcast %16 : vector<1x16xf32> to vector<8x16xf32>
    %241 = arith.addf %239, %240 : vector<8x16xf32>
    %242 = vector.extract_strided_slice %238 {offsets = [0, 16], sizes = [8, 32], strides = [1, 1]} : vector<8x48xf32> to vector<8x32xf32>
    %cst_40 = arith.constant dense<0xFF800000> : vector<8xf32>
    %243 = vector.multi_reduction <maximumf>, %241, %cst_40 [1] : vector<8x16xf32> to vector<8xf32>
    %244 = vector.shape_cast %243 : vector<8xf32> to vector<8x1xf32>
    %245 = vector.broadcast %244 : vector<8x1xf32> to vector<8x16xf32>
    %246 = arith.subf %241, %245 : vector<8x16xf32>
    %247 = math.exp %246 : vector<8x16xf32>
    %cst_41 = arith.constant dense<0.000000e+00> : vector<8xf32>
    %248 = vector.multi_reduction <add>, %247, %cst_41 [1] : vector<8x16xf32> to vector<8xf32>
    %249 = vector.shape_cast %248 : vector<8xf32> to vector<8x1xf32>
    %250 = math.log %249 : vector<8x1xf32>
    %251 = vector.broadcast %244 : vector<8x1xf32> to vector<8x16xf32>
    %252 = arith.cmpf oeq, %241, %251 : vector<8x16xf32>
    %c16_i32_42 = arith.constant 16 : i32
    %253 = vector.broadcast %c16_i32_42 : i32 to vector<8x16xi32>
    %254 = arith.select %252, %24, %253 : vector<8x16xi1>, vector<8x16xi32>
    %cst_43 = arith.constant dense<2147483647> : vector<8xi32>
    %255 = vector.multi_reduction <minsi>, %254, %cst_43 [1] : vector<8x16xi32> to vector<8xi32>
    %256 = vector.shape_cast %255 : vector<8xi32> to vector<8x1xi32>
    %cst_44 = arith.constant 0.000000e+00 : f32
    %257 = vector.broadcast %cst_44 : f32 to vector<8x1xf32>
    %258 = arith.subf %257, %250 : vector<8x1xf32>
    %259 = arith.mulf %246, %247 : vector<8x16xf32>
    %cst_45 = arith.constant dense<0.000000e+00> : vector<8xf32>
    %260 = vector.multi_reduction <add>, %259, %cst_45 [1] : vector<8x16xf32> to vector<8xf32>
    %261 = vector.shape_cast %260 : vector<8xf32> to vector<8x1xf32>
    %262 = arith.divf %261, %249 : vector<8x1xf32>
    %263 = arith.subf %250, %262 : vector<8x1xf32>
    %264 = arith.addf %56, %263 : vector<8x1xf32>
    %c2_i32_46 = arith.constant 2 : i32
    %265 = vector.broadcast %c2_i32_46 : i32 to vector<8x1xi32>
    %266 = arith.select %61, %265, %256 : vector<8x1xi1>, vector<8x1xi32>
    %c0_i32_47 = arith.constant 0 : i32
    %267 = vector.broadcast %c0_i32_47 : i32 to vector<8x1xi32>
    %268 = arith.cmpi eq, %256, %267 : vector<8x1xi32>
    %269 = arith.ori %61, %268 : vector<8x1xi1>
    %270 = arith.extui %269 : vector<8x1xi1> to vector<8x1xi32>
    %271 = arith.sitofp %270 : vector<8x1xi32> to vector<8x1xf32>
    %272 = arith.addf %64, %271 : vector<8x1xf32>
    %c1_i32_48 = arith.constant 1 : i32
    %273 = vector.broadcast %c1_i32_48 : i32 to vector<8x8xi32>
    %274 = arith.cmpi eq, %23, %273 : vector<8x8xi32>
    %275 = vector.shape_cast %266 : vector<8x1xi32> to vector<8x1xi32>
    %276 = vector.broadcast %275 : vector<8x1xi32> to vector<8x8xi32>
    %277 = arith.select %274, %276, %69 : vector<8x8xi1>, vector<8x8xi32>
    %278 = vector.shape_cast %258 : vector<8x1xf32> to vector<8x1xf32>
    %279 = vector.broadcast %278 : vector<8x1xf32> to vector<8x8xf32>
    %280 = arith.select %274, %279, %72 : vector<8x8xi1>, vector<8x8xf32>
    %cst_49 = arith.constant 0.000000e+00 : f32
    %281 = vector.broadcast %cst_49 : f32 to vector<8x32xf32>
    %c0_i32_50 = arith.constant 0 : i32
    %282 = vector.broadcast %c0_i32_50 : i32 to vector<8x1xi32>
    %283 = arith.cmpi eq, %256, %282 : vector<8x1xi32>
    %284 = vector.extract_strided_slice %6 {offsets = [0, 0], sizes = [1, 32], strides = [1, 1]} : vector<16x32xf32> to vector<1x32xf32>
    %cst_51 = arith.constant 0.000000e+00 : f32
    %285 = vector.shape_cast %283 : vector<8x1xi1> to vector<8x1xi1>
    %286 = vector.broadcast %285 : vector<8x1xi1> to vector<8x32xi1>
    %287 = vector.shape_cast %284 : vector<1x32xf32> to vector<1x32xf32>
    %288 = vector.broadcast %287 : vector<1x32xf32> to vector<8x32xf32>
    %289 = vector.broadcast %cst_51 : f32 to vector<8x32xf32>
    %290 = arith.select %286, %288, %289 : vector<8x32xi1>, vector<8x32xf32>
    %291 = arith.addf %281, %290 : vector<8x32xf32>
    %c1_i32_52 = arith.constant 1 : i32
    %292 = vector.broadcast %c1_i32_52 : i32 to vector<8x1xi32>
    %293 = arith.cmpi eq, %256, %292 : vector<8x1xi32>
    %294 = vector.extract_strided_slice %6 {offsets = [1, 0], sizes = [1, 32], strides = [1, 1]} : vector<16x32xf32> to vector<1x32xf32>
    %cst_53 = arith.constant 0.000000e+00 : f32
    %295 = vector.shape_cast %293 : vector<8x1xi1> to vector<8x1xi1>
    %296 = vector.broadcast %295 : vector<8x1xi1> to vector<8x32xi1>
    %297 = vector.shape_cast %294 : vector<1x32xf32> to vector<1x32xf32>
    %298 = vector.broadcast %297 : vector<1x32xf32> to vector<8x32xf32>
    %299 = vector.broadcast %cst_53 : f32 to vector<8x32xf32>
    %300 = arith.select %296, %298, %299 : vector<8x32xi1>, vector<8x32xf32>
    %301 = arith.addf %291, %300 : vector<8x32xf32>
    %c2_i32_54 = arith.constant 2 : i32
    %302 = vector.broadcast %c2_i32_54 : i32 to vector<8x1xi32>
    %303 = arith.cmpi eq, %256, %302 : vector<8x1xi32>
    %304 = vector.extract_strided_slice %6 {offsets = [2, 0], sizes = [1, 32], strides = [1, 1]} : vector<16x32xf32> to vector<1x32xf32>
    %cst_55 = arith.constant 0.000000e+00 : f32
    %305 = vector.shape_cast %303 : vector<8x1xi1> to vector<8x1xi1>
    %306 = vector.broadcast %305 : vector<8x1xi1> to vector<8x32xi1>
    %307 = vector.shape_cast %304 : vector<1x32xf32> to vector<1x32xf32>
    %308 = vector.broadcast %307 : vector<1x32xf32> to vector<8x32xf32>
    %309 = vector.broadcast %cst_55 : f32 to vector<8x32xf32>
    %310 = arith.select %306, %308, %309 : vector<8x32xi1>, vector<8x32xf32>
    %311 = arith.addf %301, %310 : vector<8x32xf32>
    %c3_i32_56 = arith.constant 3 : i32
    %312 = vector.broadcast %c3_i32_56 : i32 to vector<8x1xi32>
    %313 = arith.cmpi eq, %256, %312 : vector<8x1xi32>
    %314 = vector.extract_strided_slice %6 {offsets = [3, 0], sizes = [1, 32], strides = [1, 1]} : vector<16x32xf32> to vector<1x32xf32>
    %cst_57 = arith.constant 0.000000e+00 : f32
    %315 = vector.shape_cast %313 : vector<8x1xi1> to vector<8x1xi1>
    %316 = vector.broadcast %315 : vector<8x1xi1> to vector<8x32xi1>
    %317 = vector.shape_cast %314 : vector<1x32xf32> to vector<1x32xf32>
    %318 = vector.broadcast %317 : vector<1x32xf32> to vector<8x32xf32>
    %319 = vector.broadcast %cst_57 : f32 to vector<8x32xf32>
    %320 = arith.select %316, %318, %319 : vector<8x32xi1>, vector<8x32xf32>
    %321 = arith.addf %311, %320 : vector<8x32xf32>
    %c4_i32_58 = arith.constant 4 : i32
    %322 = vector.broadcast %c4_i32_58 : i32 to vector<8x1xi32>
    %323 = arith.cmpi eq, %256, %322 : vector<8x1xi32>
    %324 = vector.extract_strided_slice %6 {offsets = [4, 0], sizes = [1, 32], strides = [1, 1]} : vector<16x32xf32> to vector<1x32xf32>
    %cst_59 = arith.constant 0.000000e+00 : f32
    %325 = vector.shape_cast %323 : vector<8x1xi1> to vector<8x1xi1>
    %326 = vector.broadcast %325 : vector<8x1xi1> to vector<8x32xi1>
    %327 = vector.shape_cast %324 : vector<1x32xf32> to vector<1x32xf32>
    %328 = vector.broadcast %327 : vector<1x32xf32> to vector<8x32xf32>
    %329 = vector.broadcast %cst_59 : f32 to vector<8x32xf32>
    %330 = arith.select %326, %328, %329 : vector<8x32xi1>, vector<8x32xf32>
    %331 = arith.addf %321, %330 : vector<8x32xf32>
    %c5_i32_60 = arith.constant 5 : i32
    %332 = vector.broadcast %c5_i32_60 : i32 to vector<8x1xi32>
    %333 = arith.cmpi eq, %256, %332 : vector<8x1xi32>
    %334 = vector.extract_strided_slice %6 {offsets = [5, 0], sizes = [1, 32], strides = [1, 1]} : vector<16x32xf32> to vector<1x32xf32>
    %cst_61 = arith.constant 0.000000e+00 : f32
    %335 = vector.shape_cast %333 : vector<8x1xi1> to vector<8x1xi1>
    %336 = vector.broadcast %335 : vector<8x1xi1> to vector<8x32xi1>
    %337 = vector.shape_cast %334 : vector<1x32xf32> to vector<1x32xf32>
    %338 = vector.broadcast %337 : vector<1x32xf32> to vector<8x32xf32>
    %339 = vector.broadcast %cst_61 : f32 to vector<8x32xf32>
    %340 = arith.select %336, %338, %339 : vector<8x32xi1>, vector<8x32xf32>
    %341 = arith.addf %331, %340 : vector<8x32xf32>
    %c6_i32_62 = arith.constant 6 : i32
    %342 = vector.broadcast %c6_i32_62 : i32 to vector<8x1xi32>
    %343 = arith.cmpi eq, %256, %342 : vector<8x1xi32>
    %344 = vector.extract_strided_slice %6 {offsets = [6, 0], sizes = [1, 32], strides = [1, 1]} : vector<16x32xf32> to vector<1x32xf32>
    %cst_63 = arith.constant 0.000000e+00 : f32
    %345 = vector.shape_cast %343 : vector<8x1xi1> to vector<8x1xi1>
    %346 = vector.broadcast %345 : vector<8x1xi1> to vector<8x32xi1>
    %347 = vector.shape_cast %344 : vector<1x32xf32> to vector<1x32xf32>
    %348 = vector.broadcast %347 : vector<1x32xf32> to vector<8x32xf32>
    %349 = vector.broadcast %cst_63 : f32 to vector<8x32xf32>
    %350 = arith.select %346, %348, %349 : vector<8x32xi1>, vector<8x32xf32>
    %351 = arith.addf %341, %350 : vector<8x32xf32>
    %c7_i32_64 = arith.constant 7 : i32
    %352 = vector.broadcast %c7_i32_64 : i32 to vector<8x1xi32>
    %353 = arith.cmpi eq, %256, %352 : vector<8x1xi32>
    %354 = vector.extract_strided_slice %6 {offsets = [7, 0], sizes = [1, 32], strides = [1, 1]} : vector<16x32xf32> to vector<1x32xf32>
    %cst_65 = arith.constant 0.000000e+00 : f32
    %355 = vector.shape_cast %353 : vector<8x1xi1> to vector<8x1xi1>
    %356 = vector.broadcast %355 : vector<8x1xi1> to vector<8x32xi1>
    %357 = vector.shape_cast %354 : vector<1x32xf32> to vector<1x32xf32>
    %358 = vector.broadcast %357 : vector<1x32xf32> to vector<8x32xf32>
    %359 = vector.broadcast %cst_65 : f32 to vector<8x32xf32>
    %360 = arith.select %356, %358, %359 : vector<8x32xi1>, vector<8x32xf32>
    %361 = arith.addf %351, %360 : vector<8x32xf32>
    %c8_i32_66 = arith.constant 8 : i32
    %362 = vector.broadcast %c8_i32_66 : i32 to vector<8x1xi32>
    %363 = arith.cmpi eq, %256, %362 : vector<8x1xi32>
    %364 = vector.extract_strided_slice %6 {offsets = [8, 0], sizes = [1, 32], strides = [1, 1]} : vector<16x32xf32> to vector<1x32xf32>
    %cst_67 = arith.constant 0.000000e+00 : f32
    %365 = vector.shape_cast %363 : vector<8x1xi1> to vector<8x1xi1>
    %366 = vector.broadcast %365 : vector<8x1xi1> to vector<8x32xi1>
    %367 = vector.shape_cast %364 : vector<1x32xf32> to vector<1x32xf32>
    %368 = vector.broadcast %367 : vector<1x32xf32> to vector<8x32xf32>
    %369 = vector.broadcast %cst_67 : f32 to vector<8x32xf32>
    %370 = arith.select %366, %368, %369 : vector<8x32xi1>, vector<8x32xf32>
    %371 = arith.addf %361, %370 : vector<8x32xf32>
    %c9_i32_68 = arith.constant 9 : i32
    %372 = vector.broadcast %c9_i32_68 : i32 to vector<8x1xi32>
    %373 = arith.cmpi eq, %256, %372 : vector<8x1xi32>
    %374 = vector.extract_strided_slice %6 {offsets = [9, 0], sizes = [1, 32], strides = [1, 1]} : vector<16x32xf32> to vector<1x32xf32>
    %cst_69 = arith.constant 0.000000e+00 : f32
    %375 = vector.shape_cast %373 : vector<8x1xi1> to vector<8x1xi1>
    %376 = vector.broadcast %375 : vector<8x1xi1> to vector<8x32xi1>
    %377 = vector.shape_cast %374 : vector<1x32xf32> to vector<1x32xf32>
    %378 = vector.broadcast %377 : vector<1x32xf32> to vector<8x32xf32>
    %379 = vector.broadcast %cst_69 : f32 to vector<8x32xf32>
    %380 = arith.select %376, %378, %379 : vector<8x32xi1>, vector<8x32xf32>
    %381 = arith.addf %371, %380 : vector<8x32xf32>
    %c10_i32_70 = arith.constant 10 : i32
    %382 = vector.broadcast %c10_i32_70 : i32 to vector<8x1xi32>
    %383 = arith.cmpi eq, %256, %382 : vector<8x1xi32>
    %384 = vector.extract_strided_slice %6 {offsets = [10, 0], sizes = [1, 32], strides = [1, 1]} : vector<16x32xf32> to vector<1x32xf32>
    %cst_71 = arith.constant 0.000000e+00 : f32
    %385 = vector.shape_cast %383 : vector<8x1xi1> to vector<8x1xi1>
    %386 = vector.broadcast %385 : vector<8x1xi1> to vector<8x32xi1>
    %387 = vector.shape_cast %384 : vector<1x32xf32> to vector<1x32xf32>
    %388 = vector.broadcast %387 : vector<1x32xf32> to vector<8x32xf32>
    %389 = vector.broadcast %cst_71 : f32 to vector<8x32xf32>
    %390 = arith.select %386, %388, %389 : vector<8x32xi1>, vector<8x32xf32>
    %391 = arith.addf %381, %390 : vector<8x32xf32>
    %c11_i32_72 = arith.constant 11 : i32
    %392 = vector.broadcast %c11_i32_72 : i32 to vector<8x1xi32>
    %393 = arith.cmpi eq, %256, %392 : vector<8x1xi32>
    %394 = vector.extract_strided_slice %6 {offsets = [11, 0], sizes = [1, 32], strides = [1, 1]} : vector<16x32xf32> to vector<1x32xf32>
    %cst_73 = arith.constant 0.000000e+00 : f32
    %395 = vector.shape_cast %393 : vector<8x1xi1> to vector<8x1xi1>
    %396 = vector.broadcast %395 : vector<8x1xi1> to vector<8x32xi1>
    %397 = vector.shape_cast %394 : vector<1x32xf32> to vector<1x32xf32>
    %398 = vector.broadcast %397 : vector<1x32xf32> to vector<8x32xf32>
    %399 = vector.broadcast %cst_73 : f32 to vector<8x32xf32>
    %400 = arith.select %396, %398, %399 : vector<8x32xi1>, vector<8x32xf32>
    %401 = arith.addf %391, %400 : vector<8x32xf32>
    %c12_i32_74 = arith.constant 12 : i32
    %402 = vector.broadcast %c12_i32_74 : i32 to vector<8x1xi32>
    %403 = arith.cmpi eq, %256, %402 : vector<8x1xi32>
    %404 = vector.extract_strided_slice %6 {offsets = [12, 0], sizes = [1, 32], strides = [1, 1]} : vector<16x32xf32> to vector<1x32xf32>
    %cst_75 = arith.constant 0.000000e+00 : f32
    %405 = vector.shape_cast %403 : vector<8x1xi1> to vector<8x1xi1>
    %406 = vector.broadcast %405 : vector<8x1xi1> to vector<8x32xi1>
    %407 = vector.shape_cast %404 : vector<1x32xf32> to vector<1x32xf32>
    %408 = vector.broadcast %407 : vector<1x32xf32> to vector<8x32xf32>
    %409 = vector.broadcast %cst_75 : f32 to vector<8x32xf32>
    %410 = arith.select %406, %408, %409 : vector<8x32xi1>, vector<8x32xf32>
    %411 = arith.addf %401, %410 : vector<8x32xf32>
    %c13_i32_76 = arith.constant 13 : i32
    %412 = vector.broadcast %c13_i32_76 : i32 to vector<8x1xi32>
    %413 = arith.cmpi eq, %256, %412 : vector<8x1xi32>
    %414 = vector.extract_strided_slice %6 {offsets = [13, 0], sizes = [1, 32], strides = [1, 1]} : vector<16x32xf32> to vector<1x32xf32>
    %cst_77 = arith.constant 0.000000e+00 : f32
    %415 = vector.shape_cast %413 : vector<8x1xi1> to vector<8x1xi1>
    %416 = vector.broadcast %415 : vector<8x1xi1> to vector<8x32xi1>
    %417 = vector.shape_cast %414 : vector<1x32xf32> to vector<1x32xf32>
    %418 = vector.broadcast %417 : vector<1x32xf32> to vector<8x32xf32>
    %419 = vector.broadcast %cst_77 : f32 to vector<8x32xf32>
    %420 = arith.select %416, %418, %419 : vector<8x32xi1>, vector<8x32xf32>
    %421 = arith.addf %411, %420 : vector<8x32xf32>
    %c14_i32_78 = arith.constant 14 : i32
    %422 = vector.broadcast %c14_i32_78 : i32 to vector<8x1xi32>
    %423 = arith.cmpi eq, %256, %422 : vector<8x1xi32>
    %424 = vector.extract_strided_slice %6 {offsets = [14, 0], sizes = [1, 32], strides = [1, 1]} : vector<16x32xf32> to vector<1x32xf32>
    %cst_79 = arith.constant 0.000000e+00 : f32
    %425 = vector.shape_cast %423 : vector<8x1xi1> to vector<8x1xi1>
    %426 = vector.broadcast %425 : vector<8x1xi1> to vector<8x32xi1>
    %427 = vector.shape_cast %424 : vector<1x32xf32> to vector<1x32xf32>
    %428 = vector.broadcast %427 : vector<1x32xf32> to vector<8x32xf32>
    %429 = vector.broadcast %cst_79 : f32 to vector<8x32xf32>
    %430 = arith.select %426, %428, %429 : vector<8x32xi1>, vector<8x32xf32>
    %431 = arith.addf %421, %430 : vector<8x32xf32>
    %c15_i32_80 = arith.constant 15 : i32
    %432 = vector.broadcast %c15_i32_80 : i32 to vector<8x1xi32>
    %433 = arith.cmpi eq, %256, %432 : vector<8x1xi32>
    %434 = vector.extract_strided_slice %6 {offsets = [15, 0], sizes = [1, 32], strides = [1, 1]} : vector<16x32xf32> to vector<1x32xf32>
    %cst_81 = arith.constant 0.000000e+00 : f32
    %435 = vector.shape_cast %433 : vector<8x1xi1> to vector<8x1xi1>
    %436 = vector.broadcast %435 : vector<8x1xi1> to vector<8x32xi1>
    %437 = vector.shape_cast %434 : vector<1x32xf32> to vector<1x32xf32>
    %438 = vector.broadcast %437 : vector<1x32xf32> to vector<8x32xf32>
    %439 = vector.broadcast %cst_81 : f32 to vector<8x32xf32>
    %440 = arith.select %436, %438, %439 : vector<8x32xi1>, vector<8x32xf32>
    %441 = arith.addf %431, %440 : vector<8x32xf32>
    %442 = arith.addf %242, %441 : vector<8x32xf32>
    %443 = vector.broadcast %15 : vector<1x32xf32> to vector<8x32xf32>
    %444 = arith.addf %442, %443 : vector<8x32xf32>
    %445 = math.tanh %444 : vector<8x32xf32>
    %cst_82 = arith.constant dense<0.000000e+00> : vector<8x48xf32>
    %446 = tpu.matmul %445, %4, %cst_82 {dimension_numbers = #tpu.dot_dimension_numbers<[1], [0], [0], [1], [0, 0, 1, 1], [], []>} : vector<8x32xf32>, vector<32x48xf32>, vector<8x48xf32> -> vector<8x48xf32>
    %447 = vector.extract_strided_slice %446 {offsets = [0, 0], sizes = [8, 16], strides = [1, 1]} : vector<8x48xf32> to vector<8x16xf32>
    %448 = vector.broadcast %16 : vector<1x16xf32> to vector<8x16xf32>
    %449 = arith.addf %447, %448 : vector<8x16xf32>
    %450 = vector.extract_strided_slice %446 {offsets = [0, 16], sizes = [8, 32], strides = [1, 1]} : vector<8x48xf32> to vector<8x32xf32>
    %cst_83 = arith.constant dense<0xFF800000> : vector<8xf32>
    %451 = vector.multi_reduction <maximumf>, %449, %cst_83 [1] : vector<8x16xf32> to vector<8xf32>
    %452 = vector.shape_cast %451 : vector<8xf32> to vector<8x1xf32>
    %453 = vector.broadcast %452 : vector<8x1xf32> to vector<8x16xf32>
    %454 = arith.subf %449, %453 : vector<8x16xf32>
    %455 = math.exp %454 : vector<8x16xf32>
    %cst_84 = arith.constant dense<0.000000e+00> : vector<8xf32>
    %456 = vector.multi_reduction <add>, %455, %cst_84 [1] : vector<8x16xf32> to vector<8xf32>
    %457 = vector.shape_cast %456 : vector<8xf32> to vector<8x1xf32>
    %458 = math.log %457 : vector<8x1xf32>
    %459 = vector.broadcast %452 : vector<8x1xf32> to vector<8x16xf32>
    %460 = arith.cmpf oeq, %449, %459 : vector<8x16xf32>
    %c16_i32_85 = arith.constant 16 : i32
    %461 = vector.broadcast %c16_i32_85 : i32 to vector<8x16xi32>
    %462 = arith.select %460, %24, %461 : vector<8x16xi1>, vector<8x16xi32>
    %cst_86 = arith.constant dense<2147483647> : vector<8xi32>
    %463 = vector.multi_reduction <minsi>, %462, %cst_86 [1] : vector<8x16xi32> to vector<8xi32>
    %464 = vector.shape_cast %463 : vector<8xi32> to vector<8x1xi32>
    %cst_87 = arith.constant 0.000000e+00 : f32
    %465 = vector.broadcast %cst_87 : f32 to vector<8x1xf32>
    %466 = arith.subf %465, %458 : vector<8x1xf32>
    %467 = arith.mulf %454, %455 : vector<8x16xf32>
    %cst_88 = arith.constant dense<0.000000e+00> : vector<8xf32>
    %468 = vector.multi_reduction <add>, %467, %cst_88 [1] : vector<8x16xf32> to vector<8xf32>
    %469 = vector.shape_cast %468 : vector<8xf32> to vector<8x1xf32>
    %470 = arith.divf %469, %457 : vector<8x1xf32>
    %471 = arith.subf %458, %470 : vector<8x1xf32>
    %472 = arith.addf %264, %471 : vector<8x1xf32>
    %c2_i32_89 = arith.constant 2 : i32
    %473 = vector.broadcast %c2_i32_89 : i32 to vector<8x1xi32>
    %474 = arith.select %269, %473, %464 : vector<8x1xi1>, vector<8x1xi32>
    %c0_i32_90 = arith.constant 0 : i32
    %475 = vector.broadcast %c0_i32_90 : i32 to vector<8x1xi32>
    %476 = arith.cmpi eq, %464, %475 : vector<8x1xi32>
    %477 = arith.ori %269, %476 : vector<8x1xi1>
    %478 = arith.extui %477 : vector<8x1xi1> to vector<8x1xi32>
    %479 = arith.sitofp %478 : vector<8x1xi32> to vector<8x1xf32>
    %480 = arith.addf %272, %479 : vector<8x1xf32>
    %c2_i32_91 = arith.constant 2 : i32
    %481 = vector.broadcast %c2_i32_91 : i32 to vector<8x8xi32>
    %482 = arith.cmpi eq, %23, %481 : vector<8x8xi32>
    %483 = vector.shape_cast %474 : vector<8x1xi32> to vector<8x1xi32>
    %484 = vector.broadcast %483 : vector<8x1xi32> to vector<8x8xi32>
    %485 = arith.select %482, %484, %277 : vector<8x8xi1>, vector<8x8xi32>
    %486 = vector.shape_cast %466 : vector<8x1xf32> to vector<8x1xf32>
    %487 = vector.broadcast %486 : vector<8x1xf32> to vector<8x8xf32>
    %488 = arith.select %482, %487, %280 : vector<8x8xi1>, vector<8x8xf32>
    %cst_92 = arith.constant 0.000000e+00 : f32
    %489 = vector.broadcast %cst_92 : f32 to vector<8x32xf32>
    %c0_i32_93 = arith.constant 0 : i32
    %490 = vector.broadcast %c0_i32_93 : i32 to vector<8x1xi32>
    %491 = arith.cmpi eq, %464, %490 : vector<8x1xi32>
    %492 = vector.extract_strided_slice %6 {offsets = [0, 0], sizes = [1, 32], strides = [1, 1]} : vector<16x32xf32> to vector<1x32xf32>
    %cst_94 = arith.constant 0.000000e+00 : f32
    %493 = vector.shape_cast %491 : vector<8x1xi1> to vector<8x1xi1>
    %494 = vector.broadcast %493 : vector<8x1xi1> to vector<8x32xi1>
    %495 = vector.shape_cast %492 : vector<1x32xf32> to vector<1x32xf32>
    %496 = vector.broadcast %495 : vector<1x32xf32> to vector<8x32xf32>
    %497 = vector.broadcast %cst_94 : f32 to vector<8x32xf32>
    %498 = arith.select %494, %496, %497 : vector<8x32xi1>, vector<8x32xf32>
    %499 = arith.addf %489, %498 : vector<8x32xf32>
    %c1_i32_95 = arith.constant 1 : i32
    %500 = vector.broadcast %c1_i32_95 : i32 to vector<8x1xi32>
    %501 = arith.cmpi eq, %464, %500 : vector<8x1xi32>
    %502 = vector.extract_strided_slice %6 {offsets = [1, 0], sizes = [1, 32], strides = [1, 1]} : vector<16x32xf32> to vector<1x32xf32>
    %cst_96 = arith.constant 0.000000e+00 : f32
    %503 = vector.shape_cast %501 : vector<8x1xi1> to vector<8x1xi1>
    %504 = vector.broadcast %503 : vector<8x1xi1> to vector<8x32xi1>
    %505 = vector.shape_cast %502 : vector<1x32xf32> to vector<1x32xf32>
    %506 = vector.broadcast %505 : vector<1x32xf32> to vector<8x32xf32>
    %507 = vector.broadcast %cst_96 : f32 to vector<8x32xf32>
    %508 = arith.select %504, %506, %507 : vector<8x32xi1>, vector<8x32xf32>
    %509 = arith.addf %499, %508 : vector<8x32xf32>
    %c2_i32_97 = arith.constant 2 : i32
    %510 = vector.broadcast %c2_i32_97 : i32 to vector<8x1xi32>
    %511 = arith.cmpi eq, %464, %510 : vector<8x1xi32>
    %512 = vector.extract_strided_slice %6 {offsets = [2, 0], sizes = [1, 32], strides = [1, 1]} : vector<16x32xf32> to vector<1x32xf32>
    %cst_98 = arith.constant 0.000000e+00 : f32
    %513 = vector.shape_cast %511 : vector<8x1xi1> to vector<8x1xi1>
    %514 = vector.broadcast %513 : vector<8x1xi1> to vector<8x32xi1>
    %515 = vector.shape_cast %512 : vector<1x32xf32> to vector<1x32xf32>
    %516 = vector.broadcast %515 : vector<1x32xf32> to vector<8x32xf32>
    %517 = vector.broadcast %cst_98 : f32 to vector<8x32xf32>
    %518 = arith.select %514, %516, %517 : vector<8x32xi1>, vector<8x32xf32>
    %519 = arith.addf %509, %518 : vector<8x32xf32>
    %c3_i32_99 = arith.constant 3 : i32
    %520 = vector.broadcast %c3_i32_99 : i32 to vector<8x1xi32>
    %521 = arith.cmpi eq, %464, %520 : vector<8x1xi32>
    %522 = vector.extract_strided_slice %6 {offsets = [3, 0], sizes = [1, 32], strides = [1, 1]} : vector<16x32xf32> to vector<1x32xf32>
    %cst_100 = arith.constant 0.000000e+00 : f32
    %523 = vector.shape_cast %521 : vector<8x1xi1> to vector<8x1xi1>
    %524 = vector.broadcast %523 : vector<8x1xi1> to vector<8x32xi1>
    %525 = vector.shape_cast %522 : vector<1x32xf32> to vector<1x32xf32>
    %526 = vector.broadcast %525 : vector<1x32xf32> to vector<8x32xf32>
    %527 = vector.broadcast %cst_100 : f32 to vector<8x32xf32>
    %528 = arith.select %524, %526, %527 : vector<8x32xi1>, vector<8x32xf32>
    %529 = arith.addf %519, %528 : vector<8x32xf32>
    %c4_i32_101 = arith.constant 4 : i32
    %530 = vector.broadcast %c4_i32_101 : i32 to vector<8x1xi32>
    %531 = arith.cmpi eq, %464, %530 : vector<8x1xi32>
    %532 = vector.extract_strided_slice %6 {offsets = [4, 0], sizes = [1, 32], strides = [1, 1]} : vector<16x32xf32> to vector<1x32xf32>
    %cst_102 = arith.constant 0.000000e+00 : f32
    %533 = vector.shape_cast %531 : vector<8x1xi1> to vector<8x1xi1>
    %534 = vector.broadcast %533 : vector<8x1xi1> to vector<8x32xi1>
    %535 = vector.shape_cast %532 : vector<1x32xf32> to vector<1x32xf32>
    %536 = vector.broadcast %535 : vector<1x32xf32> to vector<8x32xf32>
    %537 = vector.broadcast %cst_102 : f32 to vector<8x32xf32>
    %538 = arith.select %534, %536, %537 : vector<8x32xi1>, vector<8x32xf32>
    %539 = arith.addf %529, %538 : vector<8x32xf32>
    %c5_i32_103 = arith.constant 5 : i32
    %540 = vector.broadcast %c5_i32_103 : i32 to vector<8x1xi32>
    %541 = arith.cmpi eq, %464, %540 : vector<8x1xi32>
    %542 = vector.extract_strided_slice %6 {offsets = [5, 0], sizes = [1, 32], strides = [1, 1]} : vector<16x32xf32> to vector<1x32xf32>
    %cst_104 = arith.constant 0.000000e+00 : f32
    %543 = vector.shape_cast %541 : vector<8x1xi1> to vector<8x1xi1>
    %544 = vector.broadcast %543 : vector<8x1xi1> to vector<8x32xi1>
    %545 = vector.shape_cast %542 : vector<1x32xf32> to vector<1x32xf32>
    %546 = vector.broadcast %545 : vector<1x32xf32> to vector<8x32xf32>
    %547 = vector.broadcast %cst_104 : f32 to vector<8x32xf32>
    %548 = arith.select %544, %546, %547 : vector<8x32xi1>, vector<8x32xf32>
    %549 = arith.addf %539, %548 : vector<8x32xf32>
    %c6_i32_105 = arith.constant 6 : i32
    %550 = vector.broadcast %c6_i32_105 : i32 to vector<8x1xi32>
    %551 = arith.cmpi eq, %464, %550 : vector<8x1xi32>
    %552 = vector.extract_strided_slice %6 {offsets = [6, 0], sizes = [1, 32], strides = [1, 1]} : vector<16x32xf32> to vector<1x32xf32>
    %cst_106 = arith.constant 0.000000e+00 : f32
    %553 = vector.shape_cast %551 : vector<8x1xi1> to vector<8x1xi1>
    %554 = vector.broadcast %553 : vector<8x1xi1> to vector<8x32xi1>
    %555 = vector.shape_cast %552 : vector<1x32xf32> to vector<1x32xf32>
    %556 = vector.broadcast %555 : vector<1x32xf32> to vector<8x32xf32>
    %557 = vector.broadcast %cst_106 : f32 to vector<8x32xf32>
    %558 = arith.select %554, %556, %557 : vector<8x32xi1>, vector<8x32xf32>
    %559 = arith.addf %549, %558 : vector<8x32xf32>
    %c7_i32_107 = arith.constant 7 : i32
    %560 = vector.broadcast %c7_i32_107 : i32 to vector<8x1xi32>
    %561 = arith.cmpi eq, %464, %560 : vector<8x1xi32>
    %562 = vector.extract_strided_slice %6 {offsets = [7, 0], sizes = [1, 32], strides = [1, 1]} : vector<16x32xf32> to vector<1x32xf32>
    %cst_108 = arith.constant 0.000000e+00 : f32
    %563 = vector.shape_cast %561 : vector<8x1xi1> to vector<8x1xi1>
    %564 = vector.broadcast %563 : vector<8x1xi1> to vector<8x32xi1>
    %565 = vector.shape_cast %562 : vector<1x32xf32> to vector<1x32xf32>
    %566 = vector.broadcast %565 : vector<1x32xf32> to vector<8x32xf32>
    %567 = vector.broadcast %cst_108 : f32 to vector<8x32xf32>
    %568 = arith.select %564, %566, %567 : vector<8x32xi1>, vector<8x32xf32>
    %569 = arith.addf %559, %568 : vector<8x32xf32>
    %c8_i32_109 = arith.constant 8 : i32
    %570 = vector.broadcast %c8_i32_109 : i32 to vector<8x1xi32>
    %571 = arith.cmpi eq, %464, %570 : vector<8x1xi32>
    %572 = vector.extract_strided_slice %6 {offsets = [8, 0], sizes = [1, 32], strides = [1, 1]} : vector<16x32xf32> to vector<1x32xf32>
    %cst_110 = arith.constant 0.000000e+00 : f32
    %573 = vector.shape_cast %571 : vector<8x1xi1> to vector<8x1xi1>
    %574 = vector.broadcast %573 : vector<8x1xi1> to vector<8x32xi1>
    %575 = vector.shape_cast %572 : vector<1x32xf32> to vector<1x32xf32>
    %576 = vector.broadcast %575 : vector<1x32xf32> to vector<8x32xf32>
    %577 = vector.broadcast %cst_110 : f32 to vector<8x32xf32>
    %578 = arith.select %574, %576, %577 : vector<8x32xi1>, vector<8x32xf32>
    %579 = arith.addf %569, %578 : vector<8x32xf32>
    %c9_i32_111 = arith.constant 9 : i32
    %580 = vector.broadcast %c9_i32_111 : i32 to vector<8x1xi32>
    %581 = arith.cmpi eq, %464, %580 : vector<8x1xi32>
    %582 = vector.extract_strided_slice %6 {offsets = [9, 0], sizes = [1, 32], strides = [1, 1]} : vector<16x32xf32> to vector<1x32xf32>
    %cst_112 = arith.constant 0.000000e+00 : f32
    %583 = vector.shape_cast %581 : vector<8x1xi1> to vector<8x1xi1>
    %584 = vector.broadcast %583 : vector<8x1xi1> to vector<8x32xi1>
    %585 = vector.shape_cast %582 : vector<1x32xf32> to vector<1x32xf32>
    %586 = vector.broadcast %585 : vector<1x32xf32> to vector<8x32xf32>
    %587 = vector.broadcast %cst_112 : f32 to vector<8x32xf32>
    %588 = arith.select %584, %586, %587 : vector<8x32xi1>, vector<8x32xf32>
    %589 = arith.addf %579, %588 : vector<8x32xf32>
    %c10_i32_113 = arith.constant 10 : i32
    %590 = vector.broadcast %c10_i32_113 : i32 to vector<8x1xi32>
    %591 = arith.cmpi eq, %464, %590 : vector<8x1xi32>
    %592 = vector.extract_strided_slice %6 {offsets = [10, 0], sizes = [1, 32], strides = [1, 1]} : vector<16x32xf32> to vector<1x32xf32>
    %cst_114 = arith.constant 0.000000e+00 : f32
    %593 = vector.shape_cast %591 : vector<8x1xi1> to vector<8x1xi1>
    %594 = vector.broadcast %593 : vector<8x1xi1> to vector<8x32xi1>
    %595 = vector.shape_cast %592 : vector<1x32xf32> to vector<1x32xf32>
    %596 = vector.broadcast %595 : vector<1x32xf32> to vector<8x32xf32>
    %597 = vector.broadcast %cst_114 : f32 to vector<8x32xf32>
    %598 = arith.select %594, %596, %597 : vector<8x32xi1>, vector<8x32xf32>
    %599 = arith.addf %589, %598 : vector<8x32xf32>
    %c11_i32_115 = arith.constant 11 : i32
    %600 = vector.broadcast %c11_i32_115 : i32 to vector<8x1xi32>
    %601 = arith.cmpi eq, %464, %600 : vector<8x1xi32>
    %602 = vector.extract_strided_slice %6 {offsets = [11, 0], sizes = [1, 32], strides = [1, 1]} : vector<16x32xf32> to vector<1x32xf32>
    %cst_116 = arith.constant 0.000000e+00 : f32
    %603 = vector.shape_cast %601 : vector<8x1xi1> to vector<8x1xi1>
    %604 = vector.broadcast %603 : vector<8x1xi1> to vector<8x32xi1>
    %605 = vector.shape_cast %602 : vector<1x32xf32> to vector<1x32xf32>
    %606 = vector.broadcast %605 : vector<1x32xf32> to vector<8x32xf32>
    %607 = vector.broadcast %cst_116 : f32 to vector<8x32xf32>
    %608 = arith.select %604, %606, %607 : vector<8x32xi1>, vector<8x32xf32>
    %609 = arith.addf %599, %608 : vector<8x32xf32>
    %c12_i32_117 = arith.constant 12 : i32
    %610 = vector.broadcast %c12_i32_117 : i32 to vector<8x1xi32>
    %611 = arith.cmpi eq, %464, %610 : vector<8x1xi32>
    %612 = vector.extract_strided_slice %6 {offsets = [12, 0], sizes = [1, 32], strides = [1, 1]} : vector<16x32xf32> to vector<1x32xf32>
    %cst_118 = arith.constant 0.000000e+00 : f32
    %613 = vector.shape_cast %611 : vector<8x1xi1> to vector<8x1xi1>
    %614 = vector.broadcast %613 : vector<8x1xi1> to vector<8x32xi1>
    %615 = vector.shape_cast %612 : vector<1x32xf32> to vector<1x32xf32>
    %616 = vector.broadcast %615 : vector<1x32xf32> to vector<8x32xf32>
    %617 = vector.broadcast %cst_118 : f32 to vector<8x32xf32>
    %618 = arith.select %614, %616, %617 : vector<8x32xi1>, vector<8x32xf32>
    %619 = arith.addf %609, %618 : vector<8x32xf32>
    %c13_i32_119 = arith.constant 13 : i32
    %620 = vector.broadcast %c13_i32_119 : i32 to vector<8x1xi32>
    %621 = arith.cmpi eq, %464, %620 : vector<8x1xi32>
    %622 = vector.extract_strided_slice %6 {offsets = [13, 0], sizes = [1, 32], strides = [1, 1]} : vector<16x32xf32> to vector<1x32xf32>
    %cst_120 = arith.constant 0.000000e+00 : f32
    %623 = vector.shape_cast %621 : vector<8x1xi1> to vector<8x1xi1>
    %624 = vector.broadcast %623 : vector<8x1xi1> to vector<8x32xi1>
    %625 = vector.shape_cast %622 : vector<1x32xf32> to vector<1x32xf32>
    %626 = vector.broadcast %625 : vector<1x32xf32> to vector<8x32xf32>
    %627 = vector.broadcast %cst_120 : f32 to vector<8x32xf32>
    %628 = arith.select %624, %626, %627 : vector<8x32xi1>, vector<8x32xf32>
    %629 = arith.addf %619, %628 : vector<8x32xf32>
    %c14_i32_121 = arith.constant 14 : i32
    %630 = vector.broadcast %c14_i32_121 : i32 to vector<8x1xi32>
    %631 = arith.cmpi eq, %464, %630 : vector<8x1xi32>
    %632 = vector.extract_strided_slice %6 {offsets = [14, 0], sizes = [1, 32], strides = [1, 1]} : vector<16x32xf32> to vector<1x32xf32>
    %cst_122 = arith.constant 0.000000e+00 : f32
    %633 = vector.shape_cast %631 : vector<8x1xi1> to vector<8x1xi1>
    %634 = vector.broadcast %633 : vector<8x1xi1> to vector<8x32xi1>
    %635 = vector.shape_cast %632 : vector<1x32xf32> to vector<1x32xf32>
    %636 = vector.broadcast %635 : vector<1x32xf32> to vector<8x32xf32>
    %637 = vector.broadcast %cst_122 : f32 to vector<8x32xf32>
    %638 = arith.select %634, %636, %637 : vector<8x32xi1>, vector<8x32xf32>
    %639 = arith.addf %629, %638 : vector<8x32xf32>
    %c15_i32_123 = arith.constant 15 : i32
    %640 = vector.broadcast %c15_i32_123 : i32 to vector<8x1xi32>
    %641 = arith.cmpi eq, %464, %640 : vector<8x1xi32>
    %642 = vector.extract_strided_slice %6 {offsets = [15, 0], sizes = [1, 32], strides = [1, 1]} : vector<16x32xf32> to vector<1x32xf32>
    %cst_124 = arith.constant 0.000000e+00 : f32
    %643 = vector.shape_cast %641 : vector<8x1xi1> to vector<8x1xi1>
    %644 = vector.broadcast %643 : vector<8x1xi1> to vector<8x32xi1>
    %645 = vector.shape_cast %642 : vector<1x32xf32> to vector<1x32xf32>
    %646 = vector.broadcast %645 : vector<1x32xf32> to vector<8x32xf32>
    %647 = vector.broadcast %cst_124 : f32 to vector<8x32xf32>
    %648 = arith.select %644, %646, %647 : vector<8x32xi1>, vector<8x32xf32>
    %649 = arith.addf %639, %648 : vector<8x32xf32>
    %650 = arith.addf %450, %649 : vector<8x32xf32>
    %651 = vector.broadcast %15 : vector<1x32xf32> to vector<8x32xf32>
    %652 = arith.addf %650, %651 : vector<8x32xf32>
    %653 = math.tanh %652 : vector<8x32xf32>
    %cst_125 = arith.constant dense<0.000000e+00> : vector<8x48xf32>
    %654 = tpu.matmul %653, %4, %cst_125 {dimension_numbers = #tpu.dot_dimension_numbers<[1], [0], [0], [1], [0, 0, 1, 1], [], []>} : vector<8x32xf32>, vector<32x48xf32>, vector<8x48xf32> -> vector<8x48xf32>
    %655 = vector.extract_strided_slice %654 {offsets = [0, 0], sizes = [8, 16], strides = [1, 1]} : vector<8x48xf32> to vector<8x16xf32>
    %656 = vector.broadcast %16 : vector<1x16xf32> to vector<8x16xf32>
    %657 = arith.addf %655, %656 : vector<8x16xf32>
    %658 = vector.extract_strided_slice %654 {offsets = [0, 16], sizes = [8, 32], strides = [1, 1]} : vector<8x48xf32> to vector<8x32xf32>
    %cst_126 = arith.constant dense<0xFF800000> : vector<8xf32>
    %659 = vector.multi_reduction <maximumf>, %657, %cst_126 [1] : vector<8x16xf32> to vector<8xf32>
    %660 = vector.shape_cast %659 : vector<8xf32> to vector<8x1xf32>
    %661 = vector.broadcast %660 : vector<8x1xf32> to vector<8x16xf32>
    %662 = arith.subf %657, %661 : vector<8x16xf32>
    %663 = math.exp %662 : vector<8x16xf32>
    %cst_127 = arith.constant dense<0.000000e+00> : vector<8xf32>
    %664 = vector.multi_reduction <add>, %663, %cst_127 [1] : vector<8x16xf32> to vector<8xf32>
    %665 = vector.shape_cast %664 : vector<8xf32> to vector<8x1xf32>
    %666 = math.log %665 : vector<8x1xf32>
    %667 = vector.broadcast %660 : vector<8x1xf32> to vector<8x16xf32>
    %668 = arith.cmpf oeq, %657, %667 : vector<8x16xf32>
    %c16_i32_128 = arith.constant 16 : i32
    %669 = vector.broadcast %c16_i32_128 : i32 to vector<8x16xi32>
    %670 = arith.select %668, %24, %669 : vector<8x16xi1>, vector<8x16xi32>
    %cst_129 = arith.constant dense<2147483647> : vector<8xi32>
    %671 = vector.multi_reduction <minsi>, %670, %cst_129 [1] : vector<8x16xi32> to vector<8xi32>
    %672 = vector.shape_cast %671 : vector<8xi32> to vector<8x1xi32>
    %cst_130 = arith.constant 0.000000e+00 : f32
    %673 = vector.broadcast %cst_130 : f32 to vector<8x1xf32>
    %674 = arith.subf %673, %666 : vector<8x1xf32>
    %675 = arith.mulf %662, %663 : vector<8x16xf32>
    %cst_131 = arith.constant dense<0.000000e+00> : vector<8xf32>
    %676 = vector.multi_reduction <add>, %675, %cst_131 [1] : vector<8x16xf32> to vector<8xf32>
    %677 = vector.shape_cast %676 : vector<8xf32> to vector<8x1xf32>
    %678 = arith.divf %677, %665 : vector<8x1xf32>
    %679 = arith.subf %666, %678 : vector<8x1xf32>
    %680 = arith.addf %472, %679 : vector<8x1xf32>
    %c2_i32_132 = arith.constant 2 : i32
    %681 = vector.broadcast %c2_i32_132 : i32 to vector<8x1xi32>
    %682 = arith.select %477, %681, %672 : vector<8x1xi1>, vector<8x1xi32>
    %c0_i32_133 = arith.constant 0 : i32
    %683 = vector.broadcast %c0_i32_133 : i32 to vector<8x1xi32>
    %684 = arith.cmpi eq, %672, %683 : vector<8x1xi32>
    %685 = arith.ori %477, %684 : vector<8x1xi1>
    %686 = arith.extui %685 : vector<8x1xi1> to vector<8x1xi32>
    %687 = arith.sitofp %686 : vector<8x1xi32> to vector<8x1xf32>
    %688 = arith.addf %480, %687 : vector<8x1xf32>
    %c3_i32_134 = arith.constant 3 : i32
    %689 = vector.broadcast %c3_i32_134 : i32 to vector<8x8xi32>
    %690 = arith.cmpi eq, %23, %689 : vector<8x8xi32>
    %691 = vector.shape_cast %682 : vector<8x1xi32> to vector<8x1xi32>
    %692 = vector.broadcast %691 : vector<8x1xi32> to vector<8x8xi32>
    %693 = arith.select %690, %692, %485 : vector<8x8xi1>, vector<8x8xi32>
    %694 = vector.shape_cast %674 : vector<8x1xf32> to vector<8x1xf32>
    %695 = vector.broadcast %694 : vector<8x1xf32> to vector<8x8xf32>
    %696 = arith.select %690, %695, %488 : vector<8x8xi1>, vector<8x8xf32>
    %cst_135 = arith.constant 0.000000e+00 : f32
    %697 = vector.broadcast %cst_135 : f32 to vector<8x32xf32>
    %c0_i32_136 = arith.constant 0 : i32
    %698 = vector.broadcast %c0_i32_136 : i32 to vector<8x1xi32>
    %699 = arith.cmpi eq, %672, %698 : vector<8x1xi32>
    %700 = vector.extract_strided_slice %6 {offsets = [0, 0], sizes = [1, 32], strides = [1, 1]} : vector<16x32xf32> to vector<1x32xf32>
    %cst_137 = arith.constant 0.000000e+00 : f32
    %701 = vector.shape_cast %699 : vector<8x1xi1> to vector<8x1xi1>
    %702 = vector.broadcast %701 : vector<8x1xi1> to vector<8x32xi1>
    %703 = vector.shape_cast %700 : vector<1x32xf32> to vector<1x32xf32>
    %704 = vector.broadcast %703 : vector<1x32xf32> to vector<8x32xf32>
    %705 = vector.broadcast %cst_137 : f32 to vector<8x32xf32>
    %706 = arith.select %702, %704, %705 : vector<8x32xi1>, vector<8x32xf32>
    %707 = arith.addf %697, %706 : vector<8x32xf32>
    %c1_i32_138 = arith.constant 1 : i32
    %708 = vector.broadcast %c1_i32_138 : i32 to vector<8x1xi32>
    %709 = arith.cmpi eq, %672, %708 : vector<8x1xi32>
    %710 = vector.extract_strided_slice %6 {offsets = [1, 0], sizes = [1, 32], strides = [1, 1]} : vector<16x32xf32> to vector<1x32xf32>
    %cst_139 = arith.constant 0.000000e+00 : f32
    %711 = vector.shape_cast %709 : vector<8x1xi1> to vector<8x1xi1>
    %712 = vector.broadcast %711 : vector<8x1xi1> to vector<8x32xi1>
    %713 = vector.shape_cast %710 : vector<1x32xf32> to vector<1x32xf32>
    %714 = vector.broadcast %713 : vector<1x32xf32> to vector<8x32xf32>
    %715 = vector.broadcast %cst_139 : f32 to vector<8x32xf32>
    %716 = arith.select %712, %714, %715 : vector<8x32xi1>, vector<8x32xf32>
    %717 = arith.addf %707, %716 : vector<8x32xf32>
    %c2_i32_140 = arith.constant 2 : i32
    %718 = vector.broadcast %c2_i32_140 : i32 to vector<8x1xi32>
    %719 = arith.cmpi eq, %672, %718 : vector<8x1xi32>
    %720 = vector.extract_strided_slice %6 {offsets = [2, 0], sizes = [1, 32], strides = [1, 1]} : vector<16x32xf32> to vector<1x32xf32>
    %cst_141 = arith.constant 0.000000e+00 : f32
    %721 = vector.shape_cast %719 : vector<8x1xi1> to vector<8x1xi1>
    %722 = vector.broadcast %721 : vector<8x1xi1> to vector<8x32xi1>
    %723 = vector.shape_cast %720 : vector<1x32xf32> to vector<1x32xf32>
    %724 = vector.broadcast %723 : vector<1x32xf32> to vector<8x32xf32>
    %725 = vector.broadcast %cst_141 : f32 to vector<8x32xf32>
    %726 = arith.select %722, %724, %725 : vector<8x32xi1>, vector<8x32xf32>
    %727 = arith.addf %717, %726 : vector<8x32xf32>
    %c3_i32_142 = arith.constant 3 : i32
    %728 = vector.broadcast %c3_i32_142 : i32 to vector<8x1xi32>
    %729 = arith.cmpi eq, %672, %728 : vector<8x1xi32>
    %730 = vector.extract_strided_slice %6 {offsets = [3, 0], sizes = [1, 32], strides = [1, 1]} : vector<16x32xf32> to vector<1x32xf32>
    %cst_143 = arith.constant 0.000000e+00 : f32
    %731 = vector.shape_cast %729 : vector<8x1xi1> to vector<8x1xi1>
    %732 = vector.broadcast %731 : vector<8x1xi1> to vector<8x32xi1>
    %733 = vector.shape_cast %730 : vector<1x32xf32> to vector<1x32xf32>
    %734 = vector.broadcast %733 : vector<1x32xf32> to vector<8x32xf32>
    %735 = vector.broadcast %cst_143 : f32 to vector<8x32xf32>
    %736 = arith.select %732, %734, %735 : vector<8x32xi1>, vector<8x32xf32>
    %737 = arith.addf %727, %736 : vector<8x32xf32>
    %c4_i32_144 = arith.constant 4 : i32
    %738 = vector.broadcast %c4_i32_144 : i32 to vector<8x1xi32>
    %739 = arith.cmpi eq, %672, %738 : vector<8x1xi32>
    %740 = vector.extract_strided_slice %6 {offsets = [4, 0], sizes = [1, 32], strides = [1, 1]} : vector<16x32xf32> to vector<1x32xf32>
    %cst_145 = arith.constant 0.000000e+00 : f32
    %741 = vector.shape_cast %739 : vector<8x1xi1> to vector<8x1xi1>
    %742 = vector.broadcast %741 : vector<8x1xi1> to vector<8x32xi1>
    %743 = vector.shape_cast %740 : vector<1x32xf32> to vector<1x32xf32>
    %744 = vector.broadcast %743 : vector<1x32xf32> to vector<8x32xf32>
    %745 = vector.broadcast %cst_145 : f32 to vector<8x32xf32>
    %746 = arith.select %742, %744, %745 : vector<8x32xi1>, vector<8x32xf32>
    %747 = arith.addf %737, %746 : vector<8x32xf32>
    %c5_i32_146 = arith.constant 5 : i32
    %748 = vector.broadcast %c5_i32_146 : i32 to vector<8x1xi32>
    %749 = arith.cmpi eq, %672, %748 : vector<8x1xi32>
    %750 = vector.extract_strided_slice %6 {offsets = [5, 0], sizes = [1, 32], strides = [1, 1]} : vector<16x32xf32> to vector<1x32xf32>
    %cst_147 = arith.constant 0.000000e+00 : f32
    %751 = vector.shape_cast %749 : vector<8x1xi1> to vector<8x1xi1>
    %752 = vector.broadcast %751 : vector<8x1xi1> to vector<8x32xi1>
    %753 = vector.shape_cast %750 : vector<1x32xf32> to vector<1x32xf32>
    %754 = vector.broadcast %753 : vector<1x32xf32> to vector<8x32xf32>
    %755 = vector.broadcast %cst_147 : f32 to vector<8x32xf32>
    %756 = arith.select %752, %754, %755 : vector<8x32xi1>, vector<8x32xf32>
    %757 = arith.addf %747, %756 : vector<8x32xf32>
    %c6_i32_148 = arith.constant 6 : i32
    %758 = vector.broadcast %c6_i32_148 : i32 to vector<8x1xi32>
    %759 = arith.cmpi eq, %672, %758 : vector<8x1xi32>
    %760 = vector.extract_strided_slice %6 {offsets = [6, 0], sizes = [1, 32], strides = [1, 1]} : vector<16x32xf32> to vector<1x32xf32>
    %cst_149 = arith.constant 0.000000e+00 : f32
    %761 = vector.shape_cast %759 : vector<8x1xi1> to vector<8x1xi1>
    %762 = vector.broadcast %761 : vector<8x1xi1> to vector<8x32xi1>
    %763 = vector.shape_cast %760 : vector<1x32xf32> to vector<1x32xf32>
    %764 = vector.broadcast %763 : vector<1x32xf32> to vector<8x32xf32>
    %765 = vector.broadcast %cst_149 : f32 to vector<8x32xf32>
    %766 = arith.select %762, %764, %765 : vector<8x32xi1>, vector<8x32xf32>
    %767 = arith.addf %757, %766 : vector<8x32xf32>
    %c7_i32_150 = arith.constant 7 : i32
    %768 = vector.broadcast %c7_i32_150 : i32 to vector<8x1xi32>
    %769 = arith.cmpi eq, %672, %768 : vector<8x1xi32>
    %770 = vector.extract_strided_slice %6 {offsets = [7, 0], sizes = [1, 32], strides = [1, 1]} : vector<16x32xf32> to vector<1x32xf32>
    %cst_151 = arith.constant 0.000000e+00 : f32
    %771 = vector.shape_cast %769 : vector<8x1xi1> to vector<8x1xi1>
    %772 = vector.broadcast %771 : vector<8x1xi1> to vector<8x32xi1>
    %773 = vector.shape_cast %770 : vector<1x32xf32> to vector<1x32xf32>
    %774 = vector.broadcast %773 : vector<1x32xf32> to vector<8x32xf32>
    %775 = vector.broadcast %cst_151 : f32 to vector<8x32xf32>
    %776 = arith.select %772, %774, %775 : vector<8x32xi1>, vector<8x32xf32>
    %777 = arith.addf %767, %776 : vector<8x32xf32>
    %c8_i32_152 = arith.constant 8 : i32
    %778 = vector.broadcast %c8_i32_152 : i32 to vector<8x1xi32>
    %779 = arith.cmpi eq, %672, %778 : vector<8x1xi32>
    %780 = vector.extract_strided_slice %6 {offsets = [8, 0], sizes = [1, 32], strides = [1, 1]} : vector<16x32xf32> to vector<1x32xf32>
    %cst_153 = arith.constant 0.000000e+00 : f32
    %781 = vector.shape_cast %779 : vector<8x1xi1> to vector<8x1xi1>
    %782 = vector.broadcast %781 : vector<8x1xi1> to vector<8x32xi1>
    %783 = vector.shape_cast %780 : vector<1x32xf32> to vector<1x32xf32>
    %784 = vector.broadcast %783 : vector<1x32xf32> to vector<8x32xf32>
    %785 = vector.broadcast %cst_153 : f32 to vector<8x32xf32>
    %786 = arith.select %782, %784, %785 : vector<8x32xi1>, vector<8x32xf32>
    %787 = arith.addf %777, %786 : vector<8x32xf32>
    %c9_i32_154 = arith.constant 9 : i32
    %788 = vector.broadcast %c9_i32_154 : i32 to vector<8x1xi32>
    %789 = arith.cmpi eq, %672, %788 : vector<8x1xi32>
    %790 = vector.extract_strided_slice %6 {offsets = [9, 0], sizes = [1, 32], strides = [1, 1]} : vector<16x32xf32> to vector<1x32xf32>
    %cst_155 = arith.constant 0.000000e+00 : f32
    %791 = vector.shape_cast %789 : vector<8x1xi1> to vector<8x1xi1>
    %792 = vector.broadcast %791 : vector<8x1xi1> to vector<8x32xi1>
    %793 = vector.shape_cast %790 : vector<1x32xf32> to vector<1x32xf32>
    %794 = vector.broadcast %793 : vector<1x32xf32> to vector<8x32xf32>
    %795 = vector.broadcast %cst_155 : f32 to vector<8x32xf32>
    %796 = arith.select %792, %794, %795 : vector<8x32xi1>, vector<8x32xf32>
    %797 = arith.addf %787, %796 : vector<8x32xf32>
    %c10_i32_156 = arith.constant 10 : i32
    %798 = vector.broadcast %c10_i32_156 : i32 to vector<8x1xi32>
    %799 = arith.cmpi eq, %672, %798 : vector<8x1xi32>
    %800 = vector.extract_strided_slice %6 {offsets = [10, 0], sizes = [1, 32], strides = [1, 1]} : vector<16x32xf32> to vector<1x32xf32>
    %cst_157 = arith.constant 0.000000e+00 : f32
    %801 = vector.shape_cast %799 : vector<8x1xi1> to vector<8x1xi1>
    %802 = vector.broadcast %801 : vector<8x1xi1> to vector<8x32xi1>
    %803 = vector.shape_cast %800 : vector<1x32xf32> to vector<1x32xf32>
    %804 = vector.broadcast %803 : vector<1x32xf32> to vector<8x32xf32>
    %805 = vector.broadcast %cst_157 : f32 to vector<8x32xf32>
    %806 = arith.select %802, %804, %805 : vector<8x32xi1>, vector<8x32xf32>
    %807 = arith.addf %797, %806 : vector<8x32xf32>
    %c11_i32_158 = arith.constant 11 : i32
    %808 = vector.broadcast %c11_i32_158 : i32 to vector<8x1xi32>
    %809 = arith.cmpi eq, %672, %808 : vector<8x1xi32>
    %810 = vector.extract_strided_slice %6 {offsets = [11, 0], sizes = [1, 32], strides = [1, 1]} : vector<16x32xf32> to vector<1x32xf32>
    %cst_159 = arith.constant 0.000000e+00 : f32
    %811 = vector.shape_cast %809 : vector<8x1xi1> to vector<8x1xi1>
    %812 = vector.broadcast %811 : vector<8x1xi1> to vector<8x32xi1>
    %813 = vector.shape_cast %810 : vector<1x32xf32> to vector<1x32xf32>
    %814 = vector.broadcast %813 : vector<1x32xf32> to vector<8x32xf32>
    %815 = vector.broadcast %cst_159 : f32 to vector<8x32xf32>
    %816 = arith.select %812, %814, %815 : vector<8x32xi1>, vector<8x32xf32>
    %817 = arith.addf %807, %816 : vector<8x32xf32>
    %c12_i32_160 = arith.constant 12 : i32
    %818 = vector.broadcast %c12_i32_160 : i32 to vector<8x1xi32>
    %819 = arith.cmpi eq, %672, %818 : vector<8x1xi32>
    %820 = vector.extract_strided_slice %6 {offsets = [12, 0], sizes = [1, 32], strides = [1, 1]} : vector<16x32xf32> to vector<1x32xf32>
    %cst_161 = arith.constant 0.000000e+00 : f32
    %821 = vector.shape_cast %819 : vector<8x1xi1> to vector<8x1xi1>
    %822 = vector.broadcast %821 : vector<8x1xi1> to vector<8x32xi1>
    %823 = vector.shape_cast %820 : vector<1x32xf32> to vector<1x32xf32>
    %824 = vector.broadcast %823 : vector<1x32xf32> to vector<8x32xf32>
    %825 = vector.broadcast %cst_161 : f32 to vector<8x32xf32>
    %826 = arith.select %822, %824, %825 : vector<8x32xi1>, vector<8x32xf32>
    %827 = arith.addf %817, %826 : vector<8x32xf32>
    %c13_i32_162 = arith.constant 13 : i32
    %828 = vector.broadcast %c13_i32_162 : i32 to vector<8x1xi32>
    %829 = arith.cmpi eq, %672, %828 : vector<8x1xi32>
    %830 = vector.extract_strided_slice %6 {offsets = [13, 0], sizes = [1, 32], strides = [1, 1]} : vector<16x32xf32> to vector<1x32xf32>
    %cst_163 = arith.constant 0.000000e+00 : f32
    %831 = vector.shape_cast %829 : vector<8x1xi1> to vector<8x1xi1>
    %832 = vector.broadcast %831 : vector<8x1xi1> to vector<8x32xi1>
    %833 = vector.shape_cast %830 : vector<1x32xf32> to vector<1x32xf32>
    %834 = vector.broadcast %833 : vector<1x32xf32> to vector<8x32xf32>
    %835 = vector.broadcast %cst_163 : f32 to vector<8x32xf32>
    %836 = arith.select %832, %834, %835 : vector<8x32xi1>, vector<8x32xf32>
    %837 = arith.addf %827, %836 : vector<8x32xf32>
    %c14_i32_164 = arith.constant 14 : i32
    %838 = vector.broadcast %c14_i32_164 : i32 to vector<8x1xi32>
    %839 = arith.cmpi eq, %672, %838 : vector<8x1xi32>
    %840 = vector.extract_strided_slice %6 {offsets = [14, 0], sizes = [1, 32], strides = [1, 1]} : vector<16x32xf32> to vector<1x32xf32>
    %cst_165 = arith.constant 0.000000e+00 : f32
    %841 = vector.shape_cast %839 : vector<8x1xi1> to vector<8x1xi1>
    %842 = vector.broadcast %841 : vector<8x1xi1> to vector<8x32xi1>
    %843 = vector.shape_cast %840 : vector<1x32xf32> to vector<1x32xf32>
    %844 = vector.broadcast %843 : vector<1x32xf32> to vector<8x32xf32>
    %845 = vector.broadcast %cst_165 : f32 to vector<8x32xf32>
    %846 = arith.select %842, %844, %845 : vector<8x32xi1>, vector<8x32xf32>
    %847 = arith.addf %837, %846 : vector<8x32xf32>
    %c15_i32_166 = arith.constant 15 : i32
    %848 = vector.broadcast %c15_i32_166 : i32 to vector<8x1xi32>
    %849 = arith.cmpi eq, %672, %848 : vector<8x1xi32>
    %850 = vector.extract_strided_slice %6 {offsets = [15, 0], sizes = [1, 32], strides = [1, 1]} : vector<16x32xf32> to vector<1x32xf32>
    %cst_167 = arith.constant 0.000000e+00 : f32
    %851 = vector.shape_cast %849 : vector<8x1xi1> to vector<8x1xi1>
    %852 = vector.broadcast %851 : vector<8x1xi1> to vector<8x32xi1>
    %853 = vector.shape_cast %850 : vector<1x32xf32> to vector<1x32xf32>
    %854 = vector.broadcast %853 : vector<1x32xf32> to vector<8x32xf32>
    %855 = vector.broadcast %cst_167 : f32 to vector<8x32xf32>
    %856 = arith.select %852, %854, %855 : vector<8x32xi1>, vector<8x32xf32>
    %857 = arith.addf %847, %856 : vector<8x32xf32>
    %858 = arith.addf %658, %857 : vector<8x32xf32>
    %859 = vector.broadcast %15 : vector<1x32xf32> to vector<8x32xf32>
    %860 = arith.addf %858, %859 : vector<8x32xf32>
    %861 = math.tanh %860 : vector<8x32xf32>
    %cst_168 = arith.constant dense<0.000000e+00> : vector<8x48xf32>
    %862 = tpu.matmul %861, %4, %cst_168 {dimension_numbers = #tpu.dot_dimension_numbers<[1], [0], [0], [1], [0, 0, 1, 1], [], []>} : vector<8x32xf32>, vector<32x48xf32>, vector<8x48xf32> -> vector<8x48xf32>
    %863 = vector.extract_strided_slice %862 {offsets = [0, 0], sizes = [8, 16], strides = [1, 1]} : vector<8x48xf32> to vector<8x16xf32>
    %864 = vector.broadcast %16 : vector<1x16xf32> to vector<8x16xf32>
    %865 = arith.addf %863, %864 : vector<8x16xf32>
    %866 = vector.extract_strided_slice %862 {offsets = [0, 16], sizes = [8, 32], strides = [1, 1]} : vector<8x48xf32> to vector<8x32xf32>
    %cst_169 = arith.constant dense<0xFF800000> : vector<8xf32>
    %867 = vector.multi_reduction <maximumf>, %865, %cst_169 [1] : vector<8x16xf32> to vector<8xf32>
    %868 = vector.shape_cast %867 : vector<8xf32> to vector<8x1xf32>
    %869 = vector.broadcast %868 : vector<8x1xf32> to vector<8x16xf32>
    %870 = arith.subf %865, %869 : vector<8x16xf32>
    %871 = math.exp %870 : vector<8x16xf32>
    %cst_170 = arith.constant dense<0.000000e+00> : vector<8xf32>
    %872 = vector.multi_reduction <add>, %871, %cst_170 [1] : vector<8x16xf32> to vector<8xf32>
    %873 = vector.shape_cast %872 : vector<8xf32> to vector<8x1xf32>
    %874 = math.log %873 : vector<8x1xf32>
    %875 = vector.broadcast %868 : vector<8x1xf32> to vector<8x16xf32>
    %876 = arith.cmpf oeq, %865, %875 : vector<8x16xf32>
    %c16_i32_171 = arith.constant 16 : i32
    %877 = vector.broadcast %c16_i32_171 : i32 to vector<8x16xi32>
    %878 = arith.select %876, %24, %877 : vector<8x16xi1>, vector<8x16xi32>
    %cst_172 = arith.constant dense<2147483647> : vector<8xi32>
    %879 = vector.multi_reduction <minsi>, %878, %cst_172 [1] : vector<8x16xi32> to vector<8xi32>
    %880 = vector.shape_cast %879 : vector<8xi32> to vector<8x1xi32>
    %cst_173 = arith.constant 0.000000e+00 : f32
    %881 = vector.broadcast %cst_173 : f32 to vector<8x1xf32>
    %882 = arith.subf %881, %874 : vector<8x1xf32>
    %883 = arith.mulf %870, %871 : vector<8x16xf32>
    %cst_174 = arith.constant dense<0.000000e+00> : vector<8xf32>
    %884 = vector.multi_reduction <add>, %883, %cst_174 [1] : vector<8x16xf32> to vector<8xf32>
    %885 = vector.shape_cast %884 : vector<8xf32> to vector<8x1xf32>
    %886 = arith.divf %885, %873 : vector<8x1xf32>
    %887 = arith.subf %874, %886 : vector<8x1xf32>
    %888 = arith.addf %680, %887 : vector<8x1xf32>
    %c2_i32_175 = arith.constant 2 : i32
    %889 = vector.broadcast %c2_i32_175 : i32 to vector<8x1xi32>
    %890 = arith.select %685, %889, %880 : vector<8x1xi1>, vector<8x1xi32>
    %c0_i32_176 = arith.constant 0 : i32
    %891 = vector.broadcast %c0_i32_176 : i32 to vector<8x1xi32>
    %892 = arith.cmpi eq, %880, %891 : vector<8x1xi32>
    %893 = arith.ori %685, %892 : vector<8x1xi1>
    %894 = arith.extui %893 : vector<8x1xi1> to vector<8x1xi32>
    %895 = arith.sitofp %894 : vector<8x1xi32> to vector<8x1xf32>
    %896 = arith.addf %688, %895 : vector<8x1xf32>
    %c4_i32_177 = arith.constant 4 : i32
    %897 = vector.broadcast %c4_i32_177 : i32 to vector<8x8xi32>
    %898 = arith.cmpi eq, %23, %897 : vector<8x8xi32>
    %899 = vector.shape_cast %890 : vector<8x1xi32> to vector<8x1xi32>
    %900 = vector.broadcast %899 : vector<8x1xi32> to vector<8x8xi32>
    %901 = arith.select %898, %900, %693 : vector<8x8xi1>, vector<8x8xi32>
    %902 = vector.shape_cast %882 : vector<8x1xf32> to vector<8x1xf32>
    %903 = vector.broadcast %902 : vector<8x1xf32> to vector<8x8xf32>
    %904 = arith.select %898, %903, %696 : vector<8x8xi1>, vector<8x8xf32>
    %cst_178 = arith.constant 0.000000e+00 : f32
    %905 = vector.broadcast %cst_178 : f32 to vector<8x32xf32>
    %c0_i32_179 = arith.constant 0 : i32
    %906 = vector.broadcast %c0_i32_179 : i32 to vector<8x1xi32>
    %907 = arith.cmpi eq, %880, %906 : vector<8x1xi32>
    %908 = vector.extract_strided_slice %6 {offsets = [0, 0], sizes = [1, 32], strides = [1, 1]} : vector<16x32xf32> to vector<1x32xf32>
    %cst_180 = arith.constant 0.000000e+00 : f32
    %909 = vector.shape_cast %907 : vector<8x1xi1> to vector<8x1xi1>
    %910 = vector.broadcast %909 : vector<8x1xi1> to vector<8x32xi1>
    %911 = vector.shape_cast %908 : vector<1x32xf32> to vector<1x32xf32>
    %912 = vector.broadcast %911 : vector<1x32xf32> to vector<8x32xf32>
    %913 = vector.broadcast %cst_180 : f32 to vector<8x32xf32>
    %914 = arith.select %910, %912, %913 : vector<8x32xi1>, vector<8x32xf32>
    %915 = arith.addf %905, %914 : vector<8x32xf32>
    %c1_i32_181 = arith.constant 1 : i32
    %916 = vector.broadcast %c1_i32_181 : i32 to vector<8x1xi32>
    %917 = arith.cmpi eq, %880, %916 : vector<8x1xi32>
    %918 = vector.extract_strided_slice %6 {offsets = [1, 0], sizes = [1, 32], strides = [1, 1]} : vector<16x32xf32> to vector<1x32xf32>
    %cst_182 = arith.constant 0.000000e+00 : f32
    %919 = vector.shape_cast %917 : vector<8x1xi1> to vector<8x1xi1>
    %920 = vector.broadcast %919 : vector<8x1xi1> to vector<8x32xi1>
    %921 = vector.shape_cast %918 : vector<1x32xf32> to vector<1x32xf32>
    %922 = vector.broadcast %921 : vector<1x32xf32> to vector<8x32xf32>
    %923 = vector.broadcast %cst_182 : f32 to vector<8x32xf32>
    %924 = arith.select %920, %922, %923 : vector<8x32xi1>, vector<8x32xf32>
    %925 = arith.addf %915, %924 : vector<8x32xf32>
    %c2_i32_183 = arith.constant 2 : i32
    %926 = vector.broadcast %c2_i32_183 : i32 to vector<8x1xi32>
    %927 = arith.cmpi eq, %880, %926 : vector<8x1xi32>
    %928 = vector.extract_strided_slice %6 {offsets = [2, 0], sizes = [1, 32], strides = [1, 1]} : vector<16x32xf32> to vector<1x32xf32>
    %cst_184 = arith.constant 0.000000e+00 : f32
    %929 = vector.shape_cast %927 : vector<8x1xi1> to vector<8x1xi1>
    %930 = vector.broadcast %929 : vector<8x1xi1> to vector<8x32xi1>
    %931 = vector.shape_cast %928 : vector<1x32xf32> to vector<1x32xf32>
    %932 = vector.broadcast %931 : vector<1x32xf32> to vector<8x32xf32>
    %933 = vector.broadcast %cst_184 : f32 to vector<8x32xf32>
    %934 = arith.select %930, %932, %933 : vector<8x32xi1>, vector<8x32xf32>
    %935 = arith.addf %925, %934 : vector<8x32xf32>
    %c3_i32_185 = arith.constant 3 : i32
    %936 = vector.broadcast %c3_i32_185 : i32 to vector<8x1xi32>
    %937 = arith.cmpi eq, %880, %936 : vector<8x1xi32>
    %938 = vector.extract_strided_slice %6 {offsets = [3, 0], sizes = [1, 32], strides = [1, 1]} : vector<16x32xf32> to vector<1x32xf32>
    %cst_186 = arith.constant 0.000000e+00 : f32
    %939 = vector.shape_cast %937 : vector<8x1xi1> to vector<8x1xi1>
    %940 = vector.broadcast %939 : vector<8x1xi1> to vector<8x32xi1>
    %941 = vector.shape_cast %938 : vector<1x32xf32> to vector<1x32xf32>
    %942 = vector.broadcast %941 : vector<1x32xf32> to vector<8x32xf32>
    %943 = vector.broadcast %cst_186 : f32 to vector<8x32xf32>
    %944 = arith.select %940, %942, %943 : vector<8x32xi1>, vector<8x32xf32>
    %945 = arith.addf %935, %944 : vector<8x32xf32>
    %c4_i32_187 = arith.constant 4 : i32
    %946 = vector.broadcast %c4_i32_187 : i32 to vector<8x1xi32>
    %947 = arith.cmpi eq, %880, %946 : vector<8x1xi32>
    %948 = vector.extract_strided_slice %6 {offsets = [4, 0], sizes = [1, 32], strides = [1, 1]} : vector<16x32xf32> to vector<1x32xf32>
    %cst_188 = arith.constant 0.000000e+00 : f32
    %949 = vector.shape_cast %947 : vector<8x1xi1> to vector<8x1xi1>
    %950 = vector.broadcast %949 : vector<8x1xi1> to vector<8x32xi1>
    %951 = vector.shape_cast %948 : vector<1x32xf32> to vector<1x32xf32>
    %952 = vector.broadcast %951 : vector<1x32xf32> to vector<8x32xf32>
    %953 = vector.broadcast %cst_188 : f32 to vector<8x32xf32>
    %954 = arith.select %950, %952, %953 : vector<8x32xi1>, vector<8x32xf32>
    %955 = arith.addf %945, %954 : vector<8x32xf32>
    %c5_i32_189 = arith.constant 5 : i32
    %956 = vector.broadcast %c5_i32_189 : i32 to vector<8x1xi32>
    %957 = arith.cmpi eq, %880, %956 : vector<8x1xi32>
    %958 = vector.extract_strided_slice %6 {offsets = [5, 0], sizes = [1, 32], strides = [1, 1]} : vector<16x32xf32> to vector<1x32xf32>
    %cst_190 = arith.constant 0.000000e+00 : f32
    %959 = vector.shape_cast %957 : vector<8x1xi1> to vector<8x1xi1>
    %960 = vector.broadcast %959 : vector<8x1xi1> to vector<8x32xi1>
    %961 = vector.shape_cast %958 : vector<1x32xf32> to vector<1x32xf32>
    %962 = vector.broadcast %961 : vector<1x32xf32> to vector<8x32xf32>
    %963 = vector.broadcast %cst_190 : f32 to vector<8x32xf32>
    %964 = arith.select %960, %962, %963 : vector<8x32xi1>, vector<8x32xf32>
    %965 = arith.addf %955, %964 : vector<8x32xf32>
    %c6_i32_191 = arith.constant 6 : i32
    %966 = vector.broadcast %c6_i32_191 : i32 to vector<8x1xi32>
    %967 = arith.cmpi eq, %880, %966 : vector<8x1xi32>
    %968 = vector.extract_strided_slice %6 {offsets = [6, 0], sizes = [1, 32], strides = [1, 1]} : vector<16x32xf32> to vector<1x32xf32>
    %cst_192 = arith.constant 0.000000e+00 : f32
    %969 = vector.shape_cast %967 : vector<8x1xi1> to vector<8x1xi1>
    %970 = vector.broadcast %969 : vector<8x1xi1> to vector<8x32xi1>
    %971 = vector.shape_cast %968 : vector<1x32xf32> to vector<1x32xf32>
    %972 = vector.broadcast %971 : vector<1x32xf32> to vector<8x32xf32>
    %973 = vector.broadcast %cst_192 : f32 to vector<8x32xf32>
    %974 = arith.select %970, %972, %973 : vector<8x32xi1>, vector<8x32xf32>
    %975 = arith.addf %965, %974 : vector<8x32xf32>
    %c7_i32_193 = arith.constant 7 : i32
    %976 = vector.broadcast %c7_i32_193 : i32 to vector<8x1xi32>
    %977 = arith.cmpi eq, %880, %976 : vector<8x1xi32>
    %978 = vector.extract_strided_slice %6 {offsets = [7, 0], sizes = [1, 32], strides = [1, 1]} : vector<16x32xf32> to vector<1x32xf32>
    %cst_194 = arith.constant 0.000000e+00 : f32
    %979 = vector.shape_cast %977 : vector<8x1xi1> to vector<8x1xi1>
    %980 = vector.broadcast %979 : vector<8x1xi1> to vector<8x32xi1>
    %981 = vector.shape_cast %978 : vector<1x32xf32> to vector<1x32xf32>
    %982 = vector.broadcast %981 : vector<1x32xf32> to vector<8x32xf32>
    %983 = vector.broadcast %cst_194 : f32 to vector<8x32xf32>
    %984 = arith.select %980, %982, %983 : vector<8x32xi1>, vector<8x32xf32>
    %985 = arith.addf %975, %984 : vector<8x32xf32>
    %c8_i32_195 = arith.constant 8 : i32
    %986 = vector.broadcast %c8_i32_195 : i32 to vector<8x1xi32>
    %987 = arith.cmpi eq, %880, %986 : vector<8x1xi32>
    %988 = vector.extract_strided_slice %6 {offsets = [8, 0], sizes = [1, 32], strides = [1, 1]} : vector<16x32xf32> to vector<1x32xf32>
    %cst_196 = arith.constant 0.000000e+00 : f32
    %989 = vector.shape_cast %987 : vector<8x1xi1> to vector<8x1xi1>
    %990 = vector.broadcast %989 : vector<8x1xi1> to vector<8x32xi1>
    %991 = vector.shape_cast %988 : vector<1x32xf32> to vector<1x32xf32>
    %992 = vector.broadcast %991 : vector<1x32xf32> to vector<8x32xf32>
    %993 = vector.broadcast %cst_196 : f32 to vector<8x32xf32>
    %994 = arith.select %990, %992, %993 : vector<8x32xi1>, vector<8x32xf32>
    %995 = arith.addf %985, %994 : vector<8x32xf32>
    %c9_i32_197 = arith.constant 9 : i32
    %996 = vector.broadcast %c9_i32_197 : i32 to vector<8x1xi32>
    %997 = arith.cmpi eq, %880, %996 : vector<8x1xi32>
    %998 = vector.extract_strided_slice %6 {offsets = [9, 0], sizes = [1, 32], strides = [1, 1]} : vector<16x32xf32> to vector<1x32xf32>
    %cst_198 = arith.constant 0.000000e+00 : f32
    %999 = vector.shape_cast %997 : vector<8x1xi1> to vector<8x1xi1>
    %1000 = vector.broadcast %999 : vector<8x1xi1> to vector<8x32xi1>
    %1001 = vector.shape_cast %998 : vector<1x32xf32> to vector<1x32xf32>
    %1002 = vector.broadcast %1001 : vector<1x32xf32> to vector<8x32xf32>
    %1003 = vector.broadcast %cst_198 : f32 to vector<8x32xf32>
    %1004 = arith.select %1000, %1002, %1003 : vector<8x32xi1>, vector<8x32xf32>
    %1005 = arith.addf %995, %1004 : vector<8x32xf32>
    %c10_i32_199 = arith.constant 10 : i32
    %1006 = vector.broadcast %c10_i32_199 : i32 to vector<8x1xi32>
    %1007 = arith.cmpi eq, %880, %1006 : vector<8x1xi32>
    %1008 = vector.extract_strided_slice %6 {offsets = [10, 0], sizes = [1, 32], strides = [1, 1]} : vector<16x32xf32> to vector<1x32xf32>
    %cst_200 = arith.constant 0.000000e+00 : f32
    %1009 = vector.shape_cast %1007 : vector<8x1xi1> to vector<8x1xi1>
    %1010 = vector.broadcast %1009 : vector<8x1xi1> to vector<8x32xi1>
    %1011 = vector.shape_cast %1008 : vector<1x32xf32> to vector<1x32xf32>
    %1012 = vector.broadcast %1011 : vector<1x32xf32> to vector<8x32xf32>
    %1013 = vector.broadcast %cst_200 : f32 to vector<8x32xf32>
    %1014 = arith.select %1010, %1012, %1013 : vector<8x32xi1>, vector<8x32xf32>
    %1015 = arith.addf %1005, %1014 : vector<8x32xf32>
    %c11_i32_201 = arith.constant 11 : i32
    %1016 = vector.broadcast %c11_i32_201 : i32 to vector<8x1xi32>
    %1017 = arith.cmpi eq, %880, %1016 : vector<8x1xi32>
    %1018 = vector.extract_strided_slice %6 {offsets = [11, 0], sizes = [1, 32], strides = [1, 1]} : vector<16x32xf32> to vector<1x32xf32>
    %cst_202 = arith.constant 0.000000e+00 : f32
    %1019 = vector.shape_cast %1017 : vector<8x1xi1> to vector<8x1xi1>
    %1020 = vector.broadcast %1019 : vector<8x1xi1> to vector<8x32xi1>
    %1021 = vector.shape_cast %1018 : vector<1x32xf32> to vector<1x32xf32>
    %1022 = vector.broadcast %1021 : vector<1x32xf32> to vector<8x32xf32>
    %1023 = vector.broadcast %cst_202 : f32 to vector<8x32xf32>
    %1024 = arith.select %1020, %1022, %1023 : vector<8x32xi1>, vector<8x32xf32>
    %1025 = arith.addf %1015, %1024 : vector<8x32xf32>
    %c12_i32_203 = arith.constant 12 : i32
    %1026 = vector.broadcast %c12_i32_203 : i32 to vector<8x1xi32>
    %1027 = arith.cmpi eq, %880, %1026 : vector<8x1xi32>
    %1028 = vector.extract_strided_slice %6 {offsets = [12, 0], sizes = [1, 32], strides = [1, 1]} : vector<16x32xf32> to vector<1x32xf32>
    %cst_204 = arith.constant 0.000000e+00 : f32
    %1029 = vector.shape_cast %1027 : vector<8x1xi1> to vector<8x1xi1>
    %1030 = vector.broadcast %1029 : vector<8x1xi1> to vector<8x32xi1>
    %1031 = vector.shape_cast %1028 : vector<1x32xf32> to vector<1x32xf32>
    %1032 = vector.broadcast %1031 : vector<1x32xf32> to vector<8x32xf32>
    %1033 = vector.broadcast %cst_204 : f32 to vector<8x32xf32>
    %1034 = arith.select %1030, %1032, %1033 : vector<8x32xi1>, vector<8x32xf32>
    %1035 = arith.addf %1025, %1034 : vector<8x32xf32>
    %c13_i32_205 = arith.constant 13 : i32
    %1036 = vector.broadcast %c13_i32_205 : i32 to vector<8x1xi32>
    %1037 = arith.cmpi eq, %880, %1036 : vector<8x1xi32>
    %1038 = vector.extract_strided_slice %6 {offsets = [13, 0], sizes = [1, 32], strides = [1, 1]} : vector<16x32xf32> to vector<1x32xf32>
    %cst_206 = arith.constant 0.000000e+00 : f32
    %1039 = vector.shape_cast %1037 : vector<8x1xi1> to vector<8x1xi1>
    %1040 = vector.broadcast %1039 : vector<8x1xi1> to vector<8x32xi1>
    %1041 = vector.shape_cast %1038 : vector<1x32xf32> to vector<1x32xf32>
    %1042 = vector.broadcast %1041 : vector<1x32xf32> to vector<8x32xf32>
    %1043 = vector.broadcast %cst_206 : f32 to vector<8x32xf32>
    %1044 = arith.select %1040, %1042, %1043 : vector<8x32xi1>, vector<8x32xf32>
    %1045 = arith.addf %1035, %1044 : vector<8x32xf32>
    %c14_i32_207 = arith.constant 14 : i32
    %1046 = vector.broadcast %c14_i32_207 : i32 to vector<8x1xi32>
    %1047 = arith.cmpi eq, %880, %1046 : vector<8x1xi32>
    %1048 = vector.extract_strided_slice %6 {offsets = [14, 0], sizes = [1, 32], strides = [1, 1]} : vector<16x32xf32> to vector<1x32xf32>
    %cst_208 = arith.constant 0.000000e+00 : f32
    %1049 = vector.shape_cast %1047 : vector<8x1xi1> to vector<8x1xi1>
    %1050 = vector.broadcast %1049 : vector<8x1xi1> to vector<8x32xi1>
    %1051 = vector.shape_cast %1048 : vector<1x32xf32> to vector<1x32xf32>
    %1052 = vector.broadcast %1051 : vector<1x32xf32> to vector<8x32xf32>
    %1053 = vector.broadcast %cst_208 : f32 to vector<8x32xf32>
    %1054 = arith.select %1050, %1052, %1053 : vector<8x32xi1>, vector<8x32xf32>
    %1055 = arith.addf %1045, %1054 : vector<8x32xf32>
    %c15_i32_209 = arith.constant 15 : i32
    %1056 = vector.broadcast %c15_i32_209 : i32 to vector<8x1xi32>
    %1057 = arith.cmpi eq, %880, %1056 : vector<8x1xi32>
    %1058 = vector.extract_strided_slice %6 {offsets = [15, 0], sizes = [1, 32], strides = [1, 1]} : vector<16x32xf32> to vector<1x32xf32>
    %cst_210 = arith.constant 0.000000e+00 : f32
    %1059 = vector.shape_cast %1057 : vector<8x1xi1> to vector<8x1xi1>
    %1060 = vector.broadcast %1059 : vector<8x1xi1> to vector<8x32xi1>
    %1061 = vector.shape_cast %1058 : vector<1x32xf32> to vector<1x32xf32>
    %1062 = vector.broadcast %1061 : vector<1x32xf32> to vector<8x32xf32>
    %1063 = vector.broadcast %cst_210 : f32 to vector<8x32xf32>
    %1064 = arith.select %1060, %1062, %1063 : vector<8x32xi1>, vector<8x32xf32>
    %1065 = arith.addf %1055, %1064 : vector<8x32xf32>
    %1066 = arith.addf %866, %1065 : vector<8x32xf32>
    %1067 = vector.broadcast %15 : vector<1x32xf32> to vector<8x32xf32>
    %1068 = arith.addf %1066, %1067 : vector<8x32xf32>
    %1069 = math.tanh %1068 : vector<8x32xf32>
    %cst_211 = arith.constant dense<0.000000e+00> : vector<8x48xf32>
    %1070 = tpu.matmul %1069, %4, %cst_211 {dimension_numbers = #tpu.dot_dimension_numbers<[1], [0], [0], [1], [0, 0, 1, 1], [], []>} : vector<8x32xf32>, vector<32x48xf32>, vector<8x48xf32> -> vector<8x48xf32>
    %1071 = vector.extract_strided_slice %1070 {offsets = [0, 0], sizes = [8, 16], strides = [1, 1]} : vector<8x48xf32> to vector<8x16xf32>
    %1072 = vector.broadcast %16 : vector<1x16xf32> to vector<8x16xf32>
    %1073 = arith.addf %1071, %1072 : vector<8x16xf32>
    %1074 = vector.extract_strided_slice %1070 {offsets = [0, 16], sizes = [8, 32], strides = [1, 1]} : vector<8x48xf32> to vector<8x32xf32>
    %cst_212 = arith.constant dense<0xFF800000> : vector<8xf32>
    %1075 = vector.multi_reduction <maximumf>, %1073, %cst_212 [1] : vector<8x16xf32> to vector<8xf32>
    %1076 = vector.shape_cast %1075 : vector<8xf32> to vector<8x1xf32>
    %1077 = vector.broadcast %1076 : vector<8x1xf32> to vector<8x16xf32>
    %1078 = arith.subf %1073, %1077 : vector<8x16xf32>
    %1079 = math.exp %1078 : vector<8x16xf32>
    %cst_213 = arith.constant dense<0.000000e+00> : vector<8xf32>
    %1080 = vector.multi_reduction <add>, %1079, %cst_213 [1] : vector<8x16xf32> to vector<8xf32>
    %1081 = vector.shape_cast %1080 : vector<8xf32> to vector<8x1xf32>
    %1082 = math.log %1081 : vector<8x1xf32>
    %1083 = vector.broadcast %1076 : vector<8x1xf32> to vector<8x16xf32>
    %1084 = arith.cmpf oeq, %1073, %1083 : vector<8x16xf32>
    %c16_i32_214 = arith.constant 16 : i32
    %1085 = vector.broadcast %c16_i32_214 : i32 to vector<8x16xi32>
    %1086 = arith.select %1084, %24, %1085 : vector<8x16xi1>, vector<8x16xi32>
    %cst_215 = arith.constant dense<2147483647> : vector<8xi32>
    %1087 = vector.multi_reduction <minsi>, %1086, %cst_215 [1] : vector<8x16xi32> to vector<8xi32>
    %1088 = vector.shape_cast %1087 : vector<8xi32> to vector<8x1xi32>
    %cst_216 = arith.constant 0.000000e+00 : f32
    %1089 = vector.broadcast %cst_216 : f32 to vector<8x1xf32>
    %1090 = arith.subf %1089, %1082 : vector<8x1xf32>
    %1091 = arith.mulf %1078, %1079 : vector<8x16xf32>
    %cst_217 = arith.constant dense<0.000000e+00> : vector<8xf32>
    %1092 = vector.multi_reduction <add>, %1091, %cst_217 [1] : vector<8x16xf32> to vector<8xf32>
    %1093 = vector.shape_cast %1092 : vector<8xf32> to vector<8x1xf32>
    %1094 = arith.divf %1093, %1081 : vector<8x1xf32>
    %1095 = arith.subf %1082, %1094 : vector<8x1xf32>
    %1096 = arith.addf %888, %1095 : vector<8x1xf32>
    %c2_i32_218 = arith.constant 2 : i32
    %1097 = vector.broadcast %c2_i32_218 : i32 to vector<8x1xi32>
    %1098 = arith.select %893, %1097, %1088 : vector<8x1xi1>, vector<8x1xi32>
    %c0_i32_219 = arith.constant 0 : i32
    %1099 = vector.broadcast %c0_i32_219 : i32 to vector<8x1xi32>
    %1100 = arith.cmpi eq, %1088, %1099 : vector<8x1xi32>
    %1101 = arith.ori %893, %1100 : vector<8x1xi1>
    %1102 = arith.extui %1101 : vector<8x1xi1> to vector<8x1xi32>
    %1103 = arith.sitofp %1102 : vector<8x1xi32> to vector<8x1xf32>
    %1104 = arith.addf %896, %1103 : vector<8x1xf32>
    %c5_i32_220 = arith.constant 5 : i32
    %1105 = vector.broadcast %c5_i32_220 : i32 to vector<8x8xi32>
    %1106 = arith.cmpi eq, %23, %1105 : vector<8x8xi32>
    %1107 = vector.shape_cast %1098 : vector<8x1xi32> to vector<8x1xi32>
    %1108 = vector.broadcast %1107 : vector<8x1xi32> to vector<8x8xi32>
    %1109 = arith.select %1106, %1108, %901 : vector<8x8xi1>, vector<8x8xi32>
    %1110 = vector.shape_cast %1090 : vector<8x1xf32> to vector<8x1xf32>
    %1111 = vector.broadcast %1110 : vector<8x1xf32> to vector<8x8xf32>
    %1112 = arith.select %1106, %1111, %904 : vector<8x8xi1>, vector<8x8xf32>
    %cst_221 = arith.constant 0.000000e+00 : f32
    %1113 = vector.broadcast %cst_221 : f32 to vector<8x32xf32>
    %c0_i32_222 = arith.constant 0 : i32
    %1114 = vector.broadcast %c0_i32_222 : i32 to vector<8x1xi32>
    %1115 = arith.cmpi eq, %1088, %1114 : vector<8x1xi32>
    %1116 = vector.extract_strided_slice %6 {offsets = [0, 0], sizes = [1, 32], strides = [1, 1]} : vector<16x32xf32> to vector<1x32xf32>
    %cst_223 = arith.constant 0.000000e+00 : f32
    %1117 = vector.shape_cast %1115 : vector<8x1xi1> to vector<8x1xi1>
    %1118 = vector.broadcast %1117 : vector<8x1xi1> to vector<8x32xi1>
    %1119 = vector.shape_cast %1116 : vector<1x32xf32> to vector<1x32xf32>
    %1120 = vector.broadcast %1119 : vector<1x32xf32> to vector<8x32xf32>
    %1121 = vector.broadcast %cst_223 : f32 to vector<8x32xf32>
    %1122 = arith.select %1118, %1120, %1121 : vector<8x32xi1>, vector<8x32xf32>
    %1123 = arith.addf %1113, %1122 : vector<8x32xf32>
    %c1_i32_224 = arith.constant 1 : i32
    %1124 = vector.broadcast %c1_i32_224 : i32 to vector<8x1xi32>
    %1125 = arith.cmpi eq, %1088, %1124 : vector<8x1xi32>
    %1126 = vector.extract_strided_slice %6 {offsets = [1, 0], sizes = [1, 32], strides = [1, 1]} : vector<16x32xf32> to vector<1x32xf32>
    %cst_225 = arith.constant 0.000000e+00 : f32
    %1127 = vector.shape_cast %1125 : vector<8x1xi1> to vector<8x1xi1>
    %1128 = vector.broadcast %1127 : vector<8x1xi1> to vector<8x32xi1>
    %1129 = vector.shape_cast %1126 : vector<1x32xf32> to vector<1x32xf32>
    %1130 = vector.broadcast %1129 : vector<1x32xf32> to vector<8x32xf32>
    %1131 = vector.broadcast %cst_225 : f32 to vector<8x32xf32>
    %1132 = arith.select %1128, %1130, %1131 : vector<8x32xi1>, vector<8x32xf32>
    %1133 = arith.addf %1123, %1132 : vector<8x32xf32>
    %c2_i32_226 = arith.constant 2 : i32
    %1134 = vector.broadcast %c2_i32_226 : i32 to vector<8x1xi32>
    %1135 = arith.cmpi eq, %1088, %1134 : vector<8x1xi32>
    %1136 = vector.extract_strided_slice %6 {offsets = [2, 0], sizes = [1, 32], strides = [1, 1]} : vector<16x32xf32> to vector<1x32xf32>
    %cst_227 = arith.constant 0.000000e+00 : f32
    %1137 = vector.shape_cast %1135 : vector<8x1xi1> to vector<8x1xi1>
    %1138 = vector.broadcast %1137 : vector<8x1xi1> to vector<8x32xi1>
    %1139 = vector.shape_cast %1136 : vector<1x32xf32> to vector<1x32xf32>
    %1140 = vector.broadcast %1139 : vector<1x32xf32> to vector<8x32xf32>
    %1141 = vector.broadcast %cst_227 : f32 to vector<8x32xf32>
    %1142 = arith.select %1138, %1140, %1141 : vector<8x32xi1>, vector<8x32xf32>
    %1143 = arith.addf %1133, %1142 : vector<8x32xf32>
    %c3_i32_228 = arith.constant 3 : i32
    %1144 = vector.broadcast %c3_i32_228 : i32 to vector<8x1xi32>
    %1145 = arith.cmpi eq, %1088, %1144 : vector<8x1xi32>
    %1146 = vector.extract_strided_slice %6 {offsets = [3, 0], sizes = [1, 32], strides = [1, 1]} : vector<16x32xf32> to vector<1x32xf32>
    %cst_229 = arith.constant 0.000000e+00 : f32
    %1147 = vector.shape_cast %1145 : vector<8x1xi1> to vector<8x1xi1>
    %1148 = vector.broadcast %1147 : vector<8x1xi1> to vector<8x32xi1>
    %1149 = vector.shape_cast %1146 : vector<1x32xf32> to vector<1x32xf32>
    %1150 = vector.broadcast %1149 : vector<1x32xf32> to vector<8x32xf32>
    %1151 = vector.broadcast %cst_229 : f32 to vector<8x32xf32>
    %1152 = arith.select %1148, %1150, %1151 : vector<8x32xi1>, vector<8x32xf32>
    %1153 = arith.addf %1143, %1152 : vector<8x32xf32>
    %c4_i32_230 = arith.constant 4 : i32
    %1154 = vector.broadcast %c4_i32_230 : i32 to vector<8x1xi32>
    %1155 = arith.cmpi eq, %1088, %1154 : vector<8x1xi32>
    %1156 = vector.extract_strided_slice %6 {offsets = [4, 0], sizes = [1, 32], strides = [1, 1]} : vector<16x32xf32> to vector<1x32xf32>
    %cst_231 = arith.constant 0.000000e+00 : f32
    %1157 = vector.shape_cast %1155 : vector<8x1xi1> to vector<8x1xi1>
    %1158 = vector.broadcast %1157 : vector<8x1xi1> to vector<8x32xi1>
    %1159 = vector.shape_cast %1156 : vector<1x32xf32> to vector<1x32xf32>
    %1160 = vector.broadcast %1159 : vector<1x32xf32> to vector<8x32xf32>
    %1161 = vector.broadcast %cst_231 : f32 to vector<8x32xf32>
    %1162 = arith.select %1158, %1160, %1161 : vector<8x32xi1>, vector<8x32xf32>
    %1163 = arith.addf %1153, %1162 : vector<8x32xf32>
    %c5_i32_232 = arith.constant 5 : i32
    %1164 = vector.broadcast %c5_i32_232 : i32 to vector<8x1xi32>
    %1165 = arith.cmpi eq, %1088, %1164 : vector<8x1xi32>
    %1166 = vector.extract_strided_slice %6 {offsets = [5, 0], sizes = [1, 32], strides = [1, 1]} : vector<16x32xf32> to vector<1x32xf32>
    %cst_233 = arith.constant 0.000000e+00 : f32
    %1167 = vector.shape_cast %1165 : vector<8x1xi1> to vector<8x1xi1>
    %1168 = vector.broadcast %1167 : vector<8x1xi1> to vector<8x32xi1>
    %1169 = vector.shape_cast %1166 : vector<1x32xf32> to vector<1x32xf32>
    %1170 = vector.broadcast %1169 : vector<1x32xf32> to vector<8x32xf32>
    %1171 = vector.broadcast %cst_233 : f32 to vector<8x32xf32>
    %1172 = arith.select %1168, %1170, %1171 : vector<8x32xi1>, vector<8x32xf32>
    %1173 = arith.addf %1163, %1172 : vector<8x32xf32>
    %c6_i32_234 = arith.constant 6 : i32
    %1174 = vector.broadcast %c6_i32_234 : i32 to vector<8x1xi32>
    %1175 = arith.cmpi eq, %1088, %1174 : vector<8x1xi32>
    %1176 = vector.extract_strided_slice %6 {offsets = [6, 0], sizes = [1, 32], strides = [1, 1]} : vector<16x32xf32> to vector<1x32xf32>
    %cst_235 = arith.constant 0.000000e+00 : f32
    %1177 = vector.shape_cast %1175 : vector<8x1xi1> to vector<8x1xi1>
    %1178 = vector.broadcast %1177 : vector<8x1xi1> to vector<8x32xi1>
    %1179 = vector.shape_cast %1176 : vector<1x32xf32> to vector<1x32xf32>
    %1180 = vector.broadcast %1179 : vector<1x32xf32> to vector<8x32xf32>
    %1181 = vector.broadcast %cst_235 : f32 to vector<8x32xf32>
    %1182 = arith.select %1178, %1180, %1181 : vector<8x32xi1>, vector<8x32xf32>
    %1183 = arith.addf %1173, %1182 : vector<8x32xf32>
    %c7_i32_236 = arith.constant 7 : i32
    %1184 = vector.broadcast %c7_i32_236 : i32 to vector<8x1xi32>
    %1185 = arith.cmpi eq, %1088, %1184 : vector<8x1xi32>
    %1186 = vector.extract_strided_slice %6 {offsets = [7, 0], sizes = [1, 32], strides = [1, 1]} : vector<16x32xf32> to vector<1x32xf32>
    %cst_237 = arith.constant 0.000000e+00 : f32
    %1187 = vector.shape_cast %1185 : vector<8x1xi1> to vector<8x1xi1>
    %1188 = vector.broadcast %1187 : vector<8x1xi1> to vector<8x32xi1>
    %1189 = vector.shape_cast %1186 : vector<1x32xf32> to vector<1x32xf32>
    %1190 = vector.broadcast %1189 : vector<1x32xf32> to vector<8x32xf32>
    %1191 = vector.broadcast %cst_237 : f32 to vector<8x32xf32>
    %1192 = arith.select %1188, %1190, %1191 : vector<8x32xi1>, vector<8x32xf32>
    %1193 = arith.addf %1183, %1192 : vector<8x32xf32>
    %c8_i32_238 = arith.constant 8 : i32
    %1194 = vector.broadcast %c8_i32_238 : i32 to vector<8x1xi32>
    %1195 = arith.cmpi eq, %1088, %1194 : vector<8x1xi32>
    %1196 = vector.extract_strided_slice %6 {offsets = [8, 0], sizes = [1, 32], strides = [1, 1]} : vector<16x32xf32> to vector<1x32xf32>
    %cst_239 = arith.constant 0.000000e+00 : f32
    %1197 = vector.shape_cast %1195 : vector<8x1xi1> to vector<8x1xi1>
    %1198 = vector.broadcast %1197 : vector<8x1xi1> to vector<8x32xi1>
    %1199 = vector.shape_cast %1196 : vector<1x32xf32> to vector<1x32xf32>
    %1200 = vector.broadcast %1199 : vector<1x32xf32> to vector<8x32xf32>
    %1201 = vector.broadcast %cst_239 : f32 to vector<8x32xf32>
    %1202 = arith.select %1198, %1200, %1201 : vector<8x32xi1>, vector<8x32xf32>
    %1203 = arith.addf %1193, %1202 : vector<8x32xf32>
    %c9_i32_240 = arith.constant 9 : i32
    %1204 = vector.broadcast %c9_i32_240 : i32 to vector<8x1xi32>
    %1205 = arith.cmpi eq, %1088, %1204 : vector<8x1xi32>
    %1206 = vector.extract_strided_slice %6 {offsets = [9, 0], sizes = [1, 32], strides = [1, 1]} : vector<16x32xf32> to vector<1x32xf32>
    %cst_241 = arith.constant 0.000000e+00 : f32
    %1207 = vector.shape_cast %1205 : vector<8x1xi1> to vector<8x1xi1>
    %1208 = vector.broadcast %1207 : vector<8x1xi1> to vector<8x32xi1>
    %1209 = vector.shape_cast %1206 : vector<1x32xf32> to vector<1x32xf32>
    %1210 = vector.broadcast %1209 : vector<1x32xf32> to vector<8x32xf32>
    %1211 = vector.broadcast %cst_241 : f32 to vector<8x32xf32>
    %1212 = arith.select %1208, %1210, %1211 : vector<8x32xi1>, vector<8x32xf32>
    %1213 = arith.addf %1203, %1212 : vector<8x32xf32>
    %c10_i32_242 = arith.constant 10 : i32
    %1214 = vector.broadcast %c10_i32_242 : i32 to vector<8x1xi32>
    %1215 = arith.cmpi eq, %1088, %1214 : vector<8x1xi32>
    %1216 = vector.extract_strided_slice %6 {offsets = [10, 0], sizes = [1, 32], strides = [1, 1]} : vector<16x32xf32> to vector<1x32xf32>
    %cst_243 = arith.constant 0.000000e+00 : f32
    %1217 = vector.shape_cast %1215 : vector<8x1xi1> to vector<8x1xi1>
    %1218 = vector.broadcast %1217 : vector<8x1xi1> to vector<8x32xi1>
    %1219 = vector.shape_cast %1216 : vector<1x32xf32> to vector<1x32xf32>
    %1220 = vector.broadcast %1219 : vector<1x32xf32> to vector<8x32xf32>
    %1221 = vector.broadcast %cst_243 : f32 to vector<8x32xf32>
    %1222 = arith.select %1218, %1220, %1221 : vector<8x32xi1>, vector<8x32xf32>
    %1223 = arith.addf %1213, %1222 : vector<8x32xf32>
    %c11_i32_244 = arith.constant 11 : i32
    %1224 = vector.broadcast %c11_i32_244 : i32 to vector<8x1xi32>
    %1225 = arith.cmpi eq, %1088, %1224 : vector<8x1xi32>
    %1226 = vector.extract_strided_slice %6 {offsets = [11, 0], sizes = [1, 32], strides = [1, 1]} : vector<16x32xf32> to vector<1x32xf32>
    %cst_245 = arith.constant 0.000000e+00 : f32
    %1227 = vector.shape_cast %1225 : vector<8x1xi1> to vector<8x1xi1>
    %1228 = vector.broadcast %1227 : vector<8x1xi1> to vector<8x32xi1>
    %1229 = vector.shape_cast %1226 : vector<1x32xf32> to vector<1x32xf32>
    %1230 = vector.broadcast %1229 : vector<1x32xf32> to vector<8x32xf32>
    %1231 = vector.broadcast %cst_245 : f32 to vector<8x32xf32>
    %1232 = arith.select %1228, %1230, %1231 : vector<8x32xi1>, vector<8x32xf32>
    %1233 = arith.addf %1223, %1232 : vector<8x32xf32>
    %c12_i32_246 = arith.constant 12 : i32
    %1234 = vector.broadcast %c12_i32_246 : i32 to vector<8x1xi32>
    %1235 = arith.cmpi eq, %1088, %1234 : vector<8x1xi32>
    %1236 = vector.extract_strided_slice %6 {offsets = [12, 0], sizes = [1, 32], strides = [1, 1]} : vector<16x32xf32> to vector<1x32xf32>
    %cst_247 = arith.constant 0.000000e+00 : f32
    %1237 = vector.shape_cast %1235 : vector<8x1xi1> to vector<8x1xi1>
    %1238 = vector.broadcast %1237 : vector<8x1xi1> to vector<8x32xi1>
    %1239 = vector.shape_cast %1236 : vector<1x32xf32> to vector<1x32xf32>
    %1240 = vector.broadcast %1239 : vector<1x32xf32> to vector<8x32xf32>
    %1241 = vector.broadcast %cst_247 : f32 to vector<8x32xf32>
    %1242 = arith.select %1238, %1240, %1241 : vector<8x32xi1>, vector<8x32xf32>
    %1243 = arith.addf %1233, %1242 : vector<8x32xf32>
    %c13_i32_248 = arith.constant 13 : i32
    %1244 = vector.broadcast %c13_i32_248 : i32 to vector<8x1xi32>
    %1245 = arith.cmpi eq, %1088, %1244 : vector<8x1xi32>
    %1246 = vector.extract_strided_slice %6 {offsets = [13, 0], sizes = [1, 32], strides = [1, 1]} : vector<16x32xf32> to vector<1x32xf32>
    %cst_249 = arith.constant 0.000000e+00 : f32
    %1247 = vector.shape_cast %1245 : vector<8x1xi1> to vector<8x1xi1>
    %1248 = vector.broadcast %1247 : vector<8x1xi1> to vector<8x32xi1>
    %1249 = vector.shape_cast %1246 : vector<1x32xf32> to vector<1x32xf32>
    %1250 = vector.broadcast %1249 : vector<1x32xf32> to vector<8x32xf32>
    %1251 = vector.broadcast %cst_249 : f32 to vector<8x32xf32>
    %1252 = arith.select %1248, %1250, %1251 : vector<8x32xi1>, vector<8x32xf32>
    %1253 = arith.addf %1243, %1252 : vector<8x32xf32>
    %c14_i32_250 = arith.constant 14 : i32
    %1254 = vector.broadcast %c14_i32_250 : i32 to vector<8x1xi32>
    %1255 = arith.cmpi eq, %1088, %1254 : vector<8x1xi32>
    %1256 = vector.extract_strided_slice %6 {offsets = [14, 0], sizes = [1, 32], strides = [1, 1]} : vector<16x32xf32> to vector<1x32xf32>
    %cst_251 = arith.constant 0.000000e+00 : f32
    %1257 = vector.shape_cast %1255 : vector<8x1xi1> to vector<8x1xi1>
    %1258 = vector.broadcast %1257 : vector<8x1xi1> to vector<8x32xi1>
    %1259 = vector.shape_cast %1256 : vector<1x32xf32> to vector<1x32xf32>
    %1260 = vector.broadcast %1259 : vector<1x32xf32> to vector<8x32xf32>
    %1261 = vector.broadcast %cst_251 : f32 to vector<8x32xf32>
    %1262 = arith.select %1258, %1260, %1261 : vector<8x32xi1>, vector<8x32xf32>
    %1263 = arith.addf %1253, %1262 : vector<8x32xf32>
    %c15_i32_252 = arith.constant 15 : i32
    %1264 = vector.broadcast %c15_i32_252 : i32 to vector<8x1xi32>
    %1265 = arith.cmpi eq, %1088, %1264 : vector<8x1xi32>
    %1266 = vector.extract_strided_slice %6 {offsets = [15, 0], sizes = [1, 32], strides = [1, 1]} : vector<16x32xf32> to vector<1x32xf32>
    %cst_253 = arith.constant 0.000000e+00 : f32
    %1267 = vector.shape_cast %1265 : vector<8x1xi1> to vector<8x1xi1>
    %1268 = vector.broadcast %1267 : vector<8x1xi1> to vector<8x32xi1>
    %1269 = vector.shape_cast %1266 : vector<1x32xf32> to vector<1x32xf32>
    %1270 = vector.broadcast %1269 : vector<1x32xf32> to vector<8x32xf32>
    %1271 = vector.broadcast %cst_253 : f32 to vector<8x32xf32>
    %1272 = arith.select %1268, %1270, %1271 : vector<8x32xi1>, vector<8x32xf32>
    %1273 = arith.addf %1263, %1272 : vector<8x32xf32>
    %1274 = arith.addf %1074, %1273 : vector<8x32xf32>
    %1275 = vector.broadcast %15 : vector<1x32xf32> to vector<8x32xf32>
    %1276 = arith.addf %1274, %1275 : vector<8x32xf32>
    %1277 = math.tanh %1276 : vector<8x32xf32>
    %cst_254 = arith.constant dense<0.000000e+00> : vector<8x48xf32>
    %1278 = tpu.matmul %1277, %4, %cst_254 {dimension_numbers = #tpu.dot_dimension_numbers<[1], [0], [0], [1], [0, 0, 1, 1], [], []>} : vector<8x32xf32>, vector<32x48xf32>, vector<8x48xf32> -> vector<8x48xf32>
    %1279 = vector.extract_strided_slice %1278 {offsets = [0, 0], sizes = [8, 16], strides = [1, 1]} : vector<8x48xf32> to vector<8x16xf32>
    %1280 = vector.broadcast %16 : vector<1x16xf32> to vector<8x16xf32>
    %1281 = arith.addf %1279, %1280 : vector<8x16xf32>
    %1282 = vector.extract_strided_slice %1278 {offsets = [0, 16], sizes = [8, 32], strides = [1, 1]} : vector<8x48xf32> to vector<8x32xf32>
    %cst_255 = arith.constant dense<0xFF800000> : vector<8xf32>
    %1283 = vector.multi_reduction <maximumf>, %1281, %cst_255 [1] : vector<8x16xf32> to vector<8xf32>
    %1284 = vector.shape_cast %1283 : vector<8xf32> to vector<8x1xf32>
    %1285 = vector.broadcast %1284 : vector<8x1xf32> to vector<8x16xf32>
    %1286 = arith.subf %1281, %1285 : vector<8x16xf32>
    %1287 = math.exp %1286 : vector<8x16xf32>
    %cst_256 = arith.constant dense<0.000000e+00> : vector<8xf32>
    %1288 = vector.multi_reduction <add>, %1287, %cst_256 [1] : vector<8x16xf32> to vector<8xf32>
    %1289 = vector.shape_cast %1288 : vector<8xf32> to vector<8x1xf32>
    %1290 = math.log %1289 : vector<8x1xf32>
    %1291 = vector.broadcast %1284 : vector<8x1xf32> to vector<8x16xf32>
    %1292 = arith.cmpf oeq, %1281, %1291 : vector<8x16xf32>
    %c16_i32_257 = arith.constant 16 : i32
    %1293 = vector.broadcast %c16_i32_257 : i32 to vector<8x16xi32>
    %1294 = arith.select %1292, %24, %1293 : vector<8x16xi1>, vector<8x16xi32>
    %cst_258 = arith.constant dense<2147483647> : vector<8xi32>
    %1295 = vector.multi_reduction <minsi>, %1294, %cst_258 [1] : vector<8x16xi32> to vector<8xi32>
    %1296 = vector.shape_cast %1295 : vector<8xi32> to vector<8x1xi32>
    %cst_259 = arith.constant 0.000000e+00 : f32
    %1297 = vector.broadcast %cst_259 : f32 to vector<8x1xf32>
    %1298 = arith.subf %1297, %1290 : vector<8x1xf32>
    %1299 = arith.mulf %1286, %1287 : vector<8x16xf32>
    %cst_260 = arith.constant dense<0.000000e+00> : vector<8xf32>
    %1300 = vector.multi_reduction <add>, %1299, %cst_260 [1] : vector<8x16xf32> to vector<8xf32>
    %1301 = vector.shape_cast %1300 : vector<8xf32> to vector<8x1xf32>
    %1302 = arith.divf %1301, %1289 : vector<8x1xf32>
    %1303 = arith.subf %1290, %1302 : vector<8x1xf32>
    %1304 = arith.addf %1096, %1303 : vector<8x1xf32>
    %c2_i32_261 = arith.constant 2 : i32
    %1305 = vector.broadcast %c2_i32_261 : i32 to vector<8x1xi32>
    %1306 = arith.select %1101, %1305, %1296 : vector<8x1xi1>, vector<8x1xi32>
    %c0_i32_262 = arith.constant 0 : i32
    %1307 = vector.broadcast %c0_i32_262 : i32 to vector<8x1xi32>
    %1308 = arith.cmpi eq, %1296, %1307 : vector<8x1xi32>
    %1309 = arith.ori %1101, %1308 : vector<8x1xi1>
    %1310 = arith.extui %1309 : vector<8x1xi1> to vector<8x1xi32>
    %1311 = arith.sitofp %1310 : vector<8x1xi32> to vector<8x1xf32>
    %1312 = arith.addf %1104, %1311 : vector<8x1xf32>
    %c6_i32_263 = arith.constant 6 : i32
    %1313 = vector.broadcast %c6_i32_263 : i32 to vector<8x8xi32>
    %1314 = arith.cmpi eq, %23, %1313 : vector<8x8xi32>
    %1315 = vector.shape_cast %1306 : vector<8x1xi32> to vector<8x1xi32>
    %1316 = vector.broadcast %1315 : vector<8x1xi32> to vector<8x8xi32>
    %1317 = arith.select %1314, %1316, %1109 : vector<8x8xi1>, vector<8x8xi32>
    %1318 = vector.shape_cast %1298 : vector<8x1xf32> to vector<8x1xf32>
    %1319 = vector.broadcast %1318 : vector<8x1xf32> to vector<8x8xf32>
    %1320 = arith.select %1314, %1319, %1112 : vector<8x8xi1>, vector<8x8xf32>
    %cst_264 = arith.constant 0.000000e+00 : f32
    %1321 = vector.broadcast %cst_264 : f32 to vector<8x32xf32>
    %c0_i32_265 = arith.constant 0 : i32
    %1322 = vector.broadcast %c0_i32_265 : i32 to vector<8x1xi32>
    %1323 = arith.cmpi eq, %1296, %1322 : vector<8x1xi32>
    %1324 = vector.extract_strided_slice %6 {offsets = [0, 0], sizes = [1, 32], strides = [1, 1]} : vector<16x32xf32> to vector<1x32xf32>
    %cst_266 = arith.constant 0.000000e+00 : f32
    %1325 = vector.shape_cast %1323 : vector<8x1xi1> to vector<8x1xi1>
    %1326 = vector.broadcast %1325 : vector<8x1xi1> to vector<8x32xi1>
    %1327 = vector.shape_cast %1324 : vector<1x32xf32> to vector<1x32xf32>
    %1328 = vector.broadcast %1327 : vector<1x32xf32> to vector<8x32xf32>
    %1329 = vector.broadcast %cst_266 : f32 to vector<8x32xf32>
    %1330 = arith.select %1326, %1328, %1329 : vector<8x32xi1>, vector<8x32xf32>
    %1331 = arith.addf %1321, %1330 : vector<8x32xf32>
    %c1_i32_267 = arith.constant 1 : i32
    %1332 = vector.broadcast %c1_i32_267 : i32 to vector<8x1xi32>
    %1333 = arith.cmpi eq, %1296, %1332 : vector<8x1xi32>
    %1334 = vector.extract_strided_slice %6 {offsets = [1, 0], sizes = [1, 32], strides = [1, 1]} : vector<16x32xf32> to vector<1x32xf32>
    %cst_268 = arith.constant 0.000000e+00 : f32
    %1335 = vector.shape_cast %1333 : vector<8x1xi1> to vector<8x1xi1>
    %1336 = vector.broadcast %1335 : vector<8x1xi1> to vector<8x32xi1>
    %1337 = vector.shape_cast %1334 : vector<1x32xf32> to vector<1x32xf32>
    %1338 = vector.broadcast %1337 : vector<1x32xf32> to vector<8x32xf32>
    %1339 = vector.broadcast %cst_268 : f32 to vector<8x32xf32>
    %1340 = arith.select %1336, %1338, %1339 : vector<8x32xi1>, vector<8x32xf32>
    %1341 = arith.addf %1331, %1340 : vector<8x32xf32>
    %c2_i32_269 = arith.constant 2 : i32
    %1342 = vector.broadcast %c2_i32_269 : i32 to vector<8x1xi32>
    %1343 = arith.cmpi eq, %1296, %1342 : vector<8x1xi32>
    %1344 = vector.extract_strided_slice %6 {offsets = [2, 0], sizes = [1, 32], strides = [1, 1]} : vector<16x32xf32> to vector<1x32xf32>
    %cst_270 = arith.constant 0.000000e+00 : f32
    %1345 = vector.shape_cast %1343 : vector<8x1xi1> to vector<8x1xi1>
    %1346 = vector.broadcast %1345 : vector<8x1xi1> to vector<8x32xi1>
    %1347 = vector.shape_cast %1344 : vector<1x32xf32> to vector<1x32xf32>
    %1348 = vector.broadcast %1347 : vector<1x32xf32> to vector<8x32xf32>
    %1349 = vector.broadcast %cst_270 : f32 to vector<8x32xf32>
    %1350 = arith.select %1346, %1348, %1349 : vector<8x32xi1>, vector<8x32xf32>
    %1351 = arith.addf %1341, %1350 : vector<8x32xf32>
    %c3_i32_271 = arith.constant 3 : i32
    %1352 = vector.broadcast %c3_i32_271 : i32 to vector<8x1xi32>
    %1353 = arith.cmpi eq, %1296, %1352 : vector<8x1xi32>
    %1354 = vector.extract_strided_slice %6 {offsets = [3, 0], sizes = [1, 32], strides = [1, 1]} : vector<16x32xf32> to vector<1x32xf32>
    %cst_272 = arith.constant 0.000000e+00 : f32
    %1355 = vector.shape_cast %1353 : vector<8x1xi1> to vector<8x1xi1>
    %1356 = vector.broadcast %1355 : vector<8x1xi1> to vector<8x32xi1>
    %1357 = vector.shape_cast %1354 : vector<1x32xf32> to vector<1x32xf32>
    %1358 = vector.broadcast %1357 : vector<1x32xf32> to vector<8x32xf32>
    %1359 = vector.broadcast %cst_272 : f32 to vector<8x32xf32>
    %1360 = arith.select %1356, %1358, %1359 : vector<8x32xi1>, vector<8x32xf32>
    %1361 = arith.addf %1351, %1360 : vector<8x32xf32>
    %c4_i32_273 = arith.constant 4 : i32
    %1362 = vector.broadcast %c4_i32_273 : i32 to vector<8x1xi32>
    %1363 = arith.cmpi eq, %1296, %1362 : vector<8x1xi32>
    %1364 = vector.extract_strided_slice %6 {offsets = [4, 0], sizes = [1, 32], strides = [1, 1]} : vector<16x32xf32> to vector<1x32xf32>
    %cst_274 = arith.constant 0.000000e+00 : f32
    %1365 = vector.shape_cast %1363 : vector<8x1xi1> to vector<8x1xi1>
    %1366 = vector.broadcast %1365 : vector<8x1xi1> to vector<8x32xi1>
    %1367 = vector.shape_cast %1364 : vector<1x32xf32> to vector<1x32xf32>
    %1368 = vector.broadcast %1367 : vector<1x32xf32> to vector<8x32xf32>
    %1369 = vector.broadcast %cst_274 : f32 to vector<8x32xf32>
    %1370 = arith.select %1366, %1368, %1369 : vector<8x32xi1>, vector<8x32xf32>
    %1371 = arith.addf %1361, %1370 : vector<8x32xf32>
    %c5_i32_275 = arith.constant 5 : i32
    %1372 = vector.broadcast %c5_i32_275 : i32 to vector<8x1xi32>
    %1373 = arith.cmpi eq, %1296, %1372 : vector<8x1xi32>
    %1374 = vector.extract_strided_slice %6 {offsets = [5, 0], sizes = [1, 32], strides = [1, 1]} : vector<16x32xf32> to vector<1x32xf32>
    %cst_276 = arith.constant 0.000000e+00 : f32
    %1375 = vector.shape_cast %1373 : vector<8x1xi1> to vector<8x1xi1>
    %1376 = vector.broadcast %1375 : vector<8x1xi1> to vector<8x32xi1>
    %1377 = vector.shape_cast %1374 : vector<1x32xf32> to vector<1x32xf32>
    %1378 = vector.broadcast %1377 : vector<1x32xf32> to vector<8x32xf32>
    %1379 = vector.broadcast %cst_276 : f32 to vector<8x32xf32>
    %1380 = arith.select %1376, %1378, %1379 : vector<8x32xi1>, vector<8x32xf32>
    %1381 = arith.addf %1371, %1380 : vector<8x32xf32>
    %c6_i32_277 = arith.constant 6 : i32
    %1382 = vector.broadcast %c6_i32_277 : i32 to vector<8x1xi32>
    %1383 = arith.cmpi eq, %1296, %1382 : vector<8x1xi32>
    %1384 = vector.extract_strided_slice %6 {offsets = [6, 0], sizes = [1, 32], strides = [1, 1]} : vector<16x32xf32> to vector<1x32xf32>
    %cst_278 = arith.constant 0.000000e+00 : f32
    %1385 = vector.shape_cast %1383 : vector<8x1xi1> to vector<8x1xi1>
    %1386 = vector.broadcast %1385 : vector<8x1xi1> to vector<8x32xi1>
    %1387 = vector.shape_cast %1384 : vector<1x32xf32> to vector<1x32xf32>
    %1388 = vector.broadcast %1387 : vector<1x32xf32> to vector<8x32xf32>
    %1389 = vector.broadcast %cst_278 : f32 to vector<8x32xf32>
    %1390 = arith.select %1386, %1388, %1389 : vector<8x32xi1>, vector<8x32xf32>
    %1391 = arith.addf %1381, %1390 : vector<8x32xf32>
    %c7_i32_279 = arith.constant 7 : i32
    %1392 = vector.broadcast %c7_i32_279 : i32 to vector<8x1xi32>
    %1393 = arith.cmpi eq, %1296, %1392 : vector<8x1xi32>
    %1394 = vector.extract_strided_slice %6 {offsets = [7, 0], sizes = [1, 32], strides = [1, 1]} : vector<16x32xf32> to vector<1x32xf32>
    %cst_280 = arith.constant 0.000000e+00 : f32
    %1395 = vector.shape_cast %1393 : vector<8x1xi1> to vector<8x1xi1>
    %1396 = vector.broadcast %1395 : vector<8x1xi1> to vector<8x32xi1>
    %1397 = vector.shape_cast %1394 : vector<1x32xf32> to vector<1x32xf32>
    %1398 = vector.broadcast %1397 : vector<1x32xf32> to vector<8x32xf32>
    %1399 = vector.broadcast %cst_280 : f32 to vector<8x32xf32>
    %1400 = arith.select %1396, %1398, %1399 : vector<8x32xi1>, vector<8x32xf32>
    %1401 = arith.addf %1391, %1400 : vector<8x32xf32>
    %c8_i32_281 = arith.constant 8 : i32
    %1402 = vector.broadcast %c8_i32_281 : i32 to vector<8x1xi32>
    %1403 = arith.cmpi eq, %1296, %1402 : vector<8x1xi32>
    %1404 = vector.extract_strided_slice %6 {offsets = [8, 0], sizes = [1, 32], strides = [1, 1]} : vector<16x32xf32> to vector<1x32xf32>
    %cst_282 = arith.constant 0.000000e+00 : f32
    %1405 = vector.shape_cast %1403 : vector<8x1xi1> to vector<8x1xi1>
    %1406 = vector.broadcast %1405 : vector<8x1xi1> to vector<8x32xi1>
    %1407 = vector.shape_cast %1404 : vector<1x32xf32> to vector<1x32xf32>
    %1408 = vector.broadcast %1407 : vector<1x32xf32> to vector<8x32xf32>
    %1409 = vector.broadcast %cst_282 : f32 to vector<8x32xf32>
    %1410 = arith.select %1406, %1408, %1409 : vector<8x32xi1>, vector<8x32xf32>
    %1411 = arith.addf %1401, %1410 : vector<8x32xf32>
    %c9_i32_283 = arith.constant 9 : i32
    %1412 = vector.broadcast %c9_i32_283 : i32 to vector<8x1xi32>
    %1413 = arith.cmpi eq, %1296, %1412 : vector<8x1xi32>
    %1414 = vector.extract_strided_slice %6 {offsets = [9, 0], sizes = [1, 32], strides = [1, 1]} : vector<16x32xf32> to vector<1x32xf32>
    %cst_284 = arith.constant 0.000000e+00 : f32
    %1415 = vector.shape_cast %1413 : vector<8x1xi1> to vector<8x1xi1>
    %1416 = vector.broadcast %1415 : vector<8x1xi1> to vector<8x32xi1>
    %1417 = vector.shape_cast %1414 : vector<1x32xf32> to vector<1x32xf32>
    %1418 = vector.broadcast %1417 : vector<1x32xf32> to vector<8x32xf32>
    %1419 = vector.broadcast %cst_284 : f32 to vector<8x32xf32>
    %1420 = arith.select %1416, %1418, %1419 : vector<8x32xi1>, vector<8x32xf32>
    %1421 = arith.addf %1411, %1420 : vector<8x32xf32>
    %c10_i32_285 = arith.constant 10 : i32
    %1422 = vector.broadcast %c10_i32_285 : i32 to vector<8x1xi32>
    %1423 = arith.cmpi eq, %1296, %1422 : vector<8x1xi32>
    %1424 = vector.extract_strided_slice %6 {offsets = [10, 0], sizes = [1, 32], strides = [1, 1]} : vector<16x32xf32> to vector<1x32xf32>
    %cst_286 = arith.constant 0.000000e+00 : f32
    %1425 = vector.shape_cast %1423 : vector<8x1xi1> to vector<8x1xi1>
    %1426 = vector.broadcast %1425 : vector<8x1xi1> to vector<8x32xi1>
    %1427 = vector.shape_cast %1424 : vector<1x32xf32> to vector<1x32xf32>
    %1428 = vector.broadcast %1427 : vector<1x32xf32> to vector<8x32xf32>
    %1429 = vector.broadcast %cst_286 : f32 to vector<8x32xf32>
    %1430 = arith.select %1426, %1428, %1429 : vector<8x32xi1>, vector<8x32xf32>
    %1431 = arith.addf %1421, %1430 : vector<8x32xf32>
    %c11_i32_287 = arith.constant 11 : i32
    %1432 = vector.broadcast %c11_i32_287 : i32 to vector<8x1xi32>
    %1433 = arith.cmpi eq, %1296, %1432 : vector<8x1xi32>
    %1434 = vector.extract_strided_slice %6 {offsets = [11, 0], sizes = [1, 32], strides = [1, 1]} : vector<16x32xf32> to vector<1x32xf32>
    %cst_288 = arith.constant 0.000000e+00 : f32
    %1435 = vector.shape_cast %1433 : vector<8x1xi1> to vector<8x1xi1>
    %1436 = vector.broadcast %1435 : vector<8x1xi1> to vector<8x32xi1>
    %1437 = vector.shape_cast %1434 : vector<1x32xf32> to vector<1x32xf32>
    %1438 = vector.broadcast %1437 : vector<1x32xf32> to vector<8x32xf32>
    %1439 = vector.broadcast %cst_288 : f32 to vector<8x32xf32>
    %1440 = arith.select %1436, %1438, %1439 : vector<8x32xi1>, vector<8x32xf32>
    %1441 = arith.addf %1431, %1440 : vector<8x32xf32>
    %c12_i32_289 = arith.constant 12 : i32
    %1442 = vector.broadcast %c12_i32_289 : i32 to vector<8x1xi32>
    %1443 = arith.cmpi eq, %1296, %1442 : vector<8x1xi32>
    %1444 = vector.extract_strided_slice %6 {offsets = [12, 0], sizes = [1, 32], strides = [1, 1]} : vector<16x32xf32> to vector<1x32xf32>
    %cst_290 = arith.constant 0.000000e+00 : f32
    %1445 = vector.shape_cast %1443 : vector<8x1xi1> to vector<8x1xi1>
    %1446 = vector.broadcast %1445 : vector<8x1xi1> to vector<8x32xi1>
    %1447 = vector.shape_cast %1444 : vector<1x32xf32> to vector<1x32xf32>
    %1448 = vector.broadcast %1447 : vector<1x32xf32> to vector<8x32xf32>
    %1449 = vector.broadcast %cst_290 : f32 to vector<8x32xf32>
    %1450 = arith.select %1446, %1448, %1449 : vector<8x32xi1>, vector<8x32xf32>
    %1451 = arith.addf %1441, %1450 : vector<8x32xf32>
    %c13_i32_291 = arith.constant 13 : i32
    %1452 = vector.broadcast %c13_i32_291 : i32 to vector<8x1xi32>
    %1453 = arith.cmpi eq, %1296, %1452 : vector<8x1xi32>
    %1454 = vector.extract_strided_slice %6 {offsets = [13, 0], sizes = [1, 32], strides = [1, 1]} : vector<16x32xf32> to vector<1x32xf32>
    %cst_292 = arith.constant 0.000000e+00 : f32
    %1455 = vector.shape_cast %1453 : vector<8x1xi1> to vector<8x1xi1>
    %1456 = vector.broadcast %1455 : vector<8x1xi1> to vector<8x32xi1>
    %1457 = vector.shape_cast %1454 : vector<1x32xf32> to vector<1x32xf32>
    %1458 = vector.broadcast %1457 : vector<1x32xf32> to vector<8x32xf32>
    %1459 = vector.broadcast %cst_292 : f32 to vector<8x32xf32>
    %1460 = arith.select %1456, %1458, %1459 : vector<8x32xi1>, vector<8x32xf32>
    %1461 = arith.addf %1451, %1460 : vector<8x32xf32>
    %c14_i32_293 = arith.constant 14 : i32
    %1462 = vector.broadcast %c14_i32_293 : i32 to vector<8x1xi32>
    %1463 = arith.cmpi eq, %1296, %1462 : vector<8x1xi32>
    %1464 = vector.extract_strided_slice %6 {offsets = [14, 0], sizes = [1, 32], strides = [1, 1]} : vector<16x32xf32> to vector<1x32xf32>
    %cst_294 = arith.constant 0.000000e+00 : f32
    %1465 = vector.shape_cast %1463 : vector<8x1xi1> to vector<8x1xi1>
    %1466 = vector.broadcast %1465 : vector<8x1xi1> to vector<8x32xi1>
    %1467 = vector.shape_cast %1464 : vector<1x32xf32> to vector<1x32xf32>
    %1468 = vector.broadcast %1467 : vector<1x32xf32> to vector<8x32xf32>
    %1469 = vector.broadcast %cst_294 : f32 to vector<8x32xf32>
    %1470 = arith.select %1466, %1468, %1469 : vector<8x32xi1>, vector<8x32xf32>
    %1471 = arith.addf %1461, %1470 : vector<8x32xf32>
    %c15_i32_295 = arith.constant 15 : i32
    %1472 = vector.broadcast %c15_i32_295 : i32 to vector<8x1xi32>
    %1473 = arith.cmpi eq, %1296, %1472 : vector<8x1xi32>
    %1474 = vector.extract_strided_slice %6 {offsets = [15, 0], sizes = [1, 32], strides = [1, 1]} : vector<16x32xf32> to vector<1x32xf32>
    %cst_296 = arith.constant 0.000000e+00 : f32
    %1475 = vector.shape_cast %1473 : vector<8x1xi1> to vector<8x1xi1>
    %1476 = vector.broadcast %1475 : vector<8x1xi1> to vector<8x32xi1>
    %1477 = vector.shape_cast %1474 : vector<1x32xf32> to vector<1x32xf32>
    %1478 = vector.broadcast %1477 : vector<1x32xf32> to vector<8x32xf32>
    %1479 = vector.broadcast %cst_296 : f32 to vector<8x32xf32>
    %1480 = arith.select %1476, %1478, %1479 : vector<8x32xi1>, vector<8x32xf32>
    %1481 = arith.addf %1471, %1480 : vector<8x32xf32>
    %1482 = arith.addf %1282, %1481 : vector<8x32xf32>
    %1483 = vector.broadcast %15 : vector<1x32xf32> to vector<8x32xf32>
    %1484 = arith.addf %1482, %1483 : vector<8x32xf32>
    %1485 = math.tanh %1484 : vector<8x32xf32>
    %cst_297 = arith.constant dense<0.000000e+00> : vector<8x48xf32>
    %1486 = tpu.matmul %1485, %4, %cst_297 {dimension_numbers = #tpu.dot_dimension_numbers<[1], [0], [0], [1], [0, 0, 1, 1], [], []>} : vector<8x32xf32>, vector<32x48xf32>, vector<8x48xf32> -> vector<8x48xf32>
    %1487 = vector.extract_strided_slice %1486 {offsets = [0, 0], sizes = [8, 16], strides = [1, 1]} : vector<8x48xf32> to vector<8x16xf32>
    %1488 = vector.broadcast %16 : vector<1x16xf32> to vector<8x16xf32>
    %1489 = arith.addf %1487, %1488 : vector<8x16xf32>
    %cst_298 = arith.constant dense<0xFF800000> : vector<8xf32>
    %1490 = vector.multi_reduction <maximumf>, %1489, %cst_298 [1] : vector<8x16xf32> to vector<8xf32>
    %1491 = vector.shape_cast %1490 : vector<8xf32> to vector<8x1xf32>
    %1492 = vector.broadcast %1491 : vector<8x1xf32> to vector<8x16xf32>
    %1493 = arith.subf %1489, %1492 : vector<8x16xf32>
    %1494 = math.exp %1493 : vector<8x16xf32>
    %cst_299 = arith.constant dense<0.000000e+00> : vector<8xf32>
    %1495 = vector.multi_reduction <add>, %1494, %cst_299 [1] : vector<8x16xf32> to vector<8xf32>
    %1496 = vector.shape_cast %1495 : vector<8xf32> to vector<8x1xf32>
    %1497 = math.log %1496 : vector<8x1xf32>
    %1498 = vector.broadcast %1491 : vector<8x1xf32> to vector<8x16xf32>
    %1499 = arith.cmpf oeq, %1489, %1498 : vector<8x16xf32>
    %c16_i32_300 = arith.constant 16 : i32
    %1500 = vector.broadcast %c16_i32_300 : i32 to vector<8x16xi32>
    %1501 = arith.select %1499, %24, %1500 : vector<8x16xi1>, vector<8x16xi32>
    %cst_301 = arith.constant dense<2147483647> : vector<8xi32>
    %1502 = vector.multi_reduction <minsi>, %1501, %cst_301 [1] : vector<8x16xi32> to vector<8xi32>
    %1503 = vector.shape_cast %1502 : vector<8xi32> to vector<8x1xi32>
    %cst_302 = arith.constant 0.000000e+00 : f32
    %1504 = vector.broadcast %cst_302 : f32 to vector<8x1xf32>
    %1505 = arith.subf %1504, %1497 : vector<8x1xf32>
    %1506 = arith.mulf %1493, %1494 : vector<8x16xf32>
    %cst_303 = arith.constant dense<0.000000e+00> : vector<8xf32>
    %1507 = vector.multi_reduction <add>, %1506, %cst_303 [1] : vector<8x16xf32> to vector<8xf32>
    %1508 = vector.shape_cast %1507 : vector<8xf32> to vector<8x1xf32>
    %1509 = arith.divf %1508, %1496 : vector<8x1xf32>
    %1510 = arith.subf %1497, %1509 : vector<8x1xf32>
    %1511 = arith.addf %1304, %1510 : vector<8x1xf32>
    %c2_i32_304 = arith.constant 2 : i32
    %1512 = vector.broadcast %c2_i32_304 : i32 to vector<8x1xi32>
    %1513 = arith.select %1309, %1512, %1503 : vector<8x1xi1>, vector<8x1xi32>
    %c0_i32_305 = arith.constant 0 : i32
    %1514 = vector.broadcast %c0_i32_305 : i32 to vector<8x1xi32>
    %1515 = arith.cmpi eq, %1503, %1514 : vector<8x1xi32>
    %1516 = arith.ori %1309, %1515 : vector<8x1xi1>
    %1517 = arith.extui %1516 : vector<8x1xi1> to vector<8x1xi32>
    %1518 = arith.sitofp %1517 : vector<8x1xi32> to vector<8x1xf32>
    %1519 = arith.addf %1312, %1518 : vector<8x1xf32>
    %c7_i32_306 = arith.constant 7 : i32
    %1520 = vector.broadcast %c7_i32_306 : i32 to vector<8x8xi32>
    %1521 = arith.cmpi eq, %23, %1520 : vector<8x8xi32>
    %1522 = vector.shape_cast %1513 : vector<8x1xi32> to vector<8x1xi32>
    %1523 = vector.broadcast %1522 : vector<8x1xi32> to vector<8x8xi32>
    %1524 = arith.select %1521, %1523, %1317 : vector<8x8xi1>, vector<8x8xi32>
    %1525 = vector.shape_cast %1505 : vector<8x1xf32> to vector<8x1xf32>
    %1526 = vector.broadcast %1525 : vector<8x1xf32> to vector<8x8xf32>
    %1527 = arith.select %1521, %1526, %1320 : vector<8x8xi1>, vector<8x8xf32>
    %cst_307 = arith.constant 1.250000e-01 : f32
    %1528 = vector.broadcast %cst_307 : f32 to vector<8x1xf32>
    %1529 = arith.mulf %1511, %1528 : vector<8x1xf32>
    %cst_308 = arith.constant 8.000000e+00 : f32
    %1530 = vector.broadcast %cst_308 : f32 to vector<8x1xf32>
    %1531 = arith.subf %1530, %1519 : vector<8x1xf32>
    %cst_309 = arith.constant 1.000000e+00 : f32
    %1532 = vector.broadcast %cst_309 : f32 to vector<8x1xf32>
    %1533 = arith.addf %1531, %1532 : vector<8x1xf32>
    %cst_310 = arith.constant 8.000000e+00 : f32
    %1534 = vector.broadcast %cst_310 : f32 to vector<8x1xf32>
    %1535 = arith.minimumf %1533, %1534 : vector<8x1xf32>
    %1536 = vector.extract_strided_slice %1524 {offsets = [0, 0], sizes = [8, 1], strides = [1, 1]} : vector<8x8xi32> to vector<8x1xi32>
    %1537 = vector.broadcast %1536 : vector<8x1xi32> to vector<8x16xi32>
    %1538 = arith.cmpi eq, %24, %1537 : vector<8x16xi32>
    %1539 = arith.extui %1538 : vector<8x16xi1> to vector<8x16xi32>
    %1540 = arith.sitofp %1539 : vector<8x16xi32> to vector<8x16xf32>
    %1541 = vector.extract_strided_slice %1524 {offsets = [0, 1], sizes = [8, 1], strides = [1, 1]} : vector<8x8xi32> to vector<8x1xi32>
    %1542 = vector.broadcast %1541 : vector<8x1xi32> to vector<8x16xi32>
    %1543 = arith.cmpi eq, %24, %1542 : vector<8x16xi32>
    %1544 = arith.extui %1543 : vector<8x16xi1> to vector<8x16xi32>
    %1545 = arith.sitofp %1544 : vector<8x16xi32> to vector<8x16xf32>
    %1546 = vector.extract_strided_slice %1524 {offsets = [0, 2], sizes = [8, 1], strides = [1, 1]} : vector<8x8xi32> to vector<8x1xi32>
    %1547 = vector.broadcast %1546 : vector<8x1xi32> to vector<8x16xi32>
    %1548 = arith.cmpi eq, %24, %1547 : vector<8x16xi32>
    %1549 = arith.extui %1548 : vector<8x16xi1> to vector<8x16xi32>
    %1550 = arith.sitofp %1549 : vector<8x16xi32> to vector<8x16xf32>
    %1551 = vector.extract_strided_slice %1524 {offsets = [0, 3], sizes = [8, 1], strides = [1, 1]} : vector<8x8xi32> to vector<8x1xi32>
    %1552 = vector.broadcast %1551 : vector<8x1xi32> to vector<8x16xi32>
    %1553 = arith.cmpi eq, %24, %1552 : vector<8x16xi32>
    %1554 = arith.extui %1553 : vector<8x16xi1> to vector<8x16xi32>
    %1555 = arith.sitofp %1554 : vector<8x16xi32> to vector<8x16xf32>
    %1556 = vector.extract_strided_slice %1524 {offsets = [0, 4], sizes = [8, 1], strides = [1, 1]} : vector<8x8xi32> to vector<8x1xi32>
    %1557 = vector.broadcast %1556 : vector<8x1xi32> to vector<8x16xi32>
    %1558 = arith.cmpi eq, %24, %1557 : vector<8x16xi32>
    %1559 = arith.extui %1558 : vector<8x16xi1> to vector<8x16xi32>
    %1560 = arith.sitofp %1559 : vector<8x16xi32> to vector<8x16xf32>
    %1561 = vector.extract_strided_slice %1524 {offsets = [0, 5], sizes = [8, 1], strides = [1, 1]} : vector<8x8xi32> to vector<8x1xi32>
    %1562 = vector.broadcast %1561 : vector<8x1xi32> to vector<8x16xi32>
    %1563 = arith.cmpi eq, %24, %1562 : vector<8x16xi32>
    %1564 = arith.extui %1563 : vector<8x16xi1> to vector<8x16xi32>
    %1565 = arith.sitofp %1564 : vector<8x16xi32> to vector<8x16xf32>
    %1566 = vector.extract_strided_slice %1524 {offsets = [0, 6], sizes = [8, 1], strides = [1, 1]} : vector<8x8xi32> to vector<8x1xi32>
    %1567 = vector.broadcast %1566 : vector<8x1xi32> to vector<8x16xi32>
    %1568 = arith.cmpi eq, %24, %1567 : vector<8x16xi32>
    %1569 = arith.extui %1568 : vector<8x16xi1> to vector<8x16xi32>
    %1570 = arith.sitofp %1569 : vector<8x16xi32> to vector<8x16xf32>
    %1571 = vector.extract_strided_slice %1524 {offsets = [0, 7], sizes = [8, 1], strides = [1, 1]} : vector<8x8xi32> to vector<8x1xi32>
    %1572 = vector.broadcast %1571 : vector<8x1xi32> to vector<8x16xi32>
    %1573 = arith.cmpi eq, %24, %1572 : vector<8x16xi32>
    %1574 = arith.extui %1573 : vector<8x16xi1> to vector<8x16xi32>
    %1575 = arith.sitofp %1574 : vector<8x16xi32> to vector<8x16xf32>
    %1576 = tpu.concatenate %1540, %1545, %1550, %1555, %1560, %1565, %1570, %1575 in 0 : vector<8x16xf32>, vector<8x16xf32>, vector<8x16xf32>, vector<8x16xf32>, vector<8x16xf32>, vector<8x16xf32>, vector<8x16xf32>, vector<8x16xf32> -> vector<64x16xf32>
    %cst_311 = arith.constant dense<0.000000e+00> : vector<64x32xf32>
    %1577 = tpu.matmul %1576, %8, %cst_311 {dimension_numbers = #tpu.dot_dimension_numbers<[1], [0], [0], [1], [0, 0, 1, 1], [], []>} : vector<64x16xf32>, vector<16x32xf32>, vector<64x32xf32> -> vector<64x32xf32>
    %1578 = vector.extract_strided_slice %1577 {offsets = [0, 0], sizes = [8, 32], strides = [1, 1]} : vector<64x32xf32> to vector<8x32xf32>
    %1579 = vector.broadcast %17 : vector<1x32xf32> to vector<8x32xf32>
    %1580 = arith.addf %1578, %1579 : vector<8x32xf32>
    %1581 = math.tanh %1580 : vector<8x32xf32>
    %cst_312 = arith.constant dense<0.000000e+00> : vector<8x32xf32>
    %1582 = tpu.matmul %1581, %10, %cst_312 {dimension_numbers = #tpu.dot_dimension_numbers<[1], [0], [0], [1], [0, 0, 1, 1], [], []>} : vector<8x32xf32>, vector<32x32xf32>, vector<8x32xf32> -> vector<8x32xf32>
    %1583 = vector.extract_strided_slice %1577 {offsets = [8, 0], sizes = [8, 32], strides = [1, 1]} : vector<64x32xf32> to vector<8x32xf32>
    %1584 = arith.addf %1582, %1583 : vector<8x32xf32>
    %1585 = vector.broadcast %17 : vector<1x32xf32> to vector<8x32xf32>
    %1586 = arith.addf %1584, %1585 : vector<8x32xf32>
    %1587 = math.tanh %1586 : vector<8x32xf32>
    %cst_313 = arith.constant dense<0.000000e+00> : vector<8x32xf32>
    %1588 = tpu.matmul %1587, %10, %cst_313 {dimension_numbers = #tpu.dot_dimension_numbers<[1], [0], [0], [1], [0, 0, 1, 1], [], []>} : vector<8x32xf32>, vector<32x32xf32>, vector<8x32xf32> -> vector<8x32xf32>
    %1589 = vector.extract_strided_slice %1577 {offsets = [16, 0], sizes = [8, 32], strides = [1, 1]} : vector<64x32xf32> to vector<8x32xf32>
    %1590 = arith.addf %1588, %1589 : vector<8x32xf32>
    %1591 = vector.broadcast %17 : vector<1x32xf32> to vector<8x32xf32>
    %1592 = arith.addf %1590, %1591 : vector<8x32xf32>
    %1593 = math.tanh %1592 : vector<8x32xf32>
    %cst_314 = arith.constant dense<0.000000e+00> : vector<8x32xf32>
    %1594 = tpu.matmul %1593, %10, %cst_314 {dimension_numbers = #tpu.dot_dimension_numbers<[1], [0], [0], [1], [0, 0, 1, 1], [], []>} : vector<8x32xf32>, vector<32x32xf32>, vector<8x32xf32> -> vector<8x32xf32>
    %1595 = vector.extract_strided_slice %1577 {offsets = [24, 0], sizes = [8, 32], strides = [1, 1]} : vector<64x32xf32> to vector<8x32xf32>
    %1596 = arith.addf %1594, %1595 : vector<8x32xf32>
    %1597 = vector.broadcast %17 : vector<1x32xf32> to vector<8x32xf32>
    %1598 = arith.addf %1596, %1597 : vector<8x32xf32>
    %1599 = math.tanh %1598 : vector<8x32xf32>
    %cst_315 = arith.constant dense<0.000000e+00> : vector<8x32xf32>
    %1600 = tpu.matmul %1599, %10, %cst_315 {dimension_numbers = #tpu.dot_dimension_numbers<[1], [0], [0], [1], [0, 0, 1, 1], [], []>} : vector<8x32xf32>, vector<32x32xf32>, vector<8x32xf32> -> vector<8x32xf32>
    %1601 = vector.extract_strided_slice %1577 {offsets = [32, 0], sizes = [8, 32], strides = [1, 1]} : vector<64x32xf32> to vector<8x32xf32>
    %1602 = arith.addf %1600, %1601 : vector<8x32xf32>
    %1603 = vector.broadcast %17 : vector<1x32xf32> to vector<8x32xf32>
    %1604 = arith.addf %1602, %1603 : vector<8x32xf32>
    %1605 = math.tanh %1604 : vector<8x32xf32>
    %cst_316 = arith.constant dense<0.000000e+00> : vector<8x32xf32>
    %1606 = tpu.matmul %1605, %10, %cst_316 {dimension_numbers = #tpu.dot_dimension_numbers<[1], [0], [0], [1], [0, 0, 1, 1], [], []>} : vector<8x32xf32>, vector<32x32xf32>, vector<8x32xf32> -> vector<8x32xf32>
    %1607 = vector.extract_strided_slice %1577 {offsets = [40, 0], sizes = [8, 32], strides = [1, 1]} : vector<64x32xf32> to vector<8x32xf32>
    %1608 = arith.addf %1606, %1607 : vector<8x32xf32>
    %1609 = vector.broadcast %17 : vector<1x32xf32> to vector<8x32xf32>
    %1610 = arith.addf %1608, %1609 : vector<8x32xf32>
    %1611 = math.tanh %1610 : vector<8x32xf32>
    %cst_317 = arith.constant dense<0.000000e+00> : vector<8x32xf32>
    %1612 = tpu.matmul %1611, %10, %cst_317 {dimension_numbers = #tpu.dot_dimension_numbers<[1], [0], [0], [1], [0, 0, 1, 1], [], []>} : vector<8x32xf32>, vector<32x32xf32>, vector<8x32xf32> -> vector<8x32xf32>
    %1613 = vector.extract_strided_slice %1577 {offsets = [48, 0], sizes = [8, 32], strides = [1, 1]} : vector<64x32xf32> to vector<8x32xf32>
    %1614 = arith.addf %1612, %1613 : vector<8x32xf32>
    %1615 = vector.broadcast %17 : vector<1x32xf32> to vector<8x32xf32>
    %1616 = arith.addf %1614, %1615 : vector<8x32xf32>
    %1617 = math.tanh %1616 : vector<8x32xf32>
    %cst_318 = arith.constant dense<0.000000e+00> : vector<8x32xf32>
    %1618 = tpu.matmul %1617, %10, %cst_318 {dimension_numbers = #tpu.dot_dimension_numbers<[1], [0], [0], [1], [0, 0, 1, 1], [], []>} : vector<8x32xf32>, vector<32x32xf32>, vector<8x32xf32> -> vector<8x32xf32>
    %1619 = vector.extract_strided_slice %1577 {offsets = [56, 0], sizes = [8, 32], strides = [1, 1]} : vector<64x32xf32> to vector<8x32xf32>
    %1620 = arith.addf %1618, %1619 : vector<8x32xf32>
    %1621 = vector.broadcast %17 : vector<1x32xf32> to vector<8x32xf32>
    %1622 = arith.addf %1620, %1621 : vector<8x32xf32>
    %1623 = math.tanh %1622 : vector<8x32xf32>
    %cst_319 = arith.constant dense<0.000000e+00> : vector<8x16xf32>
    %1624 = tpu.matmul %1623, %12, %cst_319 {dimension_numbers = #tpu.dot_dimension_numbers<[1], [0], [0], [1], [0, 0, 1, 1], [], []>} : vector<8x32xf32>, vector<32x16xf32>, vector<8x16xf32> -> vector<8x16xf32>
    %1625 = vector.broadcast %18 : vector<1x16xf32> to vector<8x16xf32>
    %1626 = arith.addf %1624, %1625 : vector<8x16xf32>
    %cst_320 = arith.constant dense<0xFF800000> : vector<8xf32>
    %1627 = vector.multi_reduction <maximumf>, %1626, %cst_320 [1] : vector<8x16xf32> to vector<8xf32>
    %1628 = vector.shape_cast %1627 : vector<8xf32> to vector<8x1xf32>
    %1629 = vector.broadcast %1628 : vector<8x1xf32> to vector<8x16xf32>
    %1630 = arith.subf %1626, %1629 : vector<8x16xf32>
    %1631 = math.exp %1630 : vector<8x16xf32>
    %cst_321 = arith.constant dense<0.000000e+00> : vector<8xf32>
    %1632 = vector.multi_reduction <add>, %1631, %cst_321 [1] : vector<8x16xf32> to vector<8xf32>
    %1633 = vector.shape_cast %1632 : vector<8xf32> to vector<8x1xf32>
    %1634 = math.log %1633 : vector<8x1xf32>
    %1635 = vector.broadcast %1634 : vector<8x1xf32> to vector<8x16xf32>
    %1636 = arith.subf %1630, %1635 : vector<8x16xf32>
    %1637 = tpu.iota {dimensions = array<i32: 1>} : vector<8x16xi32>
    %1638 = vector.broadcast %1628 : vector<8x1xf32> to vector<8x16xf32>
    %1639 = arith.cmpf oeq, %1626, %1638 : vector<8x16xf32>
    %c16_i32_322 = arith.constant 16 : i32
    %1640 = vector.broadcast %c16_i32_322 : i32 to vector<8x16xi32>
    %1641 = arith.select %1639, %1637, %1640 : vector<8x16xi1>, vector<8x16xi32>
    %cst_323 = arith.constant dense<2147483647> : vector<8xi32>
    %1642 = vector.multi_reduction <minsi>, %1641, %cst_323 [1] : vector<8x16xi32> to vector<8xi32>
    %1643 = vector.shape_cast %1642 : vector<8xi32> to vector<8x1xi32>
    %1644 = arith.mulf %1630, %1631 : vector<8x16xf32>
    %cst_324 = arith.constant dense<0.000000e+00> : vector<8xf32>
    %1645 = vector.multi_reduction <add>, %1644, %cst_324 [1] : vector<8x16xf32> to vector<8xf32>
    %1646 = vector.shape_cast %1645 : vector<8xf32> to vector<8x1xf32>
    %1647 = arith.divf %1646, %1633 : vector<8x1xf32>
    %1648 = arith.subf %1634, %1647 : vector<8x1xf32>
    %cst_325 = arith.constant 0.000000e+00 : f32
    %1649 = vector.broadcast %cst_325 : f32 to vector<8x128xf32>
    %c0_326 = arith.constant 0 : index
    %c0_327 = arith.constant 0 : index
    %1650 = vector.load %arg3[%c0_326, %c0_327] : memref<8x128xf32, #tpu.memory_space<vmem>>, vector<8x128xf32>
    tpu.vector_store %arg3[%c0_326, %c0_327], %1649 {strides = array<i32>} : memref<8x128xf32, #tpu.memory_space<vmem>>, vector<8x128xf32>,
    %c0_328 = arith.constant 0 : index
    %c0_329 = arith.constant 0 : index
    %1651 = vector.load %arg3[%c0_328, %c0_329] : memref<8x128xf32, #tpu.memory_space<vmem>>, vector<8x8xf32>
    tpu.vector_store %arg3[%c0_328, %c0_329], %1527 {strides = array<i32>} : memref<8x128xf32, #tpu.memory_space<vmem>>, vector<8x8xf32>,
    %1652 = arith.sitofp %1524 : vector<8x8xi32> to vector<8x8xf32>
    %c0_330 = arith.constant 0 : index
    %c8 = arith.constant 8 : index
    %1653 = vector.load %arg3[%c0_330, %c8] : memref<8x128xf32, #tpu.memory_space<vmem>>, vector<8x8xf32>
    tpu.vector_store %arg3[%c0_330, %c8], %1652 {strides = array<i32>} : memref<8x128xf32, #tpu.memory_space<vmem>>, vector<8x8xf32>,
    %c0_331 = arith.constant 0 : index
    %c16_332 = arith.constant 16 : index
    %1654 = vector.load %arg3[%c0_331, %c16_332] : memref<8x128xf32, #tpu.memory_space<vmem>>, vector<8x1xf32>
    tpu.vector_store %arg3[%c0_331, %c16_332], %1535 {strides = array<i32>} : memref<8x128xf32, #tpu.memory_space<vmem>>, vector<8x1xf32>,
    %c0_333 = arith.constant 0 : index
    %c17 = arith.constant 17 : index
    %1655 = vector.load %arg3[%c0_333, %c17] : memref<8x128xf32, #tpu.memory_space<vmem>>, vector<8x1xf32>
    tpu.vector_store %arg3[%c0_333, %c17], %1529 {strides = array<i32>} : memref<8x128xf32, #tpu.memory_space<vmem>>, vector<8x1xf32>,
    %1656 = arith.sitofp %1643 : vector<8x1xi32> to vector<8x1xf32>
    %c0_334 = arith.constant 0 : index
    %c18 = arith.constant 18 : index
    %1657 = vector.load %arg3[%c0_334, %c18] : memref<8x128xf32, #tpu.memory_space<vmem>>, vector<8x1xf32>
    tpu.vector_store %arg3[%c0_334, %c18], %1656 {strides = array<i32>} : memref<8x128xf32, #tpu.memory_space<vmem>>, vector<8x1xf32>,
    %c0_335 = arith.constant 0 : index
    %c19 = arith.constant 19 : index
    %1658 = vector.load %arg3[%c0_335, %c19] : memref<8x128xf32, #tpu.memory_space<vmem>>, vector<8x1xf32>
    tpu.vector_store %arg3[%c0_335, %c19], %1648 {strides = array<i32>} : memref<8x128xf32, #tpu.memory_space<vmem>>, vector<8x1xf32>,
    %c0_336 = arith.constant 0 : index
    %c32 = arith.constant 32 : index
    %1659 = vector.load %arg3[%c0_336, %c32] : memref<8x128xf32, #tpu.memory_space<vmem>>, vector<8x16xf32>
    tpu.vector_store %arg3[%c0_336, %c32], %1636 {strides = array<i32>} : memref<8x128xf32, #tpu.memory_space<vmem>>, vector<8x16xf32>,
    %c0_337 = arith.constant 0 : index
    %c48_338 = arith.constant 48 : index
    %1660 = vector.load %arg3[%c0_337, %c48_338] : memref<8x128xf32, #tpu.memory_space<vmem>>, vector<8x16xf32>
    tpu.vector_store %arg3[%c0_337, %c48_338], %1626 {strides = array<i32>} : memref<8x128xf32, #tpu.memory_space<vmem>>, vector<8x16xf32>,
    return
  }
  func.func @transform_0(%arg0: i32) -> (i32, i32) {
    %c0_i32 = arith.constant 0 : i32
    %c0_i32_0 = arith.constant 0 : i32
    return %arg0, %c0_i32 : i32, i32
  }
  func.func @transform_1(%arg0: i32) -> (i32, i32) {
    %c0_i32 = arith.constant 0 : i32
    %c0_i32_0 = arith.constant 0 : i32
    %c0_i32_1 = arith.constant 0 : i32
    return %c0_i32, %c0_i32_0 : i32, i32
  }
  func.func @transform_2(%arg0: i32) -> (i32, i32) {
    %c0_i32 = arith.constant 0 : i32
    %c0_i32_0 = arith.constant 0 : i32
    return %arg0, %c0_i32 : i32, i32
  }
}

</mosaic_0001>

<llo_original>
// kernel: speaker_listener_forward.1
$region0: #{speaker_listener_forward.1}
  #allocation0 [shape = 'u32[]', space=smem, size = 0x4, offset = 0x4, fixed_abs, tag = 'smem constant byte address 0x4 - core index']
  #allocation1 [shape = 'u32[72,128]{1,0:T(1,128)}', space=vmem, size = 0x9000, scoped, tag = 'internal scratch']
  %s0 = inlined_call_operand.hbm [shape: f32[8,16], index: 0, kind: input, shape index: {}]
  %s1 = inlined_call_operand.hbm [shape: f32[152,128], index: 1, kind: input, shape index: {}]
  %s2 = inlined_call_operand.vmem [shape: f32[8,128], index: 2, kind: output, shape index: {}]
  %s3 = sld [smem:[#allocation0]]
  $region26: #{speaker_listener_forward.1} parent=0
    _
  %s5 = ssub.s32 1, %s3
  %s6 = scalar_select 0, %s5, %s3
  $region1: #{speaker_listener_forward.1} parent=0
    #allocation2 [shape = 'u8[4096]{0}', space=vmem, size = 0x1000, scoped, tag = 'input window, operand 0, single buffered']
    #allocation3 [shape = 's32[1]{0}', space=sflag, size = 0x4, scoped, tag = 'scoped memory for speaker_listener_forward.1']
    #allocation4 [shape = 'u8[77824]{0}', space=vmem, size = 0x13000, scoped, tag = 'input window, operand 1, single buffered']
    #allocation5 [shape = 's32[1]{0}', space=sflag, size = 0x4, scoped, tag = 'scoped memory for speaker_listener_forward.1']
    %7 = vsyncpa [#allocation3], 0
    %8 = vsyncpa [#allocation5], 0
    // Predicated region
    $region2: #{speaker_listener_forward.1} parent=1 // pred_check
      _
    $region3: #{speaker_listener_forward.1} parent=1 // pred_check_branch
      %10 = sbr.rel (0) target = $region5
    $region4: #{speaker_listener_forward.1} parent=1 // pred_region
      %12 = vsyncadd [#allocation3], 0
      %s14 = sshll.u32 %s0, 4
      %s15 = int_to_ptr.hbm [resolvable:$true] %s14
      %s16 = sshll.u32 [#allocation2], 4
      %s17 = int_to_ptr.vmem [resolvable:$true] %s16
      %19 = dma.hbm_to_vmem [thread:$0]  %s15, 128, %s17, [#allocation3]
    $region5: #{speaker_listener_forward.1} parent=1 // pred_fallthru
      _
    // Predicated region
    $region6: #{speaker_listener_forward.1} parent=1 // pred_check
      _
    $region7: #{speaker_listener_forward.1} parent=1 // pred_check_branch
      %21 = sbr.rel (0) target = $region9
    $region8: #{speaker_listener_forward.1} parent=1 // pred_region
      %23 = vsyncadd [#allocation5], 0
      %s24 = sshll.u32 %s1, 4
      %s25 = int_to_ptr.hbm [resolvable:$true] %s24
      %s26 = sshll.u32 [#allocation4], 4
      %s27 = int_to_ptr.vmem [resolvable:$true] %s26
      %32 = dma.hbm_to_vmem [thread:$0]  %s25, 2432, %s27, [#allocation5], 128, 128, 8
    $region9: #{speaker_listener_forward.1} parent=1 // pred_fallthru
      _
    // Predicated region
    $region10: #{speaker_listener_forward.1} parent=1 // pred_check
      _
    $region11: #{speaker_listener_forward.1} parent=1 // pred_check_branch
      %34 = sbr.rel (0) target = $region13
    $region12: #{speaker_listener_forward.1} parent=1 // pred_region
      %36 = dma.done [#allocation3], 128
    $region13: #{speaker_listener_forward.1} parent=1 // pred_fallthru
      _
    // Predicated region
    $region14: #{speaker_listener_forward.1} parent=1 // pred_check
      _
    $region15: #{speaker_listener_forward.1} parent=1 // pred_check_branch
      %38 = sbr.rel (0) target = $region17
    $region16: #{speaker_listener_forward.1} parent=1 // pred_region
      %40 = dma.done [#allocation5], 2432
    $region17: #{speaker_listener_forward.1} parent=1 // pred_fallthru
      _
    %v41 = vld [vmem:[#allocation2] sm:$0xff]
    %v42 = vld [vmem:[#allocation4] sm:$0xff]
    %v43 = vld [vmem:[#allocation4 + $0x8] sm:$0xff]
    %v44 = vld [vmem:[#allocation4 + $0x10] sm:$0xff]
    %v45 = vld [vmem:[#allocation4 + $0x18] sm:$0xff]
    %v46 = vld [vmem:[#allocation4 + $0x20] sm:$0xff]
    %v47 = vld [vmem:[#allocation4 + $0x28] sm:$0xff]
    %v48 = vld [vmem:[#allocation4 + $0x30] sm:$0xff]
    %v49 = vld [vmem:[#allocation4 + $0x38] sm:$0xff]
    %v50 = vld [vmem:[#allocation4 + $0x40] sm:$0xff]
    %v51 = vld [vmem:[#allocation4 + $0x48] sm:$0xff]
    %v52 = vld [vmem:[#allocation4 + $0x50] sm:$0xff]
    %v53 = vld [vmem:[#allocation4 + $0x58] sm:$0xff]
    %v54 = vld [vmem:[#allocation4 + $0x60] sm:$0xff]
    %v55 = vld [vmem:[#allocation4 + $0x68] sm:$0xff]
    %v56 = vld [vmem:[#allocation4 + $0x70] sm:$0xff]
    %v57 = vld [vmem:[#allocation4 + $0x78] sm:$0xff]
    %v58 = vld [vmem:[#allocation4 + $0x80] sm:$0xff]
    %v59 = vld [vmem:[#allocation4 + $0x88] sm:$0xff]
    %v60 = vld [vmem:[#allocation4 + $0x90] sm:$0xff]
    %v61 = vperm.slane %v60, 0
    %vm62 = vcmask 130048
    %v64 = vsel %vm62, %v41, 0
    %66 = vmatpush.msra.mxu0 0.0
    %67 = vmatpush.msra.mxu0 0.0
    %68 = vmatpush.msra.mxu0 0.0
    %69 = vmatpush.msra.mxu0 0.0
    %70 = vmatpush.msra.mxu0 0.0
    %71 = vmatpush.msra.mxu0 0.0
    %72 = vmatpush.msra.mxu0 0.0
    %73 = vmatpush.msra.mxu0 0.0
    %74 = vmatpush.msra.mxu0 0.0
    %75 = vmatpush.msra.mxu0 0.0
    %76 = vmatpush.msra.mxu0 0.0
    %77 = vmatpush.msra.mxu0 0.0
    %78 = vmatpush.msra.mxu0 0.0
    %79 = vmatpush.msra.mxu0 0.0
    %80 = vmatpush.msra.mxu0 %v43
    %81 = vmatpush.msra.mxu0 %v42
    %82 = vmatmul.f32.gmra.mxu0 %v64
    %v83 = vpop.f32.mrf.mxu0
    %v84 = vadd.f32 %v61, %v83
    %85 = vdwg.mxu0
    %v86 = vtanh.pop %v84
    %v87 = vlaneseq
    %v88 = vand.u32 %v87, 127
    %vm89 = vcmask 261120
    %v91 = vsel %vm89, %v86, 0
    %93 = vmatpush.msra.mxu0 0.0
    %94 = vmatpush.msra.mxu0 0.0
    %95 = vmatpush.msra.mxu0 0.0
    %96 = vmatpush.msra.mxu0 0.0
    %97 = vmatpush.msra.mxu0 0.0
    %98 = vmatpush.msra.mxu0 0.0
    %99 = vmatpush.msra.mxu0 0.0
    %100 = vmatpush.msra.mxu0 0.0
    %101 = vmatpush.msra.mxu0 0.0
    %102 = vmatpush.msra.mxu0 0.0
    %103 = vmatpush.msra.mxu0 0.0
    %104 = vmatpush.msra.mxu0 0.0
    %105 = vmatpush.msra.mxu0 %v47
    %106 = vmatpush.msra.mxu0 %v46
    %107 = vmatpush.msra.mxu0 %v45
    %108 = vmatpush.msra.mxu0 %v44
    %109 = vmatmul.f32.gmra.mxu0 %v91
    %v110 = vpop.f32.mrf.mxu0
    %v111 = vadd.f32 0.0, %v110
    %112 = vdwg.mxu0
    %v113 = vperm.slane %v60, 2
    %v114 = vadd.f32 %v111, %v113
    %v115 = vsel %vm62, %v114, -inf
    %116 = vmax.xlane.f32.xlu0 %v115
    %v117 = vpop.xlane.xlu0 %116
    %v118 = vsub.f32 %v114, %v117
    %v119 = vmul.f32 %v118, 1.442695
    %v120 = vpow.pop %v119
    %v121 = vsel %vm62, %v120, 0.0
    %122 = vadd.xlane.f32.xlu0 %v121
    %v123 = vpop.xlane.xlu0 %122
    %v124 = vlog2.pop %v123
    %v125 = vmul.f32 %v124, 0.6931472
    %vm126 = vcmp.eq.f32.partialorder %v114, %v117
    %v127 = vsel %vm126, %v88, 16
    %v128 = vsel %vm62, %v127, 2147483647
    %v129 = vand.u32 %v128, 65535
    %v130 = vshra.s32 %v128, 16
    %v131 = vcvt.s32.f32 %v129
    %v132 = vcvt.s32.f32 %v130
    %133 = vmin.xlane.f32.xlu0 %v132
    %v134 = vpop.xlane.xlu0 %133
    %vm135 = vcmp.eq.f32.partialorder %v132, %v134
    %v136 = vsel %vm135, %v131, inf
    %137 = vmin.xlane.f32.xlu0 %v136
    %v138 = vpop.xlane.xlu0 %137
    %v139 = vcvt.f32.s32 %v138
    %v140 = vcvt.f32.s32 %v134
    %v141 = vshll.u32 %v140, 16
    %v142 = vadd.s32 %v141, %v139
    %v143 = vsub.f32 0.0, %v125
    %v144 = vmul.f32 %v118, %v120
    %v145 = vsel %vm62, %v144, 0.0
    %146 = vadd.xlane.f32.xlu0 %v145
    %v147 = vpop.xlane.xlu0 %146
    %v148 = vrcp.pop %v123
    %v149 = vmul.f32 %v123, %v148
    %v150 = vsub.f32 1.0, %v149
    %v151 = vmul.f32 %v148, %v150
    %v152 = vadd.f32 %v148, %v151
    %vm153 = vweird.f32 %v123
    %vm154 = vweird.f32 %v148
    %vm155 = vmor %vm153, %vm154
    %v156 = vsel %vm155, %v148, %v152
    %v157 = vand.u32 2147483647, %v123
    %vm158 = vcmp.eq.f32.partialorder %v157, 8.507059e+37
    %v159 = vand.u32 %v123, 2147483648
    %v160 = vor.u32 1.1754944e-38, %v159
    %v161 = vsel %vm158, %v160, %v156
    %v162 = vmul.f32 %v147, %v161
    %v163 = vsub.f32 %v125, %v162
    %v164 = vadd.f32 %v163, 0.0
    %vm165 = vcmp.eq.s32.totalorder %v142, 0
    %v166 = vsel %vm165, 1, 0
    %v167 = vcvt.s32.f32 %v166
    %v168 = vadd.f32 %v167, 0.0
    %vm169 = vcmp.eq.s32.totalorder %v88, 0
    %v170 = vsel %vm169, %v142, 0
    %v171 = vsel %vm169, %v143, 0.0
    %vm172 = vcmp.eq.s32.totalorder %v166, 1
    %v173 = vperm.slane %v48, 0
    %v174 = vsel %vm172, %v173, 0.0
    %v175 = vadd.f32 %v174, 0.0
    %vm176 = vcmp.eq.s32.totalorder %v142, 1
    %v177 = vsel %vm176, 1, 0
    %vm178 = vcmp.eq.s32.totalorder %v177, 1
    %v179 = vperm.slane %v48, 1
    %v180 = vsel %vm178, %v179, 0.0
    %v181 = vadd.f32 %v175, %v180
    %vm182 = vcmp.eq.s32.totalorder %v142, 2
    %v183 = vsel %vm182, 1, 0
    %vm184 = vcmp.eq.s32.totalorder %v183, 1
    %v185 = vperm.slane %v48, 2
    %v186 = vsel %vm184, %v185, 0.0
    %v187 = vadd.f32 %v181, %v186
    %vm188 = vcmp.eq.s32.totalorder %v142, 3
    %v189 = vsel %vm188, 1, 0
    %vm190 = vcmp.eq.s32.totalorder %v189, 1
    %v191 = vperm.slane %v48, 3
    %v192 = vsel %vm190, %v191, 0.0
    %v193 = vadd.f32 %v187, %v192
    %vm194 = vcmp.eq.s32.totalorder %v142, 4
    %v195 = vsel %vm194, 1, 0
    %vm196 = vcmp.eq.s32.totalorder %v195, 1
    %v197 = vperm.slane %v48, 4
    %v198 = vsel %vm196, %v197, 0.0
    %v199 = vadd.f32 %v193, %v198
    %vm200 = vcmp.eq.s32.totalorder %v142, 5
    %v201 = vsel %vm200, 1, 0
    %vm202 = vcmp.eq.s32.totalorder %v201, 1
    %v203 = vperm.slane %v48, 5
    %v204 = vsel %vm202, %v203, 0.0
    %v205 = vadd.f32 %v199, %v204
    %vm206 = vcmp.eq.s32.totalorder %v142, 6
    %v207 = vsel %vm206, 1, 0
    %vm208 = vcmp.eq.s32.totalorder %v207, 1
    %v209 = vperm.slane %v48, 6
    %v210 = vsel %vm208, %v209, 0.0
    %v211 = vadd.f32 %v205, %v210
    %vm212 = vcmp.eq.s32.totalorder %v142, 7
    %v213 = vsel %vm212, 1, 0
    %vm214 = vcmp.eq.s32.totalorder %v213, 1
    %v215 = vperm.slane %v48, 7
    %v216 = vsel %vm214, %v215, 0.0
    %v217 = vadd.f32 %v211, %v216
    %vm218 = vcmp.eq.s32.totalorder %v142, 8
    %v219 = vsel %vm218, 1, 0
    %vm220 = vcmp.eq.s32.totalorder %v219, 1
    %v221 = vperm.slane %v49, 0
    %v222 = vsel %vm220, %v221, 0.0
    %v223 = vadd.f32 %v217, %v222
    %vm224 = vcmp.eq.s32.totalorder %v142, 9
    %v225 = vsel %vm224, 1, 0
    %vm226 = vcmp.eq.s32.totalorder %v225, 1
    %v227 = vperm.slane %v49, 1
    %v228 = vsel %vm226, %v227, 0.0
    %v229 = vadd.f32 %v223, %v228
    %vm230 = vcmp.eq.s32.totalorder %v142, 10
    %v231 = vsel %vm230, 1, 0
    %vm232 = vcmp.eq.s32.totalorder %v231, 1
    %v233 = vperm.slane %v49, 2
    %v234 = vsel %vm232, %v233, 0.0
    %v235 = vadd.f32 %v229, %v234
    %vm236 = vcmp.eq.s32.totalorder %v142, 11
    %v237 = vsel %vm236, 1, 0
    %vm238 = vcmp.eq.s32.totalorder %v237, 1
    %v239 = vperm.slane %v49, 3
    %v240 = vsel %vm238, %v239, 0.0
    %v241 = vadd.f32 %v235, %v240
    %vm242 = vcmp.eq.s32.totalorder %v142, 12
    %v243 = vsel %vm242, 1, 0
    %vm244 = vcmp.eq.s32.totalorder %v243, 1
    %v245 = vperm.slane %v49, 4
    %v246 = vsel %vm244, %v245, 0.0
    %v247 = vadd.f32 %v241, %v246
    %vm248 = vcmp.eq.s32.totalorder %v142, 13
    %v249 = vsel %vm248, 1, 0
    %vm250 = vcmp.eq.s32.totalorder %v249, 1
    %v251 = vperm.slane %v49, 5
    %v252 = vsel %vm250, %v251, 0.0
    %v253 = vadd.f32 %v247, %v252
    %vm254 = vcmp.eq.s32.totalorder %v142, 14
    %v255 = vsel %vm254, 1, 0
    %vm256 = vcmp.eq.s32.totalorder %v255, 1
    %v257 = vperm.slane %v49, 6
    %v258 = vsel %vm256, %v257, 0.0
    %v259 = vadd.f32 %v253, %v258
    %vm260 = vcmp.eq.s32.totalorder %v142, 15
    %v261 = vsel %vm260, 1, 0
    %vm262 = vcmp.eq.s32.totalorder %v261, 1
    %v263 = vperm.slane %v49, 7
    %v264 = vsel %vm262, %v263, 0.0
    %v265 = vadd.f32 %v259, %v264
    %267 = vrot.lane.b32.xlu0 %v265, 16
    %v268 = vpop.permute.xlu0 %267
    %v270 = vadd.f32 %v111, %v268
    %v271 = vperm.slane %v60, 1
    %273 = vrot.lane.b32.xlu0 %v271, 16
    %v274 = vpop.permute.xlu0 %273
    %v276 = vadd.f32 %v270, %v274
    %v277 = vtanh.pop %v276
    %279 = vrot.lane.b32.xlu0 %v277, 112
    %v280 = vpop.permute.xlu0 %279
    %v281 = vsel %vm89, %v280, 0
    %283 = vmatpush.msra.mxu0 0.0
    %284 = vmatpush.msra.mxu0 0.0
    %285 = vmatpush.msra.mxu0 0.0
    %286 = vmatpush.msra.mxu0 0.0
    %287 = vmatpush.msra.mxu0 0.0
    %288 = vmatpush.msra.mxu0 0.0
    %289 = vmatpush.msra.mxu0 0.0
    %290 = vmatpush.msra.mxu0 0.0
    %291 = vmatpush.msra.mxu0 0.0
    %292 = vmatpush.msra.mxu0 0.0
    %293 = vmatpush.msra.mxu0 0.0
    %294 = vmatpush.msra.mxu0 0.0
    %295 = vmatpush.msra.mxu0 %v47
    %296 = vmatpush.msra.mxu0 %v46
    %297 = vmatpush.msra.mxu0 %v45
    %298 = vmatpush.msra.mxu0 %v44
    %299 = vmatmul.f32.gmra.mxu0 %v281
    %v300 = vpop.f32.mrf.mxu0
    %v301 = vadd.f32 0.0, %v300
    %302 = vdwg.mxu0
    %v303 = vadd.f32 %v301, %v113
    %v304 = vsel %vm62, %v303, -inf
    %305 = vmax.xlane.f32.xlu0 %v304
    %v306 = vpop.xlane.xlu0 %305
    %v307 = vsub.f32 %v303, %v306
    %v308 = vmul.f32 %v307, 1.442695
    %v309 = vpow.pop %v308
    %v310 = vsel %vm62, %v309, 0.0
    %311 = vadd.xlane.f32.xlu0 %v310
    %v312 = vpop.xlane.xlu0 %311
    %v313 = vlog2.pop %v312
    %v314 = vmul.f32 %v313, 0.6931472
    %vm315 = vcmp.eq.f32.partialorder %v303, %v306
    %v316 = vsel %vm315, %v88, 16
    %v317 = vsel %vm62, %v316, 2147483647
    %v318 = vand.u32 %v317, 65535
    %v319 = vshra.s32 %v317, 16
    %v320 = vcvt.s32.f32 %v318
    %v321 = vcvt.s32.f32 %v319
    %322 = vmin.xlane.f32.xlu0 %v321
    %v323 = vpop.xlane.xlu0 %322
    %vm324 = vcmp.eq.f32.partialorder %v321, %v323
    %v325 = vsel %vm324, %v320, inf
    %326 = vmin.xlane.f32.xlu0 %v325
    %v327 = vpop.xlane.xlu0 %326
    %v328 = vcvt.f32.s32 %v327
    %v329 = vcvt.f32.s32 %v323
    %v330 = vshll.u32 %v329, 16
    %v331 = vadd.s32 %v330, %v328
    %v332 = vsub.f32 0.0, %v314
    %v333 = vmul.f32 %v307, %v309
    %v334 = vsel %vm62, %v333, 0.0
    %335 = vadd.xlane.f32.xlu0 %v334
    %v336 = vpop.xlane.xlu0 %335
    %v337 = vrcp.pop %v312
    %v338 = vmul.f32 %v312, %v337
    %v339 = vsub.f32 1.0, %v338
    %v340 = vmul.f32 %v337, %v339
    %v341 = vadd.f32 %v337, %v340
    %vm342 = vweird.f32 %v312
    %vm343 = vweird.f32 %v337
    %vm344 = vmor %vm342, %vm343
    %v345 = vsel %vm344, %v337, %v341
    %v346 = vand.u32 2147483647, %v312
    %vm347 = vcmp.eq.f32.partialorder %v346, 8.507059e+37
    %v348 = vand.u32 %v312, 2147483648
    %v349 = vor.u32 1.1754944e-38, %v348
    %v350 = vsel %vm347, %v349, %v345
    %v351 = vmul.f32 %v336, %v350
    %v352 = vsub.f32 %v314, %v351
    %v353 = vadd.f32 %v164, %v352
    %v354 = vsel %vm165, 2, %v331
    %vm355 = vcmp.eq.s32.totalorder %v331, 0
    %vm356 = vmor %vm165, %vm355
    %v357 = vsel %vm356, 1, 0
    %v358 = vcvt.s32.f32 %v357
    %v359 = vadd.f32 %v168, %v358
    %vm360 = vcmp.eq.s32.totalorder %v88, 1
    %v361 = vsel %vm360, %v354, %v170
    %v362 = vsel %vm360, %v332, %v171
    %v363 = vsel %vm355, 1, 0
    %vm364 = vcmp.eq.s32.totalorder %v363, 1
    %v365 = vsel %vm364, %v173, 0.0
    %v366 = vadd.f32 %v365, 0.0
    %vm367 = vcmp.eq.s32.totalorder %v331, 1
    %v368 = vsel %vm367, 1, 0
    %vm369 = vcmp.eq.s32.totalorder %v368, 1
    %v370 = vsel %vm369, %v179, 0.0
    %v371 = vadd.f32 %v366, %v370
    %vm372 = vcmp.eq.s32.totalorder %v331, 2
    %v373 = vsel %vm372, 1, 0
    %vm374 = vcmp.eq.s32.totalorder %v373, 1
    %v375 = vsel %vm374, %v185, 0.0
    %v376 = vadd.f32 %v371, %v375
    %vm377 = vcmp.eq.s32.totalorder %v331, 3
    %v378 = vsel %vm377, 1, 0
    %vm379 = vcmp.eq.s32.totalorder %v378, 1
    %v380 = vsel %vm379, %v191, 0.0
    %v381 = vadd.f32 %v376, %v380
    %vm382 = vcmp.eq.s32.totalorder %v331, 4
    %v383 = vsel %vm382, 1, 0
    %vm384 = vcmp.eq.s32.totalorder %v383, 1
    %v385 = vsel %vm384, %v197, 0.0
    %v386 = vadd.f32 %v381, %v385
    %vm387 = vcmp.eq.s32.totalorder %v331, 5
    %v388 = vsel %vm387, 1, 0
    %vm389 = vcmp.eq.s32.totalorder %v388, 1
    %v390 = vsel %vm389, %v203, 0.0
    %v391 = vadd.f32 %v386, %v390
    %vm392 = vcmp.eq.s32.totalorder %v331, 6
    %v393 = vsel %vm392, 1, 0
    %vm394 = vcmp.eq.s32.totalorder %v393, 1
    %v395 = vsel %vm394, %v209, 0.0
    %v396 = vadd.f32 %v391, %v395
    %vm397 = vcmp.eq.s32.totalorder %v331, 7
    %v398 = vsel %vm397, 1, 0
    %vm399 = vcmp.eq.s32.totalorder %v398, 1
    %v400 = vsel %vm399, %v215, 0.0
    %v401 = vadd.f32 %v396, %v400
    %vm402 = vcmp.eq.s32.totalorder %v331, 8
    %v403 = vsel %vm402, 1, 0
    %vm404 = vcmp.eq.s32.totalorder %v403, 1
    %v405 = vsel %vm404, %v221, 0.0
    %v406 = vadd.f32 %v401, %v405
    %vm407 = vcmp.eq.s32.totalorder %v331, 9
    %v408 = vsel %vm407, 1, 0
    %vm409 = vcmp.eq.s32.totalorder %v408, 1
    %v410 = vsel %vm409, %v227, 0.0
    %v411 = vadd.f32 %v406, %v410
    %vm412 = vcmp.eq.s32.totalorder %v331, 10
    %v413 = vsel %vm412, 1, 0
    %vm414 = vcmp.eq.s32.totalorder %v413, 1
    %v415 = vsel %vm414, %v233, 0.0
    %v416 = vadd.f32 %v411, %v415
    %vm417 = vcmp.eq.s32.totalorder %v331, 11
    %v418 = vsel %vm417, 1, 0
    %vm419 = vcmp.eq.s32.totalorder %v418, 1
    %v420 = vsel %vm419, %v239, 0.0
    %v421 = vadd.f32 %v416, %v420
    %vm422 = vcmp.eq.s32.totalorder %v331, 12
    %v423 = vsel %vm422, 1, 0
    %vm424 = vcmp.eq.s32.totalorder %v423, 1
    %v425 = vsel %vm424, %v245, 0.0
    %v426 = vadd.f32 %v421, %v425
    %vm427 = vcmp.eq.s32.totalorder %v331, 13
    %v428 = vsel %vm427, 1, 0
    %vm429 = vcmp.eq.s32.totalorder %v428, 1
    %v430 = vsel %vm429, %v251, 0.0
    %v431 = vadd.f32 %v426, %v430
    %vm432 = vcmp.eq.s32.totalorder %v331, 14
    %v433 = vsel %vm432, 1, 0
    %vm434 = vcmp.eq.s32.totalorder %v433, 1
    %v435 = vsel %vm434, %v257, 0.0
    %v436 = vadd.f32 %v431, %v435
    %vm437 = vcmp.eq.s32.totalorder %v331, 15
    %v438 = vsel %vm437, 1, 0
    %vm439 = vcmp.eq.s32.totalorder %v438, 1
    %v440 = vsel %vm439, %v263, 0.0
    %v441 = vadd.f32 %v436, %v440
    %443 = vrot.lane.b32.xlu0 %v441, 16
    %v444 = vpop.permute.xlu0 %443
    %v446 = vadd.f32 %v301, %v444
    %v447 = vadd.f32 %v446, %v274
    %v448 = vtanh.pop %v447
    %450 = vrot.lane.b32.xlu0 %v448, 112
    %v451 = vpop.permute.xlu0 %450
    %v452 = vsel %vm89, %v451, 0
    %454 = vmatpush.msra.mxu0 0.0
    %455 = vmatpush.msra.mxu0 0.0
    %456 = vmatpush.msra.mxu0 0.0
    %457 = vmatpush.msra.mxu0 0.0
    %458 = vmatpush.msra.mxu0 0.0
    %459 = vmatpush.msra.mxu0 0.0
    %460 = vmatpush.msra.mxu0 0.0
    %461 = vmatpush.msra.mxu0 0.0
    %462 = vmatpush.msra.mxu0 0.0
    %463 = vmatpush.msra.mxu0 0.0
    %464 = vmatpush.msra.mxu0 0.0
    %465 = vmatpush.msra.mxu0 0.0
    %466 = vmatpush.msra.mxu0 %v47
    %467 = vmatpush.msra.mxu0 %v46
    %468 = vmatpush.msra.mxu0 %v45
    %469 = vmatpush.msra.mxu0 %v44
    %470 = vmatmul.f32.gmra.mxu0 %v452
    %v471 = vpop.f32.mrf.mxu0
    %v472 = vadd.f32 0.0, %v471
    %473 = vdwg.mxu0
    %v474 = vadd.f32 %v472, %v113
    %v475 = vsel %vm62, %v474, -inf
    %476 = vmax.xlane.f32.xlu0 %v475
    %v477 = vpop.xlane.xlu0 %476
    %v478 = vsub.f32 %v474, %v477
    %v479 = vmul.f32 %v478, 1.442695
    %v480 = vpow.pop %v479
    %v481 = vsel %vm62, %v480, 0.0
    %482 = vadd.xlane.f32.xlu0 %v481
    %v483 = vpop.xlane.xlu0 %482
    %v484 = vlog2.pop %v483
    %v485 = vmul.f32 %v484, 0.6931472
    %vm486 = vcmp.eq.f32.partialorder %v474, %v477
    %v487 = vsel %vm486, %v88, 16
    %v488 = vsel %vm62, %v487, 2147483647
    %v489 = vand.u32 %v488, 65535
    %v490 = vshra.s32 %v488, 16
    %v491 = vcvt.s32.f32 %v489
    %v492 = vcvt.s32.f32 %v490
    %493 = vmin.xlane.f32.xlu0 %v492
    %v494 = vpop.xlane.xlu0 %493
    %vm495 = vcmp.eq.f32.partialorder %v492, %v494
    %v496 = vsel %vm495, %v491, inf
    %497 = vmin.xlane.f32.xlu0 %v496
    %v498 = vpop.xlane.xlu0 %497
    %v499 = vcvt.f32.s32 %v498
    %v500 = vcvt.f32.s32 %v494
    %v501 = vshll.u32 %v500, 16
    %v502 = vadd.s32 %v501, %v499
    %v503 = vsub.f32 0.0, %v485
    %v504 = vmul.f32 %v478, %v480
    %v505 = vsel %vm62, %v504, 0.0
    %506 = vadd.xlane.f32.xlu0 %v505
    %v507 = vpop.xlane.xlu0 %506
    %v508 = vrcp.pop %v483
    %v509 = vmul.f32 %v483, %v508
    %v510 = vsub.f32 1.0, %v509
    %v511 = vmul.f32 %v508, %v510
    %v512 = vadd.f32 %v508, %v511
    %vm513 = vweird.f32 %v483
    %vm514 = vweird.f32 %v508
    %vm515 = vmor %vm513, %vm514
    %v516 = vsel %vm515, %v508, %v512
    %v517 = vand.u32 2147483647, %v483
    %vm518 = vcmp.eq.f32.partialorder %v517, 8.507059e+37
    %v519 = vand.u32 %v483, 2147483648
    %v520 = vor.u32 1.1754944e-38, %v519
    %v521 = vsel %vm518, %v520, %v516
    %v522 = vmul.f32 %v507, %v521
    %v523 = vsub.f32 %v485, %v522
    %v524 = vadd.f32 %v353, %v523
    %v525 = vsel %vm356, 2, %v502
    %vm526 = vcmp.eq.s32.totalorder %v502, 0
    %vm527 = vmor %vm356, %vm526
    %v528 = vsel %vm527, 1, 0
    %v529 = vcvt.s32.f32 %v528
    %v530 = vadd.f32 %v359, %v529
    %vm531 = vcmp.eq.s32.totalorder %v88, 2
    %v532 = vsel %vm531, %v525, %v361
    %v533 = vsel %vm531, %v503, %v362
    %v534 = vsel %vm526, 1, 0
    %vm535 = vcmp.eq.s32.totalorder %v534, 1
    %v536 = vsel %vm535, %v173, 0.0
    %v537 = vadd.f32 %v536, 0.0
    %vm538 = vcmp.eq.s32.totalorder %v502, 1
    %v539 = vsel %vm538, 1, 0
    %vm540 = vcmp.eq.s32.totalorder %v539, 1
    %v541 = vsel %vm540, %v179, 0.0
    %v542 = vadd.f32 %v537, %v541
    %vm543 = vcmp.eq.s32.totalorder %v502, 2
    %v544 = vsel %vm543, 1, 0
    %vm545 = vcmp.eq.s32.totalorder %v544, 1
    %v546 = vsel %vm545, %v185, 0.0
    %v547 = vadd.f32 %v542, %v546
    %vm548 = vcmp.eq.s32.totalorder %v502, 3
    %v549 = vsel %vm548, 1, 0
    %vm550 = vcmp.eq.s32.totalorder %v549, 1
    %v551 = vsel %vm550, %v191, 0.0
    %v552 = vadd.f32 %v547, %v551
    %vm553 = vcmp.eq.s32.totalorder %v502, 4
    %v554 = vsel %vm553, 1, 0
    %vm555 = vcmp.eq.s32.totalorder %v554, 1
    %v556 = vsel %vm555, %v197, 0.0
    %v557 = vadd.f32 %v552, %v556
    %vm558 = vcmp.eq.s32.totalorder %v502, 5
    %v559 = vsel %vm558, 1, 0
    %vm560 = vcmp.eq.s32.totalorder %v559, 1
    %v561 = vsel %vm560, %v203, 0.0
    %v562 = vadd.f32 %v557, %v561
    %vm563 = vcmp.eq.s32.totalorder %v502, 6
    %v564 = vsel %vm563, 1, 0
    %vm565 = vcmp.eq.s32.totalorder %v564, 1
    %v566 = vsel %vm565, %v209, 0.0
    %v567 = vadd.f32 %v562, %v566
    %vm568 = vcmp.eq.s32.totalorder %v502, 7
    %v569 = vsel %vm568, 1, 0
    %vm570 = vcmp.eq.s32.totalorder %v569, 1
    %v571 = vsel %vm570, %v215, 0.0
    %v572 = vadd.f32 %v567, %v571
    %vm573 = vcmp.eq.s32.totalorder %v502, 8
    %v574 = vsel %vm573, 1, 0
    %vm575 = vcmp.eq.s32.totalorder %v574, 1
    %v576 = vsel %vm575, %v221, 0.0
    %v577 = vadd.f32 %v572, %v576
    %vm578 = vcmp.eq.s32.totalorder %v502, 9
    %v579 = vsel %vm578, 1, 0
    %vm580 = vcmp.eq.s32.totalorder %v579, 1
    %v581 = vsel %vm580, %v227, 0.0
    %v582 = vadd.f32 %v577, %v581
    %vm583 = vcmp.eq.s32.totalorder %v502, 10
    %v584 = vsel %vm583, 1, 0
    %vm585 = vcmp.eq.s32.totalorder %v584, 1
    %v586 = vsel %vm585, %v233, 0.0
    %v587 = vadd.f32 %v582, %v586
    %vm588 = vcmp.eq.s32.totalorder %v502, 11
    %v589 = vsel %vm588, 1, 0
    %vm590 = vcmp.eq.s32.totalorder %v589, 1
    %v591 = vsel %vm590, %v239, 0.0
    %v592 = vadd.f32 %v587, %v591
    %vm593 = vcmp.eq.s32.totalorder %v502, 12
    %v594 = vsel %vm593, 1, 0
    %vm595 = vcmp.eq.s32.totalorder %v594, 1
    %v596 = vsel %vm595, %v245, 0.0
    %v597 = vadd.f32 %v592, %v596
    %vm598 = vcmp.eq.s32.totalorder %v502, 13
    %v599 = vsel %vm598, 1, 0
    %vm600 = vcmp.eq.s32.totalorder %v599, 1
    %v601 = vsel %vm600, %v251, 0.0
    %v602 = vadd.f32 %v597, %v601
    %vm603 = vcmp.eq.s32.totalorder %v502, 14
    %v604 = vsel %vm603, 1, 0
    %vm605 = vcmp.eq.s32.totalorder %v604, 1
    %v606 = vsel %vm605, %v257, 0.0
    %v607 = vadd.f32 %v602, %v606
    %vm608 = vcmp.eq.s32.totalorder %v502, 15
    %v609 = vsel %vm608, 1, 0
    %vm610 = vcmp.eq.s32.totalorder %v609, 1
    %v611 = vsel %vm610, %v263, 0.0
    %v612 = vadd.f32 %v607, %v611
    %614 = vrot.lane.b32.xlu0 %v612, 16
    %v615 = vpop.permute.xlu0 %614
    %v617 = vadd.f32 %v472, %v615
    %v618 = vadd.f32 %v617, %v274
    %v619 = vtanh.pop %v618
    %621 = vrot.lane.b32.xlu0 %v619, 112
    %v622 = vpop.permute.xlu0 %621
    %v623 = vsel %vm89, %v622, 0
    %625 = vmatpush.msra.mxu0 0.0
    %626 = vmatpush.msra.mxu0 0.0
    %627 = vmatpush.msra.mxu0 0.0
    %628 = vmatpush.msra.mxu0 0.0
    %629 = vmatpush.msra.mxu0 0.0
    %630 = vmatpush.msra.mxu0 0.0
    %631 = vmatpush.msra.mxu0 0.0
    %632 = vmatpush.msra.mxu0 0.0
    %633 = vmatpush.msra.mxu0 0.0
    %634 = vmatpush.msra.mxu0 0.0
    %635 = vmatpush.msra.mxu0 0.0
    %636 = vmatpush.msra.mxu0 0.0
    %637 = vmatpush.msra.mxu0 %v47
    %638 = vmatpush.msra.mxu0 %v46
    %639 = vmatpush.msra.mxu0 %v45
    %640 = vmatpush.msra.mxu0 %v44
    %641 = vmatmul.f32.gmra.mxu0 %v623
    %v642 = vpop.f32.mrf.mxu0
    %v643 = vadd.f32 0.0, %v642
    %644 = vdwg.mxu0
    %v645 = vadd.f32 %v643, %v113
    %v646 = vsel %vm62, %v645, -inf
    %647 = vmax.xlane.f32.xlu0 %v646
    %v648 = vpop.xlane.xlu0 %647
    %v649 = vsub.f32 %v645, %v648
    %v650 = vmul.f32 %v649, 1.442695
    %v651 = vpow.pop %v650
    %v652 = vsel %vm62, %v651, 0.0
    %653 = vadd.xlane.f32.xlu0 %v652
    %v654 = vpop.xlane.xlu0 %653
    %v655 = vlog2.pop %v654
    %v656 = vmul.f32 %v655, 0.6931472
    %vm657 = vcmp.eq.f32.partialorder %v645, %v648
    %v658 = vsel %vm657, %v88, 16
    %v659 = vsel %vm62, %v658, 2147483647
    %v660 = vand.u32 %v659, 65535
    %v661 = vshra.s32 %v659, 16
    %v662 = vcvt.s32.f32 %v660
    %v663 = vcvt.s32.f32 %v661
    %664 = vmin.xlane.f32.xlu0 %v663
    %v665 = vpop.xlane.xlu0 %664
    %vm666 = vcmp.eq.f32.partialorder %v663, %v665
    %v667 = vsel %vm666, %v662, inf
    %668 = vmin.xlane.f32.xlu0 %v667
    %v669 = vpop.xlane.xlu0 %668
    %v670 = vcvt.f32.s32 %v669
    %v671 = vcvt.f32.s32 %v665
    %v672 = vshll.u32 %v671, 16
    %v673 = vadd.s32 %v672, %v670
    %v674 = vsub.f32 0.0, %v656
    %v675 = vmul.f32 %v649, %v651
    %v676 = vsel %vm62, %v675, 0.0
    %677 = vadd.xlane.f32.xlu0 %v676
    %v678 = vpop.xlane.xlu0 %677
    %v679 = vrcp.pop %v654
    %v680 = vmul.f32 %v654, %v679
    %v681 = vsub.f32 1.0, %v680
    %v682 = vmul.f32 %v679, %v681
    %v683 = vadd.f32 %v679, %v682
    %vm684 = vweird.f32 %v654
    %vm685 = vweird.f32 %v679
    %vm686 = vmor %vm684, %vm685
    %v687 = vsel %vm686, %v679, %v683
    %v688 = vand.u32 2147483647, %v654
    %vm689 = vcmp.eq.f32.partialorder %v688, 8.507059e+37
    %v690 = vand.u32 %v654, 2147483648
    %v691 = vor.u32 1.1754944e-38, %v690
    %v692 = vsel %vm689, %v691, %v687
    %v693 = vmul.f32 %v678, %v692
    %v694 = vsub.f32 %v656, %v693
    %v695 = vadd.f32 %v524, %v694
    %v696 = vsel %vm527, 2, %v673
    %vm697 = vcmp.eq.s32.totalorder %v673, 0
    %vm698 = vmor %vm527, %vm697
    %v699 = vsel %vm698, 1, 0
    %v700 = vcvt.s32.f32 %v699
    %v701 = vadd.f32 %v530, %v700
    %vm702 = vcmp.eq.s32.totalorder %v88, 3
    %v703 = vsel %vm702, %v696, %v532
    %v704 = vsel %vm702, %v674, %v533
    %v705 = vsel %vm697, 1, 0
    %vm706 = vcmp.eq.s32.totalorder %v705, 1
    %v707 = vsel %vm706, %v173, 0.0
    %v708 = vadd.f32 %v707, 0.0
    %vm709 = vcmp.eq.s32.totalorder %v673, 1
    %v710 = vsel %vm709, 1, 0
    %vm711 = vcmp.eq.s32.totalorder %v710, 1
    %v712 = vsel %vm711, %v179, 0.0
    %v713 = vadd.f32 %v708, %v712
    %vm714 = vcmp.eq.s32.totalorder %v673, 2
    %v715 = vsel %vm714, 1, 0
    %vm716 = vcmp.eq.s32.totalorder %v715, 1
    %v717 = vsel %vm716, %v185, 0.0
    %v718 = vadd.f32 %v713, %v717
    %vm719 = vcmp.eq.s32.totalorder %v673, 3
    %v720 = vsel %vm719, 1, 0
    %vm721 = vcmp.eq.s32.totalorder %v720, 1
    %v722 = vsel %vm721, %v191, 0.0
    %v723 = vadd.f32 %v718, %v722
    %vm724 = vcmp.eq.s32.totalorder %v673, 4
    %v725 = vsel %vm724, 1, 0
    %vm726 = vcmp.eq.s32.totalorder %v725, 1
    %v727 = vsel %vm726, %v197, 0.0
    %v728 = vadd.f32 %v723, %v727
    %vm729 = vcmp.eq.s32.totalorder %v673, 5
    %v730 = vsel %vm729, 1, 0
    %vm731 = vcmp.eq.s32.totalorder %v730, 1
    %v732 = vsel %vm731, %v203, 0.0
    %v733 = vadd.f32 %v728, %v732
    %vm734 = vcmp.eq.s32.totalorder %v673, 6
    %v735 = vsel %vm734, 1, 0
    %vm736 = vcmp.eq.s32.totalorder %v735, 1
    %v737 = vsel %vm736, %v209, 0.0
    %v738 = vadd.f32 %v733, %v737
    %vm739 = vcmp.eq.s32.totalorder %v673, 7
    %v740 = vsel %vm739, 1, 0
    %vm741 = vcmp.eq.s32.totalorder %v740, 1
    %v742 = vsel %vm741, %v215, 0.0
    %v743 = vadd.f32 %v738, %v742
    %vm744 = vcmp.eq.s32.totalorder %v673, 8
    %v745 = vsel %vm744, 1, 0
    %vm746 = vcmp.eq.s32.totalorder %v745, 1
    %v747 = vsel %vm746, %v221, 0.0
    %v748 = vadd.f32 %v743, %v747
    %vm749 = vcmp.eq.s32.totalorder %v673, 9
    %v750 = vsel %vm749, 1, 0
    %vm751 = vcmp.eq.s32.totalorder %v750, 1
    %v752 = vsel %vm751, %v227, 0.0
    %v753 = vadd.f32 %v748, %v752
    %vm754 = vcmp.eq.s32.totalorder %v673, 10
    %v755 = vsel %vm754, 1, 0
    %vm756 = vcmp.eq.s32.totalorder %v755, 1
    %v757 = vsel %vm756, %v233, 0.0
    %v758 = vadd.f32 %v753, %v757
    %vm759 = vcmp.eq.s32.totalorder %v673, 11
    %v760 = vsel %vm759, 1, 0
    %vm761 = vcmp.eq.s32.totalorder %v760, 1
    %v762 = vsel %vm761, %v239, 0.0
    %v763 = vadd.f32 %v758, %v762
    %vm764 = vcmp.eq.s32.totalorder %v673, 12
    %v765 = vsel %vm764, 1, 0
    %vm766 = vcmp.eq.s32.totalorder %v765, 1
    %v767 = vsel %vm766, %v245, 0.0
    %v768 = vadd.f32 %v763, %v767
    %vm769 = vcmp.eq.s32.totalorder %v673, 13
    %v770 = vsel %vm769, 1, 0
    %vm771 = vcmp.eq.s32.totalorder %v770, 1
    %v772 = vsel %vm771, %v251, 0.0
    %v773 = vadd.f32 %v768, %v772
    %vm774 = vcmp.eq.s32.totalorder %v673, 14
    %v775 = vsel %vm774, 1, 0
    %vm776 = vcmp.eq.s32.totalorder %v775, 1
    %v777 = vsel %vm776, %v257, 0.0
    %v778 = vadd.f32 %v773, %v777
    %vm779 = vcmp.eq.s32.totalorder %v673, 15
    %v780 = vsel %vm779, 1, 0
    %vm781 = vcmp.eq.s32.totalorder %v780, 1
    %v782 = vsel %vm781, %v263, 0.0
    %v783 = vadd.f32 %v778, %v782
    %785 = vrot.lane.b32.xlu0 %v783, 16
    %v786 = vpop.permute.xlu0 %785
    %v788 = vadd.f32 %v643, %v786
    %v789 = vadd.f32 %v788, %v274
    %v790 = vtanh.pop %v789
    %792 = vrot.lane.b32.xlu0 %v790, 112
    %v793 = vpop.permute.xlu0 %792
    %v794 = vsel %vm89, %v793, 0
    %796 = vmatpush.msra.mxu0 0.0
    %797 = vmatpush.msra.mxu0 0.0
    %798 = vmatpush.msra.mxu0 0.0
    %799 = vmatpush.msra.mxu0 0.0
    %800 = vmatpush.msra.mxu0 0.0
    %801 = vmatpush.msra.mxu0 0.0
    %802 = vmatpush.msra.mxu0 0.0
    %803 = vmatpush.msra.mxu0 0.0
    %804 = vmatpush.msra.mxu0 0.0
    %805 = vmatpush.msra.mxu0 0.0
    %806 = vmatpush.msra.mxu0 0.0
    %807 = vmatpush.msra.mxu0 0.0
    %808 = vmatpush.msra.mxu0 %v47
    %809 = vmatpush.msra.mxu0 %v46
    %810 = vmatpush.msra.mxu0 %v45
    %811 = vmatpush.msra.mxu0 %v44
    %812 = vmatmul.f32.gmra.mxu0 %v794
    %v813 = vpop.f32.mrf.mxu0
    %v814 = vadd.f32 0.0, %v813
    %815 = vdwg.mxu0
    %v816 = vadd.f32 %v814, %v113
    %v817 = vsel %vm62, %v816, -inf
    %818 = vmax.xlane.f32.xlu0 %v817
    %v819 = vpop.xlane.xlu0 %818
    %v820 = vsub.f32 %v816, %v819
    %v821 = vmul.f32 %v820, 1.442695
    %v822 = vpow.pop %v821
    %v823 = vsel %vm62, %v822, 0.0
    %824 = vadd.xlane.f32.xlu0 %v823
    %v825 = vpop.xlane.xlu0 %824
    %v826 = vlog2.pop %v825
    %v827 = vmul.f32 %v826, 0.6931472
    %vm828 = vcmp.eq.f32.partialorder %v816, %v819
    %v829 = vsel %vm828, %v88, 16
    %v830 = vsel %vm62, %v829, 2147483647
    %v831 = vand.u32 %v830, 65535
    %v832 = vshra.s32 %v830, 16
    %v833 = vcvt.s32.f32 %v831
    %v834 = vcvt.s32.f32 %v832
    %835 = vmin.xlane.f32.xlu0 %v834
    %v836 = vpop.xlane.xlu0 %835
    %vm837 = vcmp.eq.f32.partialorder %v834, %v836
    %v838 = vsel %vm837, %v833, inf
    %839 = vmin.xlane.f32.xlu0 %v838
    %v840 = vpop.xlane.xlu0 %839
    %v841 = vcvt.f32.s32 %v840
    %v842 = vcvt.f32.s32 %v836
    %v843 = vshll.u32 %v842, 16
    %v844 = vadd.s32 %v843, %v841
    %v845 = vsub.f32 0.0, %v827
    %v846 = vmul.f32 %v820, %v822
    %v847 = vsel %vm62, %v846, 0.0
    %848 = vadd.xlane.f32.xlu0 %v847
    %v849 = vpop.xlane.xlu0 %848
    %v850 = vrcp.pop %v825
    %v851 = vmul.f32 %v825, %v850
    %v852 = vsub.f32 1.0, %v851
    %v853 = vmul.f32 %v850, %v852
    %v854 = vadd.f32 %v850, %v853
    %vm855 = vweird.f32 %v825
    %vm856 = vweird.f32 %v850
    %vm857 = vmor %vm855, %vm856
    %v858 = vsel %vm857, %v850, %v854
    %v859 = vand.u32 2147483647, %v825
    %vm860 = vcmp.eq.f32.partialorder %v859, 8.507059e+37
    %v861 = vand.u32 %v825, 2147483648
    %v862 = vor.u32 1.1754944e-38, %v861
    %v863 = vsel %vm860, %v862, %v858
    %v864 = vmul.f32 %v849, %v863
    %v865 = vsub.f32 %v827, %v864
    %v866 = vadd.f32 %v695, %v865
    %v867 = vsel %vm698, 2, %v844
    %vm868 = vcmp.eq.s32.totalorder %v844, 0
    %vm869 = vmor %vm698, %vm868
    %v870 = vsel %vm869, 1, 0
    %v871 = vcvt.s32.f32 %v870
    %v872 = vadd.f32 %v701, %v871
    %vm873 = vcmp.eq.s32.totalorder %v88, 4
    %v874 = vsel %vm873, %v867, %v703
    %v875 = vsel %vm873, %v845, %v704
    %v876 = vsel %vm868, 1, 0
    %vm877 = vcmp.eq.s32.totalorder %v876, 1
    %v878 = vsel %vm877, %v173, 0.0
    %v879 = vadd.f32 %v878, 0.0
    %vm880 = vcmp.eq.s32.totalorder %v844, 1
    %v881 = vsel %vm880, 1, 0
    %vm882 = vcmp.eq.s32.totalorder %v881, 1
    %v883 = vsel %vm882, %v179, 0.0
    %v884 = vadd.f32 %v879, %v883
    %vm885 = vcmp.eq.s32.totalorder %v844, 2
    %v886 = vsel %vm885, 1, 0
    %vm887 = vcmp.eq.s32.totalorder %v886, 1
    %v888 = vsel %vm887, %v185, 0.0
    %v889 = vadd.f32 %v884, %v888
    %vm890 = vcmp.eq.s32.totalorder %v844, 3
    %v891 = vsel %vm890, 1, 0
    %vm892 = vcmp.eq.s32.totalorder %v891, 1
    %v893 = vsel %vm892, %v191, 0.0
    %v894 = vadd.f32 %v889, %v893
    %vm895 = vcmp.eq.s32.totalorder %v844, 4
    %v896 = vsel %vm895, 1, 0
    %vm897 = vcmp.eq.s32.totalorder %v896, 1
    %v898 = vsel %vm897, %v197, 0.0
    %v899 = vadd.f32 %v894, %v898
    %vm900 = vcmp.eq.s32.totalorder %v844, 5
    %v901 = vsel %vm900, 1, 0
    %vm902 = vcmp.eq.s32.totalorder %v901, 1
    %v903 = vsel %vm902, %v203, 0.0
    %v904 = vadd.f32 %v899, %v903
    %vm905 = vcmp.eq.s32.totalorder %v844, 6
    %v906 = vsel %vm905, 1, 0
    %vm907 = vcmp.eq.s32.totalorder %v906, 1
    %v908 = vsel %vm907, %v209, 0.0
    %v909 = vadd.f32 %v904, %v908
    %vm910 = vcmp.eq.s32.totalorder %v844, 7
    %v911 = vsel %vm910, 1, 0
    %vm912 = vcmp.eq.s32.totalorder %v911, 1
    %v913 = vsel %vm912, %v215, 0.0
    %v914 = vadd.f32 %v909, %v913
    %vm915 = vcmp.eq.s32.totalorder %v844, 8
    %v916 = vsel %vm915, 1, 0
    %vm917 = vcmp.eq.s32.totalorder %v916, 1
    %v918 = vsel %vm917, %v221, 0.0
    %v919 = vadd.f32 %v914, %v918
    %vm920 = vcmp.eq.s32.totalorder %v844, 9
    %v921 = vsel %vm920, 1, 0
    %vm922 = vcmp.eq.s32.totalorder %v921, 1
    %v923 = vsel %vm922, %v227, 0.0
    %v924 = vadd.f32 %v919, %v923
    %vm925 = vcmp.eq.s32.totalorder %v844, 10
    %v926 = vsel %vm925, 1, 0
    %vm927 = vcmp.eq.s32.totalorder %v926, 1
    %v928 = vsel %vm927, %v233, 0.0
    %v929 = vadd.f32 %v924, %v928
    %vm930 = vcmp.eq.s32.totalorder %v844, 11
    %v931 = vsel %vm930, 1, 0
    %vm932 = vcmp.eq.s32.totalorder %v931, 1
    %v933 = vsel %vm932, %v239, 0.0
    %v934 = vadd.f32 %v929, %v933
    %vm935 = vcmp.eq.s32.totalorder %v844, 12
    %v936 = vsel %vm935, 1, 0
    %vm937 = vcmp.eq.s32.totalorder %v936, 1
    %v938 = vsel %vm937, %v245, 0.0
    %v939 = vadd.f32 %v934, %v938
    %vm940 = vcmp.eq.s32.totalorder %v844, 13
    %v941 = vsel %vm940, 1, 0
    %vm942 = vcmp.eq.s32.totalorder %v941, 1
    %v943 = vsel %vm942, %v251, 0.0
    %v944 = vadd.f32 %v939, %v943
    %vm945 = vcmp.eq.s32.totalorder %v844, 14
    %v946 = vsel %vm945, 1, 0
    %vm947 = vcmp.eq.s32.totalorder %v946, 1
    %v948 = vsel %vm947, %v257, 0.0
    %v949 = vadd.f32 %v944, %v948
    %vm950 = vcmp.eq.s32.totalorder %v844, 15
    %v951 = vsel %vm950, 1, 0
    %vm952 = vcmp.eq.s32.totalorder %v951, 1
    %v953 = vsel %vm952, %v263, 0.0
    %v954 = vadd.f32 %v949, %v953
    %956 = vrot.lane.b32.xlu0 %v954, 16
    %v957 = vpop.permute.xlu0 %956
    %v959 = vadd.f32 %v814, %v957
    %v960 = vadd.f32 %v959, %v274
    %v961 = vtanh.pop %v960
    %963 = vrot.lane.b32.xlu0 %v961, 112
    %v964 = vpop.permute.xlu0 %963
    %v965 = vsel %vm89, %v964, 0
    %967 = vmatpush.msra.mxu0 0.0
    %968 = vmatpush.msra.mxu0 0.0
    %969 = vmatpush.msra.mxu0 0.0
    %970 = vmatpush.msra.mxu0 0.0
    %971 = vmatpush.msra.mxu0 0.0
    %972 = vmatpush.msra.mxu0 0.0
    %973 = vmatpush.msra.mxu0 0.0
    %974 = vmatpush.msra.mxu0 0.0
    %975 = vmatpush.msra.mxu0 0.0
    %976 = vmatpush.msra.mxu0 0.0
    %977 = vmatpush.msra.mxu0 0.0
    %978 = vmatpush.msra.mxu0 0.0
    %979 = vmatpush.msra.mxu0 %v47
    %980 = vmatpush.msra.mxu0 %v46
    %981 = vmatpush.msra.mxu0 %v45
    %982 = vmatpush.msra.mxu0 %v44
    %983 = vmatmul.f32.gmra.mxu0 %v965
    %v984 = vpop.f32.mrf.mxu0
    %v985 = vadd.f32 0.0, %v984
    %986 = vdwg.mxu0
    %v987 = vadd.f32 %v985, %v113
    %v988 = vsel %vm62, %v987, -inf
    %989 = vmax.xlane.f32.xlu0 %v988
    %v990 = vpop.xlane.xlu0 %989
    %v991 = vsub.f32 %v987, %v990
    %v992 = vmul.f32 %v991, 1.442695
    %v993 = vpow.pop %v992
    %v994 = vsel %vm62, %v993, 0.0
    %995 = vadd.xlane.f32.xlu0 %v994
    %v996 = vpop.xlane.xlu0 %995
    %v997 = vlog2.pop %v996
    %v998 = vmul.f32 %v997, 0.6931472
    %vm999 = vcmp.eq.f32.partialorder %v987, %v990
    %v1000 = vsel %vm999, %v88, 16
    %v1001 = vsel %vm62, %v1000, 2147483647
    %v1002 = vand.u32 %v1001, 65535
    %v1003 = vshra.s32 %v1001, 16
    %v1004 = vcvt.s32.f32 %v1002
    %v1005 = vcvt.s32.f32 %v1003
    %1006 = vmin.xlane.f32.xlu0 %v1005
    %v1007 = vpop.xlane.xlu0 %1006
    %vm1008 = vcmp.eq.f32.partialorder %v1005, %v1007
    %v1009 = vsel %vm1008, %v1004, inf
    %1010 = vmin.xlane.f32.xlu0 %v1009
    %v1011 = vpop.xlane.xlu0 %1010
    %v1012 = vcvt.f32.s32 %v1011
    %v1013 = vcvt.f32.s32 %v1007
    %v1014 = vshll.u32 %v1013, 16
    %v1015 = vadd.s32 %v1014, %v1012
    %v1016 = vsub.f32 0.0, %v998
    %v1017 = vmul.f32 %v991, %v993
    %v1018 = vsel %vm62, %v1017, 0.0
    %1019 = vadd.xlane.f32.xlu0 %v1018
    %v1020 = vpop.xlane.xlu0 %1019
    %v1021 = vrcp.pop %v996
    %v1022 = vmul.f32 %v996, %v1021
    %v1023 = vsub.f32 1.0, %v1022
    %v1024 = vmul.f32 %v1021, %v1023
    %v1025 = vadd.f32 %v1021, %v1024
    %vm1026 = vweird.f32 %v996
    %vm1027 = vweird.f32 %v1021
    %vm1028 = vmor %vm1026, %vm1027
    %v1029 = vsel %vm1028, %v1021, %v1025
    %v1030 = vand.u32 2147483647, %v996
    %vm1031 = vcmp.eq.f32.partialorder %v1030, 8.507059e+37
    %v1032 = vand.u32 %v996, 2147483648
    %v1033 = vor.u32 1.1754944e-38, %v1032
    %v1034 = vsel %vm1031, %v1033, %v1029
    %v1035 = vmul.f32 %v1020, %v1034
    %v1036 = vsub.f32 %v998, %v1035
    %v1037 = vadd.f32 %v866, %v1036
    %v1038 = vsel %vm869, 2, %v1015
    %vm1039 = vcmp.eq.s32.totalorder %v1015, 0
    %vm1040 = vmor %vm869, %vm1039
    %v1041 = vsel %vm1040, 1, 0
    %v1042 = vcvt.s32.f32 %v1041
    %v1043 = vadd.f32 %v872, %v1042
    %vm1044 = vcmp.eq.s32.totalorder %v88, 5
    %v1045 = vsel %vm1044, %v1038, %v874
    %v1046 = vsel %vm1044, %v1016, %v875
    %v1047 = vsel %vm1039, 1, 0
    %vm1048 = vcmp.eq.s32.totalorder %v1047, 1
    %v1049 = vsel %vm1048, %v173, 0.0
    %v1050 = vadd.f32 %v1049, 0.0
    %vm1051 = vcmp.eq.s32.totalorder %v1015, 1
    %v1052 = vsel %vm1051, 1, 0
    %vm1053 = vcmp.eq.s32.totalorder %v1052, 1
    %v1054 = vsel %vm1053, %v179, 0.0
    %v1055 = vadd.f32 %v1050, %v1054
    %vm1056 = vcmp.eq.s32.totalorder %v1015, 2
    %v1057 = vsel %vm1056, 1, 0
    %vm1058 = vcmp.eq.s32.totalorder %v1057, 1
    %v1059 = vsel %vm1058, %v185, 0.0
    %v1060 = vadd.f32 %v1055, %v1059
    %vm1061 = vcmp.eq.s32.totalorder %v1015, 3
    %v1062 = vsel %vm1061, 1, 0
    %vm1063 = vcmp.eq.s32.totalorder %v1062, 1
    %v1064 = vsel %vm1063, %v191, 0.0
    %v1065 = vadd.f32 %v1060, %v1064
    %vm1066 = vcmp.eq.s32.totalorder %v1015, 4
    %v1067 = vsel %vm1066, 1, 0
    %vm1068 = vcmp.eq.s32.totalorder %v1067, 1
    %v1069 = vsel %vm1068, %v197, 0.0
    %v1070 = vadd.f32 %v1065, %v1069
    %vm1071 = vcmp.eq.s32.totalorder %v1015, 5
    %v1072 = vsel %vm1071, 1, 0
    %vm1073 = vcmp.eq.s32.totalorder %v1072, 1
    %v1074 = vsel %vm1073, %v203, 0.0
    %v1075 = vadd.f32 %v1070, %v1074
    %vm1076 = vcmp.eq.s32.totalorder %v1015, 6
    %v1077 = vsel %vm1076, 1, 0
    %vm1078 = vcmp.eq.s32.totalorder %v1077, 1
    %v1079 = vsel %vm1078, %v209, 0.0
    %v1080 = vadd.f32 %v1075, %v1079
    %vm1081 = vcmp.eq.s32.totalorder %v1015, 7
    %v1082 = vsel %vm1081, 1, 0
    %vm1083 = vcmp.eq.s32.totalorder %v1082, 1
    %v1084 = vsel %vm1083, %v215, 0.0
    %v1085 = vadd.f32 %v1080, %v1084
    %vm1086 = vcmp.eq.s32.totalorder %v1015, 8
    %v1087 = vsel %vm1086, 1, 0
    %vm1088 = vcmp.eq.s32.totalorder %v1087, 1
    %v1089 = vsel %vm1088, %v221, 0.0
    %v1090 = vadd.f32 %v1085, %v1089
    %vm1091 = vcmp.eq.s32.totalorder %v1015, 9
    %v1092 = vsel %vm1091, 1, 0
    %vm1093 = vcmp.eq.s32.totalorder %v1092, 1
    %v1094 = vsel %vm1093, %v227, 0.0
    %v1095 = vadd.f32 %v1090, %v1094
    %vm1096 = vcmp.eq.s32.totalorder %v1015, 10
    %v1097 = vsel %vm1096, 1, 0
    %vm1098 = vcmp.eq.s32.totalorder %v1097, 1
    %v1099 = vsel %vm1098, %v233, 0.0
    %v1100 = vadd.f32 %v1095, %v1099
    %vm1101 = vcmp.eq.s32.totalorder %v1015, 11
    %v1102 = vsel %vm1101, 1, 0
    %vm1103 = vcmp.eq.s32.totalorder %v1102, 1
    %v1104 = vsel %vm1103, %v239, 0.0
    %v1105 = vadd.f32 %v1100, %v1104
    %vm1106 = vcmp.eq.s32.totalorder %v1015, 12
    %v1107 = vsel %vm1106, 1, 0
    %vm1108 = vcmp.eq.s32.totalorder %v1107, 1
    %v1109 = vsel %vm1108, %v245, 0.0
    %v1110 = vadd.f32 %v1105, %v1109
    %vm1111 = vcmp.eq.s32.totalorder %v1015, 13
    %v1112 = vsel %vm1111, 1, 0
    %vm1113 = vcmp.eq.s32.totalorder %v1112, 1
    %v1114 = vsel %vm1113, %v251, 0.0
    %v1115 = vadd.f32 %v1110, %v1114
    %vm1116 = vcmp.eq.s32.totalorder %v1015, 14
    %v1117 = vsel %vm1116, 1, 0
    %vm1118 = vcmp.eq.s32.totalorder %v1117, 1
    %v1119 = vsel %vm1118, %v257, 0.0
    %v1120 = vadd.f32 %v1115, %v1119
    %vm1121 = vcmp.eq.s32.totalorder %v1015, 15
    %v1122 = vsel %vm1121, 1, 0
    %vm1123 = vcmp.eq.s32.totalorder %v1122, 1
    %v1124 = vsel %vm1123, %v263, 0.0
    %v1125 = vadd.f32 %v1120, %v1124
    %1127 = vrot.lane.b32.xlu0 %v1125, 16
    %v1128 = vpop.permute.xlu0 %1127
    %v1130 = vadd.f32 %v985, %v1128
    %v1131 = vadd.f32 %v1130, %v274
    %v1132 = vtanh.pop %v1131
    %1134 = vrot.lane.b32.xlu0 %v1132, 112
    %v1135 = vpop.permute.xlu0 %1134
    %v1136 = vsel %vm89, %v1135, 0
    %1138 = vmatpush.msra.mxu0 0.0
    %1139 = vmatpush.msra.mxu0 0.0
    %1140 = vmatpush.msra.mxu0 0.0
    %1141 = vmatpush.msra.mxu0 0.0
    %1142 = vmatpush.msra.mxu0 0.0
    %1143 = vmatpush.msra.mxu0 0.0
    %1144 = vmatpush.msra.mxu0 0.0
    %1145 = vmatpush.msra.mxu0 0.0
    %1146 = vmatpush.msra.mxu0 0.0
    %1147 = vmatpush.msra.mxu0 0.0
    %1148 = vmatpush.msra.mxu0 0.0
    %1149 = vmatpush.msra.mxu0 0.0
    %1150 = vmatpush.msra.mxu0 %v47
    %1151 = vmatpush.msra.mxu0 %v46
    %1152 = vmatpush.msra.mxu0 %v45
    %1153 = vmatpush.msra.mxu0 %v44
    %1154 = vmatmul.f32.gmra.mxu0 %v1136
    %v1155 = vpop.f32.mrf.mxu0
    %v1156 = vadd.f32 0.0, %v1155
    %1157 = vdwg.mxu0
    %v1158 = vadd.f32 %v1156, %v113
    %v1159 = vsel %vm62, %v1158, -inf
    %1160 = vmax.xlane.f32.xlu0 %v1159
    %v1161 = vpop.xlane.xlu0 %1160
    %v1162 = vsub.f32 %v1158, %v1161
    %v1163 = vmul.f32 %v1162, 1.442695
    %v1164 = vpow.pop %v1163
    %v1165 = vsel %vm62, %v1164, 0.0
    %1166 = vadd.xlane.f32.xlu0 %v1165
    %v1167 = vpop.xlane.xlu0 %1166
    %v1168 = vlog2.pop %v1167
    %v1169 = vmul.f32 %v1168, 0.6931472
    %vm1170 = vcmp.eq.f32.partialorder %v1158, %v1161
    %v1171 = vsel %vm1170, %v88, 16
    %v1172 = vsel %vm62, %v1171, 2147483647
    %v1173 = vand.u32 %v1172, 65535
    %v1174 = vshra.s32 %v1172, 16
    %v1175 = vcvt.s32.f32 %v1173
    %v1176 = vcvt.s32.f32 %v1174
    %1177 = vmin.xlane.f32.xlu0 %v1176
    %v1178 = vpop.xlane.xlu0 %1177
    %vm1179 = vcmp.eq.f32.partialorder %v1176, %v1178
    %v1180 = vsel %vm1179, %v1175, inf
    %1181 = vmin.xlane.f32.xlu0 %v1180
    %v1182 = vpop.xlane.xlu0 %1181
    %v1183 = vcvt.f32.s32 %v1182
    %v1184 = vcvt.f32.s32 %v1178
    %v1185 = vshll.u32 %v1184, 16
    %v1186 = vadd.s32 %v1185, %v1183
    %v1187 = vsub.f32 0.0, %v1169
    %v1188 = vmul.f32 %v1162, %v1164
    %v1189 = vsel %vm62, %v1188, 0.0
    %1190 = vadd.xlane.f32.xlu0 %v1189
    %v1191 = vpop.xlane.xlu0 %1190
    %v1192 = vrcp.pop %v1167
    %v1193 = vmul.f32 %v1167, %v1192
    %v1194 = vsub.f32 1.0, %v1193
    %v1195 = vmul.f32 %v1192, %v1194
    %v1196 = vadd.f32 %v1192, %v1195
    %vm1197 = vweird.f32 %v1167
    %vm1198 = vweird.f32 %v1192
    %vm1199 = vmor %vm1197, %vm1198
    %v1200 = vsel %vm1199, %v1192, %v1196
    %v1201 = vand.u32 2147483647, %v1167
    %vm1202 = vcmp.eq.f32.partialorder %v1201, 8.507059e+37
    %v1203 = vand.u32 %v1167, 2147483648
    %v1204 = vor.u32 1.1754944e-38, %v1203
    %v1205 = vsel %vm1202, %v1204, %v1200
    %v1206 = vmul.f32 %v1191, %v1205
    %v1207 = vsub.f32 %v1169, %v1206
    %v1208 = vadd.f32 %v1037, %v1207
    %v1209 = vsel %vm1040, 2, %v1186
    %vm1210 = vcmp.eq.s32.totalorder %v1186, 0
    %vm1211 = vmor %vm1040, %vm1210
    %v1212 = vsel %vm1211, 1, 0
    %v1213 = vcvt.s32.f32 %v1212
    %v1214 = vadd.f32 %v1043, %v1213
    %vm1215 = vcmp.eq.s32.totalorder %v88, 6
    %v1216 = vsel %vm1215, %v1209, %v1045
    %v1217 = vsel %vm1215, %v1187, %v1046
    %v1218 = vsel %vm1210, 1, 0
    %vm1219 = vcmp.eq.s32.totalorder %v1218, 1
    %v1220 = vsel %vm1219, %v173, 0.0
    %v1221 = vadd.f32 %v1220, 0.0
    %vm1222 = vcmp.eq.s32.totalorder %v1186, 1
    %v1223 = vsel %vm1222, 1, 0
    %vm1224 = vcmp.eq.s32.totalorder %v1223, 1
    %v1225 = vsel %vm1224, %v179, 0.0
    %v1226 = vadd.f32 %v1221, %v1225
    %vm1227 = vcmp.eq.s32.totalorder %v1186, 2
    %v1228 = vsel %vm1227, 1, 0
    %vm1229 = vcmp.eq.s32.totalorder %v1228, 1
    %v1230 = vsel %vm1229, %v185, 0.0
    %v1231 = vadd.f32 %v1226, %v1230
    %vm1232 = vcmp.eq.s32.totalorder %v1186, 3
    %v1233 = vsel %vm1232, 1, 0
    %vm1234 = vcmp.eq.s32.totalorder %v1233, 1
    %v1235 = vsel %vm1234, %v191, 0.0
    %v1236 = vadd.f32 %v1231, %v1235
    %vm1237 = vcmp.eq.s32.totalorder %v1186, 4
    %v1238 = vsel %vm1237, 1, 0
    %vm1239 = vcmp.eq.s32.totalorder %v1238, 1
    %v1240 = vsel %vm1239, %v197, 0.0
    %v1241 = vadd.f32 %v1236, %v1240
    %vm1242 = vcmp.eq.s32.totalorder %v1186, 5
    %v1243 = vsel %vm1242, 1, 0
    %vm1244 = vcmp.eq.s32.totalorder %v1243, 1
    %v1245 = vsel %vm1244, %v203, 0.0
    %v1246 = vadd.f32 %v1241, %v1245
    %vm1247 = vcmp.eq.s32.totalorder %v1186, 6
    %v1248 = vsel %vm1247, 1, 0
    %vm1249 = vcmp.eq.s32.totalorder %v1248, 1
    %v1250 = vsel %vm1249, %v209, 0.0
    %v1251 = vadd.f32 %v1246, %v1250
    %vm1252 = vcmp.eq.s32.totalorder %v1186, 7
    %v1253 = vsel %vm1252, 1, 0
    %vm1254 = vcmp.eq.s32.totalorder %v1253, 1
    %v1255 = vsel %vm1254, %v215, 0.0
    %v1256 = vadd.f32 %v1251, %v1255
    %vm1257 = vcmp.eq.s32.totalorder %v1186, 8
    %v1258 = vsel %vm1257, 1, 0
    %vm1259 = vcmp.eq.s32.totalorder %v1258, 1
    %v1260 = vsel %vm1259, %v221, 0.0
    %v1261 = vadd.f32 %v1256, %v1260
    %vm1262 = vcmp.eq.s32.totalorder %v1186, 9
    %v1263 = vsel %vm1262, 1, 0
    %vm1264 = vcmp.eq.s32.totalorder %v1263, 1
    %v1265 = vsel %vm1264, %v227, 0.0
    %v1266 = vadd.f32 %v1261, %v1265
    %vm1267 = vcmp.eq.s32.totalorder %v1186, 10
    %v1268 = vsel %vm1267, 1, 0
    %vm1269 = vcmp.eq.s32.totalorder %v1268, 1
    %v1270 = vsel %vm1269, %v233, 0.0
    %v1271 = vadd.f32 %v1266, %v1270
    %vm1272 = vcmp.eq.s32.totalorder %v1186, 11
    %v1273 = vsel %vm1272, 1, 0
    %vm1274 = vcmp.eq.s32.totalorder %v1273, 1
    %v1275 = vsel %vm1274, %v239, 0.0
    %v1276 = vadd.f32 %v1271, %v1275
    %vm1277 = vcmp.eq.s32.totalorder %v1186, 12
    %v1278 = vsel %vm1277, 1, 0
    %vm1279 = vcmp.eq.s32.totalorder %v1278, 1
    %v1280 = vsel %vm1279, %v245, 0.0
    %v1281 = vadd.f32 %v1276, %v1280
    %vm1282 = vcmp.eq.s32.totalorder %v1186, 13
    %v1283 = vsel %vm1282, 1, 0
    %vm1284 = vcmp.eq.s32.totalorder %v1283, 1
    %v1285 = vsel %vm1284, %v251, 0.0
    %v1286 = vadd.f32 %v1281, %v1285
    %vm1287 = vcmp.eq.s32.totalorder %v1186, 14
    %v1288 = vsel %vm1287, 1, 0
    %vm1289 = vcmp.eq.s32.totalorder %v1288, 1
    %v1290 = vsel %vm1289, %v257, 0.0
    %v1291 = vadd.f32 %v1286, %v1290
    %vm1292 = vcmp.eq.s32.totalorder %v1186, 15
    %v1293 = vsel %vm1292, 1, 0
    %vm1294 = vcmp.eq.s32.totalorder %v1293, 1
    %v1295 = vsel %vm1294, %v263, 0.0
    %v1296 = vadd.f32 %v1291, %v1295
    %1298 = vrot.lane.b32.xlu0 %v1296, 16
    %v1299 = vpop.permute.xlu0 %1298
    %v1301 = vadd.f32 %v1156, %v1299
    %v1302 = vadd.f32 %v1301, %v274
    %v1303 = vtanh.pop %v1302
    %1305 = vrot.lane.b32.xlu0 %v1303, 112
    %v1306 = vpop.permute.xlu0 %1305
    %v1307 = vsel %vm89, %v1306, 0
    %1309 = vmatpush.msra.mxu0 0.0
    %1310 = vmatpush.msra.mxu0 0.0
    %1311 = vmatpush.msra.mxu0 0.0
    %1312 = vmatpush.msra.mxu0 0.0
    %1313 = vmatpush.msra.mxu0 0.0
    %1314 = vmatpush.msra.mxu0 0.0
    %1315 = vmatpush.msra.mxu0 0.0
    %1316 = vmatpush.msra.mxu0 0.0
    %1317 = vmatpush.msra.mxu0 0.0
    %1318 = vmatpush.msra.mxu0 0.0
    %1319 = vmatpush.msra.mxu0 0.0
    %1320 = vmatpush.msra.mxu0 0.0
    %1321 = vmatpush.msra.mxu0 %v47
    %1322 = vmatpush.msra.mxu0 %v46
    %1323 = vmatpush.msra.mxu0 %v45
    %1324 = vmatpush.msra.mxu0 %v44
    %1325 = vmatmul.f32.gmra.mxu0 %v1307
    %v1326 = vpop.f32.mrf.mxu0
    %v1327 = vadd.f32 0.0, %v1326
    %1328 = vdwg.mxu0
    %v1329 = vadd.f32 %v1327, %v113
    %v1330 = vsel %vm62, %v1329, -inf
    %1331 = vmax.xlane.f32.xlu0 %v1330
    %v1332 = vpop.xlane.xlu0 %1331
    %v1333 = vsub.f32 %v1329, %v1332
    %v1334 = vmul.f32 %v1333, 1.442695
    %v1335 = vpow.pop %v1334
    %v1336 = vsel %vm62, %v1335, 0.0
    %1337 = vadd.xlane.f32.xlu0 %v1336
    %v1338 = vpop.xlane.xlu0 %1337
    %v1339 = vlog2.pop %v1338
    %v1340 = vmul.f32 %v1339, 0.6931472
    %vm1341 = vcmp.eq.f32.partialorder %v1329, %v1332
    %v1342 = vsel %vm1341, %v88, 16
    %v1343 = vsel %vm62, %v1342, 2147483647
    %v1344 = vand.u32 %v1343, 65535
    %v1345 = vshra.s32 %v1343, 16
    %v1346 = vcvt.s32.f32 %v1344
    %v1347 = vcvt.s32.f32 %v1345
    %1348 = vmin.xlane.f32.xlu0 %v1347
    %v1349 = vpop.xlane.xlu0 %1348
    %vm1350 = vcmp.eq.f32.partialorder %v1347, %v1349
    %v1351 = vsel %vm1350, %v1346, inf
    %1352 = vmin.xlane.f32.xlu0 %v1351
    %v1353 = vpop.xlane.xlu0 %1352
    %v1354 = vcvt.f32.s32 %v1353
    %v1355 = vcvt.f32.s32 %v1349
    %v1356 = vshll.u32 %v1355, 16
    %v1357 = vadd.s32 %v1356, %v1354
    %v1358 = vsub.f32 0.0, %v1340
    %v1359 = vmul.f32 %v1333, %v1335
    %v1360 = vsel %vm62, %v1359, 0.0
    %1361 = vadd.xlane.f32.xlu0 %v1360
    %v1362 = vpop.xlane.xlu0 %1361
    %v1363 = vrcp.pop %v1338
    %v1364 = vmul.f32 %v1338, %v1363
    %v1365 = vsub.f32 1.0, %v1364
    %v1366 = vmul.f32 %v1363, %v1365
    %v1367 = vadd.f32 %v1363, %v1366
    %vm1368 = vweird.f32 %v1338
    %vm1369 = vweird.f32 %v1363
    %vm1370 = vmor %vm1368, %vm1369
    %v1371 = vsel %vm1370, %v1363, %v1367
    %v1372 = vand.u32 2147483647, %v1338
    %vm1373 = vcmp.eq.f32.partialorder %v1372, 8.507059e+37
    %v1374 = vand.u32 %v1338, 2147483648
    %v1375 = vor.u32 1.1754944e-38, %v1374
    %v1376 = vsel %vm1373, %v1375, %v1371
    %v1377 = vmul.f32 %v1362, %v1376
    %v1378 = vsub.f32 %v1340, %v1377
    %v1379 = vadd.f32 %v1208, %v1378
    %v1380 = vsel %vm1211, 2, %v1357
    %vm1381 = vcmp.eq.s32.totalorder %v1357, 0
    %vm1382 = vmor %vm1211, %vm1381
    %v1383 = vsel %vm1382, 1, 0
    %v1384 = vcvt.s32.f32 %v1383
    %v1385 = vadd.f32 %v1214, %v1384
    %vm1386 = vcmp.eq.s32.totalorder %v88, 7
    %v1387 = vsel %vm1386, %v1380, %v1216
    %v1388 = vsel %vm1386, %v1358, %v1217
    %v1389 = vmul.f32 %v1379, 0.125
    %v1390 = vsub.f32 8.0, %v1385
    %v1391 = vadd.f32 %v1390, 1.0
    %v1392 = vmin.f32 %v1391, 8.0
    %1393 = vset.pattern.permute.xlu0 0
    %1394 = vperm.xlu0 %1393, %v1387
    %v1395 = vpop.permute.xlu0 %1394
    %vm1396 = vcmp.eq.s32.totalorder %v88, %v1395
    %v1397 = vsel %vm1396, 1, 0
    %v1398 = vcvt.s32.f32 %v1397
    %1399 = vset.pattern.permute.xlu0 1
    %1400 = vperm.xlu0 %1399, %v1387
    %v1401 = vpop.permute.xlu0 %1400
    %vm1402 = vcmp.eq.s32.totalorder %v88, %v1401
    %v1403 = vsel %vm1402, 1, 0
    %v1404 = vcvt.s32.f32 %v1403
    %1405 = vset.pattern.permute.xlu0 2
    %1406 = vperm.xlu0 %1405, %v1387
    %v1407 = vpop.permute.xlu0 %1406
    %vm1408 = vcmp.eq.s32.totalorder %v88, %v1407
    %v1409 = vsel %vm1408, 1, 0
    %v1410 = vcvt.s32.f32 %v1409
    %1411 = vset.pattern.permute.xlu0 3
    %1412 = vperm.xlu0 %1411, %v1387
    %v1413 = vpop.permute.xlu0 %1412
    %vm1414 = vcmp.eq.s32.totalorder %v88, %v1413
    %v1415 = vsel %vm1414, 1, 0
    %v1416 = vcvt.s32.f32 %v1415
    %1417 = vset.pattern.permute.xlu0 4
    %1418 = vperm.xlu0 %1417, %v1387
    %v1419 = vpop.permute.xlu0 %1418
    %vm1420 = vcmp.eq.s32.totalorder %v88, %v1419
    %v1421 = vsel %vm1420, 1, 0
    %v1422 = vcvt.s32.f32 %v1421
    %1423 = vset.pattern.permute.xlu0 5
    %1424 = vperm.xlu0 %1423, %v1387
    %v1425 = vpop.permute.xlu0 %1424
    %vm1426 = vcmp.eq.s32.totalorder %v88, %v1425
    %v1427 = vsel %vm1426, 1, 0
    %v1428 = vcvt.s32.f32 %v1427
    %1429 = vset.pattern.permute.xlu0 6
    %1430 = vperm.xlu0 %1429, %v1387
    %v1431 = vpop.permute.xlu0 %1430
    %vm1432 = vcmp.eq.s32.totalorder %v88, %v1431
    %v1433 = vsel %vm1432, 1, 0
    %v1434 = vcvt.s32.f32 %v1433
    %1435 = vset.pattern.permute.xlu0 7
    %1436 = vperm.xlu0 %1435, %v1387
    %v1437 = vpop.permute.xlu0 %1436
    %vm1438 = vcmp.eq.s32.totalorder %v88, %v1437
    %v1439 = vsel %vm1438, 1, 0
    %v1440 = vcvt.s32.f32 %v1439
    %v1442 = vsel %vm62, %v1398, 0
    %v1445 = vsel %vm62, %v1404, 0
    %v1448 = vsel %vm62, %v1410, 0
    %v1451 = vsel %vm62, %v1416, 0
    %v1454 = vsel %vm62, %v1422, 0
    %v1457 = vsel %vm62, %v1428, 0
    %v1460 = vsel %vm62, %v1434, 0
    %v1463 = vsel %vm62, %v1440, 0
    %1465 = vmatpush.msra.mxu0 0.0
    %1466 = vmatpush.msra.mxu0 0.0
    %1467 = vmatpush.msra.mxu0 0.0
    %1468 = vmatpush.msra.mxu0 0.0
    %1469 = vmatpush.msra.mxu0 0.0
    %1470 = vmatpush.msra.mxu0 0.0
    %1471 = vmatpush.msra.mxu0 0.0
    %1472 = vmatpush.msra.mxu0 0.0
    %1473 = vmatpush.msra.mxu0 0.0
    %1474 = vmatpush.msra.mxu0 0.0
    %1475 = vmatpush.msra.mxu0 0.0
    %1476 = vmatpush.msra.mxu0 0.0
    %1477 = vmatpush.msra.mxu0 0.0
    %1478 = vmatpush.msra.mxu0 0.0
    %1479 = vmatpush.msra.mxu0 %v51
    %1480 = vmatpush.msra.mxu0 %v50
    %1481 = vmatmul.f32.gmra.mxu0 %v1442
    %v1482 = vpop.f32.mrf.mxu0
    %v1483 = vadd.f32 0.0, %v1482
    %1484 = vmatmul.f32.gmra.mxu0 %v1445
    %v1485 = vpop.f32.mrf.mxu0
    %v1486 = vadd.f32 0.0, %v1485
    %1487 = vmatmul.f32.gmra.mxu0 %v1448
    %v1488 = vpop.f32.mrf.mxu0
    %v1489 = vadd.f32 0.0, %v1488
    %1490 = vmatmul.f32.gmra.mxu0 %v1451
    %v1491 = vpop.f32.mrf.mxu0
    %v1492 = vadd.f32 0.0, %v1491
    %1493 = vmatmul.f32.gmra.mxu0 %v1454
    %v1494 = vpop.f32.mrf.mxu0
    %v1495 = vadd.f32 0.0, %v1494
    %1496 = vmatmul.f32.gmra.mxu0 %v1457
    %v1497 = vpop.f32.mrf.mxu0
    %v1498 = vadd.f32 0.0, %v1497
    %1499 = vmatmul.f32.gmra.mxu0 %v1460
    %v1500 = vpop.f32.mrf.mxu0
    %v1501 = vadd.f32 0.0, %v1500
    %1502 = vmatmul.f32.gmra.mxu0 %v1463
    %v1503 = vpop.f32.mrf.mxu0
    %v1504 = vadd.f32 0.0, %v1503
    %1505 = vdwg.mxu0
    %v1506 = vperm.slane %v60, 3
    %v1507 = vadd.f32 %v1483, %v1506
    %v1508 = vtanh.pop %v1507
    %v1510 = vsel %vm89, %v1508, 0
    %1512 = vmatpush.msra.mxu0 0.0
    %1513 = vmatpush.msra.mxu0 0.0
    %1514 = vmatpush.msra.mxu0 0.0
    %1515 = vmatpush.msra.mxu0 0.0
    %1516 = vmatpush.msra.mxu0 0.0
    %1517 = vmatpush.msra.mxu0 0.0
    %1518 = vmatpush.msra.mxu0 0.0
    %1519 = vmatpush.msra.mxu0 0.0
    %1520 = vmatpush.msra.mxu0 0.0
    %1521 = vmatpush.msra.mxu0 0.0
    %1522 = vmatpush.msra.mxu0 0.0
    %1523 = vmatpush.msra.mxu0 0.0
    %1524 = vmatpush.msra.mxu0 %v55
    %1525 = vmatpush.msra.mxu0 %v54
    %1526 = vmatpush.msra.mxu0 %v53
    %1527 = vmatpush.msra.mxu0 %v52
    %1528 = vmatmul.f32.gmra.mxu0 %v1510
    %v1529 = vpop.f32.mrf.mxu0
    %v1530 = vadd.f32 %v1486, %v1529
    %1531 = vdwg.mxu0
    %v1532 = vadd.f32 %v1530, %v1506
    %v1533 = vtanh.pop %v1532
    %v1535 = vsel %vm89, %v1533, 0
    %1537 = vmatpush.msra.mxu0 0.0
    %1538 = vmatpush.msra.mxu0 0.0
    %1539 = vmatpush.msra.mxu0 0.0
    %1540 = vmatpush.msra.mxu0 0.0
    %1541 = vmatpush.msra.mxu0 0.0
    %1542 = vmatpush.msra.mxu0 0.0
    %1543 = vmatpush.msra.mxu0 0.0
    %1544 = vmatpush.msra.mxu0 0.0
    %1545 = vmatpush.msra.mxu0 0.0
    %1546 = vmatpush.msra.mxu0 0.0
    %1547 = vmatpush.msra.mxu0 0.0
    %1548 = vmatpush.msra.mxu0 0.0
    %1549 = vmatpush.msra.mxu0 %v55
    %1550 = vmatpush.msra.mxu0 %v54
    %1551 = vmatpush.msra.mxu0 %v53
    %1552 = vmatpush.msra.mxu0 %v52
    %1553 = vmatmul.f32.gmra.mxu0 %v1535
    %v1554 = vpop.f32.mrf.mxu0
    %v1555 = vadd.f32 %v1489, %v1554
    %1556 = vdwg.mxu0
    %v1557 = vadd.f32 %v1555, %v1506
    %v1558 = vtanh.pop %v1557
    %v1560 = vsel %vm89, %v1558, 0
    %1562 = vmatpush.msra.mxu0 0.0
    %1563 = vmatpush.msra.mxu0 0.0
    %1564 = vmatpush.msra.mxu0 0.0
    %1565 = vmatpush.msra.mxu0 0.0
    %1566 = vmatpush.msra.mxu0 0.0
    %1567 = vmatpush.msra.mxu0 0.0
    %1568 = vmatpush.msra.mxu0 0.0
    %1569 = vmatpush.msra.mxu0 0.0
    %1570 = vmatpush.msra.mxu0 0.0
    %1571 = vmatpush.msra.mxu0 0.0
    %1572 = vmatpush.msra.mxu0 0.0
    %1573 = vmatpush.msra.mxu0 0.0
    %1574 = vmatpush.msra.mxu0 %v55
    %1575 = vmatpush.msra.mxu0 %v54
    %1576 = vmatpush.msra.mxu0 %v53
    %1577 = vmatpush.msra.mxu0 %v52
    %1578 = vmatmul.f32.gmra.mxu0 %v1560
    %v1579 = vpop.f32.mrf.mxu0
    %v1580 = vadd.f32 %v1492, %v1579
    %1581 = vdwg.mxu0
    %v1582 = vadd.f32 %v1580, %v1506
    %v1583 = vtanh.pop %v1582
    %v1585 = vsel %vm89, %v1583, 0
    %1587 = vmatpush.msra.mxu0 0.0
    %1588 = vmatpush.msra.mxu0 0.0
    %1589 = vmatpush.msra.mxu0 0.0
    %1590 = vmatpush.msra.mxu0 0.0
    %1591 = vmatpush.msra.mxu0 0.0
    %1592 = vmatpush.msra.mxu0 0.0
    %1593 = vmatpush.msra.mxu0 0.0
    %1594 = vmatpush.msra.mxu0 0.0
    %1595 = vmatpush.msra.mxu0 0.0
    %1596 = vmatpush.msra.mxu0 0.0
    %1597 = vmatpush.msra.mxu0 0.0
    %1598 = vmatpush.msra.mxu0 0.0
    %1599 = vmatpush.msra.mxu0 %v55
    %1600 = vmatpush.msra.mxu0 %v54
    %1601 = vmatpush.msra.mxu0 %v53
    %1602 = vmatpush.msra.mxu0 %v52
    %1603 = vmatmul.f32.gmra.mxu0 %v1585
    %v1604 = vpop.f32.mrf.mxu0
    %v1605 = vadd.f32 %v1495, %v1604
    %1606 = vdwg.mxu0
    %v1607 = vadd.f32 %v1605, %v1506
    %v1608 = vtanh.pop %v1607
    %v1610 = vsel %vm89, %v1608, 0
    %1612 = vmatpush.msra.mxu0 0.0
    %1613 = vmatpush.msra.mxu0 0.0
    %1614 = vmatpush.msra.mxu0 0.0
    %1615 = vmatpush.msra.mxu0 0.0
    %1616 = vmatpush.msra.mxu0 0.0
    %1617 = vmatpush.msra.mxu0 0.0
    %1618 = vmatpush.msra.mxu0 0.0
    %1619 = vmatpush.msra.mxu0 0.0
    %1620 = vmatpush.msra.mxu0 0.0
    %1621 = vmatpush.msra.mxu0 0.0
    %1622 = vmatpush.msra.mxu0 0.0
    %1623 = vmatpush.msra.mxu0 0.0
    %1624 = vmatpush.msra.mxu0 %v55
    %1625 = vmatpush.msra.mxu0 %v54
    %1626 = vmatpush.msra.mxu0 %v53
    %1627 = vmatpush.msra.mxu0 %v52
    %1628 = vmatmul.f32.gmra.mxu0 %v1610
    %v1629 = vpop.f32.mrf.mxu0
    %v1630 = vadd.f32 %v1498, %v1629
    %1631 = vdwg.mxu0
    %v1632 = vadd.f32 %v1630, %v1506
    %v1633 = vtanh.pop %v1632
    %v1635 = vsel %vm89, %v1633, 0
    %1637 = vmatpush.msra.mxu0 0.0
    %1638 = vmatpush.msra.mxu0 0.0
    %1639 = vmatpush.msra.mxu0 0.0
    %1640 = vmatpush.msra.mxu0 0.0
    %1641 = vmatpush.msra.mxu0 0.0
    %1642 = vmatpush.msra.mxu0 0.0
    %1643 = vmatpush.msra.mxu0 0.0
    %1644 = vmatpush.msra.mxu0 0.0
    %1645 = vmatpush.msra.mxu0 0.0
    %1646 = vmatpush.msra.mxu0 0.0
    %1647 = vmatpush.msra.mxu0 0.0
    %1648 = vmatpush.msra.mxu0 0.0
    %1649 = vmatpush.msra.mxu0 %v55
    %1650 = vmatpush.msra.mxu0 %v54
    %1651 = vmatpush.msra.mxu0 %v53
    %1652 = vmatpush.msra.mxu0 %v52
    %1653 = vmatmul.f32.gmra.mxu0 %v1635
    %v1654 = vpop.f32.mrf.mxu0
    %v1655 = vadd.f32 %v1501, %v1654
    %1656 = vdwg.mxu0
    %v1657 = vadd.f32 %v1655, %v1506
    %v1658 = vtanh.pop %v1657
    %v1660 = vsel %vm89, %v1658, 0
    %1662 = vmatpush.msra.mxu0 0.0
    %1663 = vmatpush.msra.mxu0 0.0
    %1664 = vmatpush.msra.mxu0 0.0
    %1665 = vmatpush.msra.mxu0 0.0
    %1666 = vmatpush.msra.mxu0 0.0
    %1667 = vmatpush.msra.mxu0 0.0
    %1668 = vmatpush.msra.mxu0 0.0
    %1669 = vmatpush.msra.mxu0 0.0
    %1670 = vmatpush.msra.mxu0 0.0
    %1671 = vmatpush.msra.mxu0 0.0
    %1672 = vmatpush.msra.mxu0 0.0
    %1673 = vmatpush.msra.mxu0 0.0
    %1674 = vmatpush.msra.mxu0 %v55
    %1675 = vmatpush.msra.mxu0 %v54
    %1676 = vmatpush.msra.mxu0 %v53
    %1677 = vmatpush.msra.mxu0 %v52
    %1678 = vmatmul.f32.gmra.mxu0 %v1660
    %v1679 = vpop.f32.mrf.mxu0
    %v1680 = vadd.f32 %v1504, %v1679
    %1681 = vdwg.mxu0
    %v1682 = vadd.f32 %v1680, %v1506
    %v1683 = vtanh.pop %v1682
    %v1684 = vperm.slane %v60, 4
    %v1686 = vsel %vm89, %v1683, 0
    %1688 = vmatpush.msra.mxu0 0.0
    %1689 = vmatpush.msra.mxu0 0.0
    %1690 = vmatpush.msra.mxu0 0.0
    %1691 = vmatpush.msra.mxu0 0.0
    %1692 = vmatpush.msra.mxu0 0.0
    %1693 = vmatpush.msra.mxu0 0.0
    %1694 = vmatpush.msra.mxu0 0.0
    %1695 = vmatpush.msra.mxu0 0.0
    %1696 = vmatpush.msra.mxu0 0.0
    %1697 = vmatpush.msra.mxu0 0.0
    %1698 = vmatpush.msra.mxu0 0.0
    %1699 = vmatpush.msra.mxu0 0.0
    %1700 = vmatpush.msra.mxu0 %v59
    %1701 = vmatpush.msra.mxu0 %v58
    %1702 = vmatpush.msra.mxu0 %v57
    %1703 = vmatpush.msra.mxu0 %v56
    %1704 = vmatmul.f32.gmra.mxu0 %v1686
    %v1705 = vpop.f32.mrf.mxu0
    %v1706 = vadd.f32 %v1684, %v1705
    %1707 = vdwg.mxu0
    %v1708 = vsel %vm62, %v1706, -inf
    %1709 = vmax.xlane.f32.xlu0 %v1708
    %v1710 = vpop.xlane.xlu0 %1709
    %v1711 = vsub.f32 %v1706, %v1710
    %v1712 = vmul.f32 %v1711, 1.442695
    %v1713 = vpow.pop %v1712
    %v1714 = vsel %vm62, %v1713, 0.0
    %1715 = vadd.xlane.f32.xlu0 %v1714
    %v1716 = vpop.xlane.xlu0 %1715
    %v1717 = vlog2.pop %v1716
    %v1718 = vmul.f32 %v1717, 0.6931472
    %v1719 = vsub.f32 %v1711, %v1718
    %vm1720 = vcmp.eq.f32.partialorder %v1706, %v1710
    %v1721 = vsel %vm1720, %v88, 16
    %v1722 = vsel %vm62, %v1721, 2147483647
    %v1723 = vand.u32 %v1722, 65535
    %v1724 = vshra.s32 %v1722, 16
    %v1725 = vcvt.s32.f32 %v1723
    %v1726 = vcvt.s32.f32 %v1724
    %1727 = vmin.xlane.f32.xlu0 %v1726
    %v1728 = vpop.xlane.xlu0 %1727
    %vm1729 = vcmp.eq.f32.partialorder %v1726, %v1728
    %v1730 = vsel %vm1729, %v1725, inf
    %1731 = vmin.xlane.f32.xlu0 %v1730
    %v1732 = vpop.xlane.xlu0 %1731
    %v1733 = vcvt.f32.s32 %v1732
    %v1734 = vcvt.f32.s32 %v1728
    %v1735 = vshll.u32 %v1734, 16
    %v1736 = vadd.s32 %v1735, %v1733
    %v1737 = vmul.f32 %v1711, %v1713
    %v1738 = vsel %vm62, %v1737, 0.0
    %1739 = vadd.xlane.f32.xlu0 %v1738
    %v1740 = vpop.xlane.xlu0 %1739
    %v1741 = vrcp.pop %v1716
    %v1742 = vmul.f32 %v1716, %v1741
    %v1743 = vsub.f32 1.0, %v1742
    %v1744 = vmul.f32 %v1741, %v1743
    %v1745 = vadd.f32 %v1741, %v1744
    %vm1746 = vweird.f32 %v1716
    %vm1747 = vweird.f32 %v1741
    %vm1748 = vmor %vm1746, %vm1747
    %v1749 = vsel %vm1748, %v1741, %v1745
    %v1750 = vand.u32 2147483647, %v1716
    %vm1751 = vcmp.eq.f32.partialorder %v1750, 8.507059e+37
    %v1752 = vand.u32 %v1716, 2147483648
    %v1753 = vor.u32 1.1754944e-38, %v1752
    %v1754 = vsel %vm1751, %v1753, %v1749
    %v1755 = vmul.f32 %v1740, %v1754
    %v1756 = vsub.f32 %v1718, %v1755
    %1757 = vst [vmem:[%s2] sm:$0xff] 0.0
    %vm1758 = vcmask 64512
    %1759 = vst.msk [vmem:[%s2] sm:$0xff] %vm1758, %v1388
    %v1760 = vcvt.s32.f32 %v1387
    %1762 = vrot.lane.b32.xlu0 %v1760, 8
    %v1763 = vpop.permute.xlu0 %1762
    %vm1765 = vcmask 130112
    %1766 = vst.msk [vmem:[%s2] sm:$0xff] %vm1765, %v1763
    %vm1767 = vcmask 138368
    %1768 = vst.msk [vmem:[%s2] sm:$0xff] %vm1767, %v1392
    %vm1769 = vcmask 146568
    %1770 = vst.msk [vmem:[%s2] sm:$0xff] %vm1769, %v1389
    %v1771 = vcvt.s32.f32 %v1736
    %vm1772 = vcmask 154768
    %1773 = vst.msk [vmem:[%s2] sm:$0xff] %vm1772, %v1771
    %vm1774 = vcmask 162968
    %1775 = vst.msk [vmem:[%s2] sm:$0xff] %vm1774, %v1756
    %1777 = vrot.lane.b32.xlu0 %v1719, 32
    %v1778 = vpop.permute.xlu0 %1777
    %vm1780 = vcmask 392448
    %1781 = vst.msk [vmem:[%s2] sm:$0xff] %vm1780, %v1778
    %1783 = vrot.lane.b32.xlu0 %v1706, 48
    %v1784 = vpop.permute.xlu0 %1783
    %vm1786 = vcmask 523648
    %1787 = vst.msk [vmem:[%s2] sm:$0xff] %vm1786, %v1784
    // Predicated region
    $region18: #{speaker_listener_forward.1} parent=1 // pred_check
      _
    $region19: #{speaker_listener_forward.1} parent=1 // pred_check_branch
      %1789 = sbr.rel (0) target = $region21
    $region20: #{speaker_listener_forward.1} parent=1 // pred_region
      _
    $region21: #{speaker_listener_forward.1} parent=1 // pred_fallthru
      _
    // Predicated region
    $region22: #{speaker_listener_forward.1} parent=1 // pred_check
      _
    $region23: #{speaker_listener_forward.1} parent=1 // pred_check_branch
      %1791 = sbr.rel (0) target = $region25
    $region24: #{speaker_listener_forward.1} parent=1 // pred_region
      _
    $region25: #{speaker_listener_forward.1} parent=1 // pred_fallthru
      _
    %1792 = vsyncpa [#allocation3], 1
    %1793 = vsyncpa [#allocation5], 1

</llo_original>
